<compile_context>
chip_gen: v7x
topology: tpu7x:2x2x1
jax: 0.10.0
libtpu: 0.0.40
codegen_flags: <defaults>
</compile_context>

<pallas_src>
import functools

import jax
import jax.numpy as jnp
import numpy as np
from jax.experimental import pallas as pl
from jax.experimental.pallas import tpu as pltpu

_SQRT_HALF = 0.7071067811865476
_EPS = 1e-5        # torch GroupNorm default eps
_CH_PAD = 16       # channel padding granularity = bf16 sublane tile (keeps all
                   # in-kernel sublane concatenates tile-aligned)


def _round_up(n, m):
    return (n + m - 1) // m * m


def _erf(x):
    # Abramowitz & Stegun 7.1.26 polynomial, |abs err| <= 1.5e-7 (f32-accurate).
    a1, a2, a3, a4, a5 = (0.254829592, -0.284496736, 1.421413741,
                          -1.453152027, 1.061405429)
    p = 0.3275911
    ax = jnp.abs(x)
    t = 1.0 / (1.0 + p * ax)
    poly = ((((a5 * t + a4) * t + a3) * t + a2) * t + a1) * t
    y = 1.0 - poly * jnp.exp(-ax * ax)
    return jnp.where(x >= 0, y, -y)


def _gelu(x):
    # Exact (erf-based) GELU, matching torch.nn.GELU() default.
    # TODO(synk): switch to the tanh approximation (~half the VALU ops) if exact
    # torch parity is not required.
    return 0.5 * x * (1.0 + _erf(x * _SQRT_HALF))


def _groupnorm1_seg(h, gamma, beta, n_true, bt, HW):
    # GroupNorm(num_groups=1) with per-sample statistics over HW-lane segments:
    # one sublane partial reduction + one small lane reduction per sample; the
    # affine is applied as gamma*(h - mean)*inv + beta.  Padded channel rows are
    # exactly zero and only the divisor uses the true element count n_true.
    col1 = jnp.sum(h, axis=0, keepdims=True)          # (1, bt*HW)
    col2 = jnp.sum(h * h, axis=0, keepdims=True)      # (1, bt*HW)
    inv_n = 1.0 / n_true
    inv_l, mu_inv_l = [], []
    for b in range(bt):
        seg = slice(b * HW, (b + 1) * HW)
        s1 = jnp.sum(col1[:, seg])
        s2 = jnp.sum(col2[:, seg])
        mean = s1 * inv_n
        var = s2 * inv_n - mean * mean
        inv = jax.lax.rsqrt(var + _EPS)               # EUP rsqrt
        inv_l.append(jnp.broadcast_to(inv, (1, HW)))
        mu_inv_l.append(jnp.broadcast_to(mean * inv, (1, HW)))
    inv_l = inv_l[0] if bt == 1 else jnp.concatenate(inv_l, axis=1)
    mu_inv_l = mu_inv_l[0] if bt == 1 else jnp.concatenate(mu_inv_l, axis=1)
    return (h * inv_l - mu_inv_l) * gamma + beta


def _im2col_bf16(a, tap_masks, W, btN):
    # a: (C_p, bt*HW) f32 -> (9*C_p, bt*HW) bf16 im2col matrix, tap-major rows.
    # Halo via XLU lane rotations; every wrapped / cross-sample lane coincides
    # with a masked out-of-image position, so folding bt samples along lanes is
    # exact.  Each piece is cast to bf16 before the concat so the 9x slab is
    # built directly in bf16 (halves the largest in-kernel temporary).
    pieces = []
    for kh in range(3):
        for kw in range(3):
            dh, dw = kh - 1, kw - 1
            if dh == 0 and dw == 0:
                pieces.append(a.astype(jnp.bfloat16))
            else:
                shift = (-(dh * W + dw)) % btN           # static, non-negative
                pieces.append((pltpu.roll(a, shift, axis=1)
                               * tap_masks[kh * 3 + kw]).astype(jnp.bfloat16))
    return jnp.concatenate(pieces, axis=0)


def convblock_kernel(x_ref, masks_ref, w1_ref, g1_ref, b1_ref,
                     w2_ref, g2_ref, b2_ref, out_ref, *, W, c_mid, residual):
    bt, _, HW = x_ref.shape
    btN = bt * HW
    c_out = out_ref.shape[1]

    masks = masks_ref[...]                               # (16, bt*HW) f32
    tap_masks = [masks[t:t + 1, :] for t in range(9)]    # hoisted, reused twice
    w1, w2 = w1_ref[...], w2_ref[...]                    # bf16 weight matrices
    g1, b1 = g1_ref[...], b1_ref[...]
    g2, b2 = g2_ref[...], b2_ref[...]

    # Fold the batch block along the lane axis: (C_in_p, bt*HW), lane-dense.
    if bt == 1:
        x = x_ref[0]
    else:
        x = jnp.concatenate([x_ref[b] for b in range(bt)], axis=1)

    # ---- Conv2d 3x3 (pad=1, no bias): one im2col matmul over bt*HW lanes ----
    col1 = _im2col_bf16(x, tap_masks, W, btN)            # (9*C_in_p, bt*HW) bf16
    h = jnp.dot(w1, col1, preferred_element_type=jnp.float32)

    # ---- GroupNorm(1) per sample + GELU ----
    h = _gelu(_groupnorm1_seg(h, g1, b1, c_mid * HW, bt, HW))

    # ---- second Conv2d 3x3 ----
    col2 = _im2col_bf16(h, tap_masks, W, btN)
    h2 = jnp.dot(w2, col2, preferred_element_type=jnp.float32)

    # ---- GroupNorm(1) ----
    h2 = _groupnorm1_seg(h2, g2, b2, c_out * HW, bt, HW)

    if residual:
        h2 = _gelu(x + h2)

    # Store only the true output channels; HW is lane-dense (multiple of 128).
    for b in range(bt):
        out_ref[b] = h2[:c_out, b * HW:(b + 1) * HW]


def _tap_masks(H, W, bt):
    # (16, bt*H*W) f32 {0,1}: rows 0..8 = validity of the shifted position for
    # each 3x3 tap, tiled bt times along lanes; rows 9..15 are zero padding so
    # the whole table is a single aligned 2-D tile.
    ph, pw = np.meshgrid(np.arange(H), np.arange(W), indexing="ij")
    m = np.zeros((16, H * W), np.float32)
    for kh in range(3):
        for kw in range(3):
            dh, dw = kh - 1, kw - 1
            valid = ((ph + dh >= 0) & (ph + dh < H) &
                     (pw + dw >= 0) & (pw + dw < W))
            m[kh * 3 + kw] = valid.reshape(-1).astype(np.float32)
    return jnp.asarray(np.tile(m, (1, bt)))


def _vmem_capacity_bytes():
    try:
        cap = getattr(pltpu.get_tpu_info(), "vmem_capacity_bytes", None)
        if cap:
            return int(cap)
    except Exception:
        pass
    return 64 * 1024 * 1024    # conservative fallback (v7x per-TensorCore VMEM)


def _vmem_plan(B, C_in_p, C_mid_p, C_out, C_out_p, HW):
    """Pick the batch block and scoped-VMEM limit from real per-step accounting."""
    cap = _vmem_capacity_bytes()
    budget = int(cap * 0.6)    # headroom for compiler scratch / spills / sems
    # grid-invariant operands (assume double-buffered to stay conservative)
    fixed = 2 * (2 * (C_mid_p * 9 * C_in_p + C_out_p * 9 * C_mid_p)   # bf16 weights
                 + 4 * (C_mid_p + C_out_p) * 4)                       # affine
    per_sample = (
        2 * C_in_p * HW * 4        # double-buffered input block
        + 2 * C_out * HW * 4       # double-buffered output block
        + 2 * 16 * HW * 4          # tap-mask table (tiled with bt)
        + C_in_p * HW * 4          # folded x
        + 9 * C_in_p * HW * 2      # col1 (bf16 im2col slab)
        + C_mid_p * HW * 4         # h
        + 9 * C_mid_p * HW * 2     # col2 (bf16 im2col slab)
        + C_out_p * HW * 4         # h2
        + 2 * C_mid_p * HW * 4     # GroupNorm / GELU elementwise temporaries
    )
    bt = 1
    # keep >= 2 grid steps (megacore) and a bounded unrolled segment count
    for d in range(1, min(16, max(1, B // 2)) + 1):
        if B % d == 0 and fixed + d * per_sample <= budget:
            bt = d
    # TODO(synk): if fixed + per_sample > budget (huge C*H*W on v7x), H-row tile.
    vmem_limit = max(32 << 20, min(cap * 3 // 4, 100 << 20))
    return bt, vmem_limit


def conv_block(x, params, *, residual=False, batch_block=None,
               single_buffer_consts=True):
    """Pallas TPU ConvBlock forward.  x: (B, C_in, H, W) float32."""
    w1, g1, b1, w2, g2, b2 = params
    B, C_in, H, W = x.shape
    C_mid, C_out = w1.shape[0], w2.shape[0]
    HW = H * W
    if residual:
        assert C_in == C_out, "residual ConvBlock requires in_channels == out_channels"

    # Channel counts padded to 16 (bf16 sublane tile): padded weight rows/cols
    # and affine params are zero, so padded channels stay exactly 0 throughout.
    C_in_p, C_mid_p, C_out_p = (_round_up(c, _CH_PAD) for c in (C_in, C_mid, C_out))

    # Lane-dense (C, HW) activations; the reshape is a bitcast.  The channel pad
    # is a no-op (no extra HBM pass) whenever C_in is already a multiple of 16.
    x_flat = x.astype(jnp.float32).reshape(B, C_in, HW)
    if C_in_p != C_in:
        x_flat = jnp.pad(x_flat, ((0, 0), (0, C_in_p - C_in), (0, 0)))

    def flat_w(w, co, cop, ci, cip):
        # (co, ci, 3, 3) -> (cop, 9*cip), column order (kh, kw, ci), matching the
        # tap-major im2col rows; bf16 for the MXU.
        wf = jnp.zeros((cop, 3, 3, cip), jnp.float32)
        wf = wf.at[:co, :, :, :ci].set(jnp.transpose(w.astype(jnp.float32), (0, 2, 3, 1)))
        return wf.reshape(cop, 9 * cip).astype(jnp.bfloat16)

    def pad_affine(v, c, cp):
        return jnp.zeros((cp, 1), jnp.float32).at[:c, 0].set(v.astype(jnp.float32))

    w1_flat = flat_w(w1, C_mid, C_mid_p, C_in, C_in_p)
    w2_flat = flat_w(w2, C_out, C_out_p, C_mid, C_mid_p)
    g1c, b1c = pad_affine(g1, C_mid, C_mid_p), pad_affine(b1, C_mid, C_mid_p)
    g2c, b2c = pad_affine(g2, C_out, C_out_p), pad_affine(b2, C_out, C_out_p)

    auto_bt, vmem_limit = _vmem_plan(B, C_in_p, C_mid_p, C_out, C_out_p, HW)
    bt = batch_block if batch_block is not None else auto_bt
    assert B % bt == 0
    grid = (B // bt,)

    masks = _tap_masks(H, W, bt)                      # (16, bt*HW)
    kernel = functools.partial(convblock_kernel, W=W, c_mid=C_mid,
                               residual=residual)

    def build(single_buffer):
        def rep(shape):
            n = len(shape)
            idx = lambda i, _n=n: (0,) * _n
            if single_buffer:
                # grid-invariant operand: DMA'd once; don't reserve 2x VMEM.
                return pl.BlockSpec(shape, idx, pipeline_mode=pl.Buffered(1))
            return pl.BlockSpec(shape, idx)

        return pl.pallas_call(
            kernel,
            out_shape=jax.ShapeDtypeStruct((B, C_out, HW), jnp.float32),
            grid=grid,
            in_specs=[
                pl.BlockSpec((bt, C_in_p, HW), lambda i: (i, 0, 0)),
                rep((16, bt * HW)),
                rep((C_mid_p, 9 * C_in_p)),
                rep((C_mid_p, 1)),
                rep((C_mid_p, 1)),
                rep((C_out_p, 9 * C_mid_p)),
                rep((C_out_p, 1)),
                rep((C_out_p, 1)),
            ],
            out_specs=pl.BlockSpec((bt, C_out, HW), lambda i: (i, 0, 0)),
            compiler_params=pltpu.CompilerParams(
                dimension_semantics=("parallel",),
                vmem_limit_bytes=vmem_limit,
            ),
        )

    args = (x_flat, masks, w1_flat, g1c, b1c, w2_flat, g2c, b2c)
    if single_buffer_consts:
        try:
            out_flat = build(True)(*args)
        except Exception:
            out_flat = build(False)(*args)   # installed JAX rejects Buffered(1)
    else:
        out_flat = build(False)(*args)

    # (B, C_out, HW) -> (B, C_out, H, W): bitcast, no slice, no extra HBM pass.
    return out_flat.reshape(B, C_out, H, W)


# ---------------- pure-JAX references (for correctness checks) ----------------
def conv_block_ref(x, params, *, residual=False, conv_dtype=jnp.float32):
    w1, g1, b1, w2, g2, b2 = params

    def conv(h, w):
        return jax.lax.conv_general_dilated(
            h.astype(conv_dtype), w.astype(conv_dtype),
            window_strides=(1, 1), padding=((1, 1), (1, 1)),
            dimension_numbers=("NCHW", "OIHW", "NCHW"),
            preferred_element_type=jnp.float32)

    def gn(h, g, b):
        mean = jnp.mean(h, axis=(1, 2, 3), keepdims=True)
        var = jnp.mean((h - mean) ** 2, axis=(1, 2, 3), keepdims=True)
        hn = (h - mean) / jnp.sqrt(var + _EPS)
        return hn * g.reshape(1, -1, 1, 1) + b.reshape(1, -1, 1, 1)

    h = jax.nn.gelu(gn(conv(x, w1), g1, b1), approximate=False)
    h = gn(conv(h, w2), g2, b2)
    if residual:
        h = jax.nn.gelu(x + h, approximate=False)
    return h


def init_params(key, c_in, c_mid, c_out):
    k1, k2, k3, k4, k5, k6 = jax.random.split(key, 6)
    w1 = 0.2 * jax.random.normal(k1, (c_mid, c_in, 3, 3), jnp.float32)
    g1 = 1.0 + 0.1 * jax.random.normal(k2, (c_mid,), jnp.float32)
    b1 = 0.1 * jax.random.normal(k3, (c_mid,), jnp.float32)
    w2 = 0.2 * jax.random.normal(k4, (c_out, c_mid, 3, 3), jnp.float32)
    g2 = 1.0 + 0.1 * jax.random.normal(k5, (c_out,), jnp.float32)
    b2 = 0.1 * jax.random.normal(k6, (c_out,), jnp.float32)
    return (w1, g1, b1, w2, g2, b2)


if __name__ == "__main__":
    key = jax.random.PRNGKey(0)
    kx, kp1, kp2 = jax.random.split(key, 3)

    B, C_in, H, W = 2, 4, 16, 16
    x = jax.random.normal(kx, (B, C_in, H, W), jnp.float32)

    # ConvBlock(4, 8)  (mid_channels defaults to out_channels), no residual.
    p1 = init_params(kp1, C_in, 8, 8)
    r1_bf16 = conv_block_ref(x, p1, residual=False, conv_dtype=jnp.bfloat16)
    r1_f32 = conv_block_ref(x, p1, residual=False)
    for bb in (None, 2):    # default (1 sample/step) and the batch-folded path
        y1 = jax.block_until_ready(conv_block(x, p1, residual=False, batch_block=bb))
        # Tight check vs a reference using the same bf16-operand / f32-acc convs.
        np.testing.assert_allclose(np.asarray(y1), np.asarray(r1_bf16),
                                   rtol=5e-3, atol=5e-3)
        # Loose sanity check vs the exact f32 (torch-equivalent) reference.
        np.testing.assert_allclose(np.asarray(y1), np.asarray(r1_f32),
                                   rtol=5e-2, atol=5e-2)

    # ConvBlock(4, 4, mid_channels=8, residual=True)
    p2 = init_params(kp2, C_in, 8, C_in)
    r2_bf16 = conv_block_ref(x, p2, residual=True, conv_dtype=jnp.bfloat16)
    r2_f32 = conv_block_ref(x, p2, residual=True)
    for bb in (None, 2):
        y2 = jax.block_until_ready(conv_block(x, p2, residual=True, batch_block=bb))
        np.testing.assert_allclose(np.asarray(y2), np.asarray(r2_bf16),
                                   rtol=5e-3, atol=5e-3)
        np.testing.assert_allclose(np.asarray(y2), np.asarray(r2_f32),
                                   rtol=5e-2, atol=5e-2)

    print("KERNEL_OK")
</pallas_src>

<mosaic_0001>
module attributes {stable_mosaic.version = 11 : i64} {
  func.func @convblock_kernel(%arg0: i32, %arg1: memref<1x16x256xf32, #tpu.memory_space<vmem>>, %arg2: memref<16x256xf32, #tpu.memory_space<vmem>>, %arg3: memref<16x144xbf16, #tpu.memory_space<vmem>>, %arg4: memref<16x1xf32, #tpu.memory_space<vmem>>, %arg5: memref<16x1xf32, #tpu.memory_space<vmem>>, %arg6: memref<16x144xbf16, #tpu.memory_space<vmem>>, %arg7: memref<16x1xf32, #tpu.memory_space<vmem>>, %arg8: memref<16x1xf32, #tpu.memory_space<vmem>>, %arg9: memref<1x8x256xf32, #tpu.memory_space<vmem>>) attributes {dimension_semantics = [#tpu.dimension_semantics<parallel>], iteration_bounds = array<i64: 2>, scalar_prefetch = 0 : i64, scratch_operands = 0 : i64, tpu.core_type = #tpu.core_type<tc>, window_params = [{transform_indices = @transform_0, window_bounds = array<i64: 1, 16, 256>}, {pipeline_mode = #tpu.pipeline_mode<synchronous>, transform_indices = @transform_1, window_bounds = array<i64: 16, 256>}, {pipeline_mode = #tpu.pipeline_mode<synchronous>, transform_indices = @transform_2, window_bounds = array<i64: 16, 144>}, {pipeline_mode = #tpu.pipeline_mode<synchronous>, transform_indices = @transform_3, window_bounds = array<i64: 16, 1>}, {pipeline_mode = #tpu.pipeline_mode<synchronous>, transform_indices = @transform_4, window_bounds = array<i64: 16, 1>}, {pipeline_mode = #tpu.pipeline_mode<synchronous>, transform_indices = @transform_5, window_bounds = array<i64: 16, 144>}, {pipeline_mode = #tpu.pipeline_mode<synchronous>, transform_indices = @transform_6, window_bounds = array<i64: 16, 1>}, {pipeline_mode = #tpu.pipeline_mode<synchronous>, transform_indices = @transform_7, window_bounds = array<i64: 16, 1>}, {transform_indices = @transform_8, window_bounds = array<i64: 1, 8, 256>}]} {
    %c0 = arith.constant 0 : index
    %c0_0 = arith.constant 0 : index
    %0 = vector.load %arg2[%c0, %c0_0] : memref<16x256xf32, #tpu.memory_space<vmem>>, vector<16x256xf32>
    %1 = vector.extract_strided_slice %0 {offsets = [0, 0], sizes = [1, 256], strides = [1, 1]} : vector<16x256xf32> to vector<1x256xf32>
    %2 = vector.extract_strided_slice %0 {offsets = [1, 0], sizes = [1, 256], strides = [1, 1]} : vector<16x256xf32> to vector<1x256xf32>
    %3 = vector.extract_strided_slice %0 {offsets = [2, 0], sizes = [1, 256], strides = [1, 1]} : vector<16x256xf32> to vector<1x256xf32>
    %4 = vector.extract_strided_slice %0 {offsets = [3, 0], sizes = [1, 256], strides = [1, 1]} : vector<16x256xf32> to vector<1x256xf32>
    %5 = vector.extract_strided_slice %0 {offsets = [5, 0], sizes = [1, 256], strides = [1, 1]} : vector<16x256xf32> to vector<1x256xf32>
    %6 = vector.extract_strided_slice %0 {offsets = [6, 0], sizes = [1, 256], strides = [1, 1]} : vector<16x256xf32> to vector<1x256xf32>
    %7 = vector.extract_strided_slice %0 {offsets = [7, 0], sizes = [1, 256], strides = [1, 1]} : vector<16x256xf32> to vector<1x256xf32>
    %8 = vector.extract_strided_slice %0 {offsets = [8, 0], sizes = [1, 256], strides = [1, 1]} : vector<16x256xf32> to vector<1x256xf32>
    %c0_1 = arith.constant 0 : index
    %c0_2 = arith.constant 0 : index
    %9 = vector.load %arg3[%c0_1, %c0_2] : memref<16x144xbf16, #tpu.memory_space<vmem>>, vector<16x144xbf16>
    %c0_3 = arith.constant 0 : index
    %c0_4 = arith.constant 0 : index
    %10 = vector.load %arg6[%c0_3, %c0_4] : memref<16x144xbf16, #tpu.memory_space<vmem>>, vector<16x144xbf16>
    %c0_5 = arith.constant 0 : index
    %c0_6 = arith.constant 0 : index
    %11 = vector.load %arg4[%c0_5, %c0_6] : memref<16x1xf32, #tpu.memory_space<vmem>>, vector<16x1xf32>
    %c0_7 = arith.constant 0 : index
    %c0_8 = arith.constant 0 : index
    %12 = vector.load %arg5[%c0_7, %c0_8] : memref<16x1xf32, #tpu.memory_space<vmem>>, vector<16x1xf32>
    %c0_9 = arith.constant 0 : index
    %c0_10 = arith.constant 0 : index
    %13 = vector.load %arg7[%c0_9, %c0_10] : memref<16x1xf32, #tpu.memory_space<vmem>>, vector<16x1xf32>
    %c0_11 = arith.constant 0 : index
    %c0_12 = arith.constant 0 : index
    %14 = vector.load %arg8[%c0_11, %c0_12] : memref<16x1xf32, #tpu.memory_space<vmem>>, vector<16x1xf32>
    %c0_13 = arith.constant 0 : index
    %c0_14 = arith.constant 0 : index
    %c0_15 = arith.constant 0 : index
    %15 = vector.load %arg1[%c0_13, %c0_14, %c0_15] : memref<1x16x256xf32, #tpu.memory_space<vmem>>, vector<1x16x256xf32>
    %16 = vector.shape_cast %15 : vector<1x16x256xf32> to vector<16x256xf32>
    %c17_i32 = arith.constant 17 : i32
    %17 = tpu.dynamic_rotate %16 by %c17_i32 dim 1 : vector<16x256xf32>, i32 -> vector<16x256xf32>
    %18 = vector.broadcast %1 : vector<1x256xf32> to vector<16x256xf32>
    %19 = arith.mulf %17, %18 : vector<16x256xf32>
    %20 = arith.truncf %19 : vector<16x256xf32> to vector<16x256xbf16>
    %c16_i32 = arith.constant 16 : i32
    %21 = tpu.dynamic_rotate %16 by %c16_i32 dim 1 : vector<16x256xf32>, i32 -> vector<16x256xf32>
    %22 = vector.broadcast %2 : vector<1x256xf32> to vector<16x256xf32>
    %23 = arith.mulf %21, %22 : vector<16x256xf32>
    %24 = arith.truncf %23 : vector<16x256xf32> to vector<16x256xbf16>
    %c15_i32 = arith.constant 15 : i32
    %25 = tpu.dynamic_rotate %16 by %c15_i32 dim 1 : vector<16x256xf32>, i32 -> vector<16x256xf32>
    %26 = vector.broadcast %3 : vector<1x256xf32> to vector<16x256xf32>
    %27 = arith.mulf %25, %26 : vector<16x256xf32>
    %28 = arith.truncf %27 : vector<16x256xf32> to vector<16x256xbf16>
    %c1_i32 = arith.constant 1 : i32
    %29 = tpu.dynamic_rotate %16 by %c1_i32 dim 1 : vector<16x256xf32>, i32 -> vector<16x256xf32>
    %30 = vector.broadcast %4 : vector<1x256xf32> to vector<16x256xf32>
    %31 = arith.mulf %29, %30 : vector<16x256xf32>
    %32 = arith.truncf %31 : vector<16x256xf32> to vector<16x256xbf16>
    %33 = arith.truncf %16 : vector<16x256xf32> to vector<16x256xbf16>
    %c255_i32 = arith.constant 255 : i32
    %34 = tpu.dynamic_rotate %16 by %c255_i32 dim 1 : vector<16x256xf32>, i32 -> vector<16x256xf32>
    %35 = vector.broadcast %5 : vector<1x256xf32> to vector<16x256xf32>
    %36 = arith.mulf %34, %35 : vector<16x256xf32>
    %37 = arith.truncf %36 : vector<16x256xf32> to vector<16x256xbf16>
    %c241_i32 = arith.constant 241 : i32
    %38 = tpu.dynamic_rotate %16 by %c241_i32 dim 1 : vector<16x256xf32>, i32 -> vector<16x256xf32>
    %39 = vector.broadcast %6 : vector<1x256xf32> to vector<16x256xf32>
    %40 = arith.mulf %38, %39 : vector<16x256xf32>
    %41 = arith.truncf %40 : vector<16x256xf32> to vector<16x256xbf16>
    %c240_i32 = arith.constant 240 : i32
    %42 = tpu.dynamic_rotate %16 by %c240_i32 dim 1 : vector<16x256xf32>, i32 -> vector<16x256xf32>
    %43 = vector.broadcast %7 : vector<1x256xf32> to vector<16x256xf32>
    %44 = arith.mulf %42, %43 : vector<16x256xf32>
    %45 = arith.truncf %44 : vector<16x256xf32> to vector<16x256xbf16>
    %c239_i32 = arith.constant 239 : i32
    %46 = tpu.dynamic_rotate %16 by %c239_i32 dim 1 : vector<16x256xf32>, i32 -> vector<16x256xf32>
    %47 = vector.broadcast %8 : vector<1x256xf32> to vector<16x256xf32>
    %48 = arith.mulf %46, %47 : vector<16x256xf32>
    %49 = arith.truncf %48 : vector<16x256xf32> to vector<16x256xbf16>
    %50 = tpu.concatenate %20, %24, %28, %32, %33, %37, %41, %45, %49 in 0 : vector<16x256xbf16>, vector<16x256xbf16>, vector<16x256xbf16>, vector<16x256xbf16>, vector<16x256xbf16>, vector<16x256xbf16>, vector<16x256xbf16>, vector<16x256xbf16>, vector<16x256xbf16> -> vector<144x256xbf16>
    %cst = arith.constant dense<0.000000e+00> : vector<16x256xf32>
    %51 = tpu.matmul %9, %50, %cst {dimension_numbers = #tpu.dot_dimension_numbers<[1], [0], [0], [1], [0, 0, 1, 1], [], []>} : vector<16x144xbf16>, vector<144x256xbf16>, vector<16x256xf32> -> vector<16x256xf32>
    %cst_16 = arith.constant dense<0.000000e+00> : vector<256xf32>
    %52 = vector.multi_reduction <add>, %51, %cst_16 [0] : vector<16x256xf32> to vector<256xf32>
    %53 = vector.shape_cast %52 : vector<256xf32> to vector<1x256xf32>
    %54 = arith.mulf %51, %51 : vector<16x256xf32>
    %cst_17 = arith.constant dense<0.000000e+00> : vector<256xf32>
    %55 = vector.multi_reduction <add>, %54, %cst_17 [0] : vector<16x256xf32> to vector<256xf32>
    %56 = vector.shape_cast %55 : vector<256xf32> to vector<1x256xf32>
    %57 = vector.shape_cast %53 : vector<1x256xf32> to vector<1x1x256xf32>
    %cst_18 = arith.constant dense<0.000000e+00> : vector<1xf32>
    %58 = vector.multi_reduction <add>, %57, %cst_18 [1, 2] : vector<1x1x256xf32> to vector<1xf32>
    %59 = vector.shape_cast %58 : vector<1xf32> to vector<1x1x1xf32>
    %60 = vector.extract %59[0, 0, 0] : f32 from vector<1x1x1xf32>
    %61 = vector.shape_cast %56 : vector<1x256xf32> to vector<1x1x256xf32>
    %cst_19 = arith.constant dense<0.000000e+00> : vector<1xf32>
    %62 = vector.multi_reduction <add>, %61, %cst_19 [1, 2] : vector<1x1x256xf32> to vector<1xf32>
    %63 = vector.shape_cast %62 : vector<1xf32> to vector<1x1x1xf32>
    %64 = vector.extract %63[0, 0, 0] : f32 from vector<1x1x1xf32>
    %cst_20 = arith.constant 4.8828125E-4 : f32
    %65 = arith.mulf %60, %cst_20 : f32
    %cst_21 = arith.constant 4.8828125E-4 : f32
    %66 = arith.mulf %64, %cst_21 : f32
    %67 = arith.mulf %65, %65 : f32
    %68 = arith.subf %66, %67 : f32
    %cst_22 = arith.constant 9.99999974E-6 : f32
    %69 = arith.addf %68, %cst_22 : f32
    %70 = math.rsqrt %69 : f32
    %71 = vector.broadcast %70 : f32 to vector<1x256xf32>
    %72 = arith.mulf %65, %70 : f32
    %73 = vector.broadcast %72 : f32 to vector<1x256xf32>
    %74 = vector.broadcast %71 : vector<1x256xf32> to vector<16x256xf32>
    %75 = arith.mulf %51, %74 : vector<16x256xf32>
    %76 = vector.broadcast %73 : vector<1x256xf32> to vector<16x256xf32>
    %77 = arith.subf %75, %76 : vector<16x256xf32>
    %78 = vector.broadcast %11 : vector<16x1xf32> to vector<16x256xf32>
    %79 = arith.mulf %77, %78 : vector<16x256xf32>
    %80 = vector.broadcast %12 : vector<16x1xf32> to vector<16x256xf32>
    %81 = arith.addf %79, %80 : vector<16x256xf32>
    %cst_23 = arith.constant 5.000000e-01 : f32
    %82 = vector.broadcast %cst_23 : f32 to vector<16x256xf32>
    %83 = arith.mulf %82, %81 : vector<16x256xf32>
    %cst_24 = arith.constant 0.707106769 : f32
    %84 = vector.broadcast %cst_24 : f32 to vector<16x256xf32>
    %85 = arith.mulf %81, %84 : vector<16x256xf32>
    %86 = math.absf %85 : vector<16x256xf32>
    %cst_25 = arith.constant 0.327591091 : f32
    %87 = vector.broadcast %cst_25 : f32 to vector<16x256xf32>
    %88 = arith.mulf %87, %86 : vector<16x256xf32>
    %cst_26 = arith.constant 1.000000e+00 : f32
    %89 = vector.broadcast %cst_26 : f32 to vector<16x256xf32>
    %90 = arith.addf %89, %88 : vector<16x256xf32>
    %cst_27 = arith.constant 1.000000e+00 : f32
    %91 = vector.broadcast %cst_27 : f32 to vector<16x256xf32>
    %92 = arith.divf %91, %90 : vector<16x256xf32>
    %cst_28 = arith.constant 1.06140542 : f32
    %93 = vector.broadcast %cst_28 : f32 to vector<16x256xf32>
    %94 = arith.mulf %93, %92 : vector<16x256xf32>
    %cst_29 = arith.constant -1.45315206 : f32
    %95 = vector.broadcast %cst_29 : f32 to vector<16x256xf32>
    %96 = arith.addf %94, %95 : vector<16x256xf32>
    %97 = arith.mulf %96, %92 : vector<16x256xf32>
    %cst_30 = arith.constant 1.42141378 : f32
    %98 = vector.broadcast %cst_30 : f32 to vector<16x256xf32>
    %99 = arith.addf %97, %98 : vector<16x256xf32>
    %100 = arith.mulf %99, %92 : vector<16x256xf32>
    %cst_31 = arith.constant -0.284496725 : f32
    %101 = vector.broadcast %cst_31 : f32 to vector<16x256xf32>
    %102 = arith.addf %100, %101 : vector<16x256xf32>
    %103 = arith.mulf %102, %92 : vector<16x256xf32>
    %cst_32 = arith.constant 0.254829586 : f32
    %104 = vector.broadcast %cst_32 : f32 to vector<16x256xf32>
    %105 = arith.addf %103, %104 : vector<16x256xf32>
    %106 = arith.mulf %105, %92 : vector<16x256xf32>
    %cst_33 = arith.constant 0.000000e+00 : f32
    %107 = vector.broadcast %cst_33 : f32 to vector<16x256xf32>
    %108 = arith.subf %107, %86 : vector<16x256xf32>
    %109 = arith.mulf %108, %86 : vector<16x256xf32>
    %110 = math.exp %109 : vector<16x256xf32>
    %111 = arith.mulf %106, %110 : vector<16x256xf32>
    %cst_34 = arith.constant 1.000000e+00 : f32
    %112 = vector.broadcast %cst_34 : f32 to vector<16x256xf32>
    %113 = arith.subf %112, %111 : vector<16x256xf32>
    %cst_35 = arith.constant 0.000000e+00 : f32
    %114 = vector.broadcast %cst_35 : f32 to vector<16x256xf32>
    %115 = arith.cmpf oge, %85, %114 : vector<16x256xf32>
    %cst_36 = arith.constant 0.000000e+00 : f32
    %116 = vector.broadcast %cst_36 : f32 to vector<16x256xf32>
    %117 = arith.subf %116, %113 : vector<16x256xf32>
    %118 = arith.select %115, %113, %117 : vector<16x256xi1>, vector<16x256xf32>
    %cst_37 = arith.constant 1.000000e+00 : f32
    %119 = vector.broadcast %cst_37 : f32 to vector<16x256xf32>
    %120 = arith.addf %119, %118 : vector<16x256xf32>
    %121 = arith.mulf %83, %120 : vector<16x256xf32>
    %c17_i32_38 = arith.constant 17 : i32
    %122 = tpu.dynamic_rotate %121 by %c17_i32_38 dim 1 : vector<16x256xf32>, i32 -> vector<16x256xf32>
    %123 = vector.broadcast %1 : vector<1x256xf32> to vector<16x256xf32>
    %124 = arith.mulf %122, %123 : vector<16x256xf32>
    %125 = arith.truncf %124 : vector<16x256xf32> to vector<16x256xbf16>
    %c16_i32_39 = arith.constant 16 : i32
    %126 = tpu.dynamic_rotate %121 by %c16_i32_39 dim 1 : vector<16x256xf32>, i32 -> vector<16x256xf32>
    %127 = vector.broadcast %2 : vector<1x256xf32> to vector<16x256xf32>
    %128 = arith.mulf %126, %127 : vector<16x256xf32>
    %129 = arith.truncf %128 : vector<16x256xf32> to vector<16x256xbf16>
    %c15_i32_40 = arith.constant 15 : i32
    %130 = tpu.dynamic_rotate %121 by %c15_i32_40 dim 1 : vector<16x256xf32>, i32 -> vector<16x256xf32>
    %131 = vector.broadcast %3 : vector<1x256xf32> to vector<16x256xf32>
    %132 = arith.mulf %130, %131 : vector<16x256xf32>
    %133 = arith.truncf %132 : vector<16x256xf32> to vector<16x256xbf16>
    %c1_i32_41 = arith.constant 1 : i32
    %134 = tpu.dynamic_rotate %121 by %c1_i32_41 dim 1 : vector<16x256xf32>, i32 -> vector<16x256xf32>
    %135 = vector.broadcast %4 : vector<1x256xf32> to vector<16x256xf32>
    %136 = arith.mulf %134, %135 : vector<16x256xf32>
    %137 = arith.truncf %136 : vector<16x256xf32> to vector<16x256xbf16>
    %138 = arith.truncf %121 : vector<16x256xf32> to vector<16x256xbf16>
    %c255_i32_42 = arith.constant 255 : i32
    %139 = tpu.dynamic_rotate %121 by %c255_i32_42 dim 1 : vector<16x256xf32>, i32 -> vector<16x256xf32>
    %140 = vector.broadcast %5 : vector<1x256xf32> to vector<16x256xf32>
    %141 = arith.mulf %139, %140 : vector<16x256xf32>
    %142 = arith.truncf %141 : vector<16x256xf32> to vector<16x256xbf16>
    %c241_i32_43 = arith.constant 241 : i32
    %143 = tpu.dynamic_rotate %121 by %c241_i32_43 dim 1 : vector<16x256xf32>, i32 -> vector<16x256xf32>
    %144 = vector.broadcast %6 : vector<1x256xf32> to vector<16x256xf32>
    %145 = arith.mulf %143, %144 : vector<16x256xf32>
    %146 = arith.truncf %145 : vector<16x256xf32> to vector<16x256xbf16>
    %c240_i32_44 = arith.constant 240 : i32
    %147 = tpu.dynamic_rotate %121 by %c240_i32_44 dim 1 : vector<16x256xf32>, i32 -> vector<16x256xf32>
    %148 = vector.broadcast %7 : vector<1x256xf32> to vector<16x256xf32>
    %149 = arith.mulf %147, %148 : vector<16x256xf32>
    %150 = arith.truncf %149 : vector<16x256xf32> to vector<16x256xbf16>
    %c239_i32_45 = arith.constant 239 : i32
    %151 = tpu.dynamic_rotate %121 by %c239_i32_45 dim 1 : vector<16x256xf32>, i32 -> vector<16x256xf32>
    %152 = vector.broadcast %8 : vector<1x256xf32> to vector<16x256xf32>
    %153 = arith.mulf %151, %152 : vector<16x256xf32>
    %154 = arith.truncf %153 : vector<16x256xf32> to vector<16x256xbf16>
    %155 = tpu.concatenate %125, %129, %133, %137, %138, %142, %146, %150, %154 in 0 : vector<16x256xbf16>, vector<16x256xbf16>, vector<16x256xbf16>, vector<16x256xbf16>, vector<16x256xbf16>, vector<16x256xbf16>, vector<16x256xbf16>, vector<16x256xbf16>, vector<16x256xbf16> -> vector<144x256xbf16>
    %cst_46 = arith.constant dense<0.000000e+00> : vector<16x256xf32>
    %156 = tpu.matmul %10, %155, %cst_46 {dimension_numbers = #tpu.dot_dimension_numbers<[1], [0], [0], [1], [0, 0, 1, 1], [], []>} : vector<16x144xbf16>, vector<144x256xbf16>, vector<16x256xf32> -> vector<16x256xf32>
    %cst_47 = arith.constant dense<0.000000e+00> : vector<256xf32>
    %157 = vector.multi_reduction <add>, %156, %cst_47 [0] : vector<16x256xf32> to vector<256xf32>
    %158 = vector.shape_cast %157 : vector<256xf32> to vector<1x256xf32>
    %159 = arith.mulf %156, %156 : vector<16x256xf32>
    %cst_48 = arith.constant dense<0.000000e+00> : vector<256xf32>
    %160 = vector.multi_reduction <add>, %159, %cst_48 [0] : vector<16x256xf32> to vector<256xf32>
    %161 = vector.shape_cast %160 : vector<256xf32> to vector<1x256xf32>
    %162 = vector.shape_cast %158 : vector<1x256xf32> to vector<1x1x256xf32>
    %cst_49 = arith.constant dense<0.000000e+00> : vector<1xf32>
    %163 = vector.multi_reduction <add>, %162, %cst_49 [1, 2] : vector<1x1x256xf32> to vector<1xf32>
    %164 = vector.shape_cast %163 : vector<1xf32> to vector<1x1x1xf32>
    %165 = vector.extract %164[0, 0, 0] : f32 from vector<1x1x1xf32>
    %166 = vector.shape_cast %161 : vector<1x256xf32> to vector<1x1x256xf32>
    %cst_50 = arith.constant dense<0.000000e+00> : vector<1xf32>
    %167 = vector.multi_reduction <add>, %166, %cst_50 [1, 2] : vector<1x1x256xf32> to vector<1xf32>
    %168 = vector.shape_cast %167 : vector<1xf32> to vector<1x1x1xf32>
    %169 = vector.extract %168[0, 0, 0] : f32 from vector<1x1x1xf32>
    %cst_51 = arith.constant 4.8828125E-4 : f32
    %170 = arith.mulf %165, %cst_51 : f32
    %cst_52 = arith.constant 4.8828125E-4 : f32
    %171 = arith.mulf %169, %cst_52 : f32
    %172 = arith.mulf %170, %170 : f32
    %173 = arith.subf %171, %172 : f32
    %cst_53 = arith.constant 9.99999974E-6 : f32
    %174 = arith.addf %173, %cst_53 : f32
    %175 = math.rsqrt %174 : f32
    %176 = vector.broadcast %175 : f32 to vector<1x256xf32>
    %177 = arith.mulf %170, %175 : f32
    %178 = vector.broadcast %177 : f32 to vector<1x256xf32>
    %179 = vector.broadcast %176 : vector<1x256xf32> to vector<16x256xf32>
    %180 = arith.mulf %156, %179 : vector<16x256xf32>
    %181 = vector.broadcast %178 : vector<1x256xf32> to vector<16x256xf32>
    %182 = arith.subf %180, %181 : vector<16x256xf32>
    %183 = vector.broadcast %13 : vector<16x1xf32> to vector<16x256xf32>
    %184 = arith.mulf %182, %183 : vector<16x256xf32>
    %185 = vector.broadcast %14 : vector<16x1xf32> to vector<16x256xf32>
    %186 = arith.addf %184, %185 : vector<16x256xf32>
    %187 = vector.extract_strided_slice %186 {offsets = [0, 0], sizes = [8, 256], strides = [1, 1]} : vector<16x256xf32> to vector<8x256xf32>
    %c0_54 = arith.constant 0 : index
    %c0_55 = arith.constant 0 : index
    %c0_56 = arith.constant 0 : index
    %188 = vector.load %arg9[%c0_54, %c0_55, %c0_56] : memref<1x8x256xf32, #tpu.memory_space<vmem>>, vector<1x8x256xf32>
    %189 = vector.shape_cast %188 : vector<1x8x256xf32> to vector<8x256xf32>
    %190 = vector.shape_cast %187 : vector<8x256xf32> to vector<1x8x256xf32>
    tpu.vector_store %arg9[%c0_54, %c0_55, %c0_56], %190 {strides = array<i32>} : memref<1x8x256xf32, #tpu.memory_space<vmem>>, vector<1x8x256xf32>,
    return
  }
  func.func @transform_0(%arg0: i32) -> (i32, i32, i32) {
    %c0_i32 = arith.constant 0 : i32
    %c0_i32_0 = arith.constant 0 : i32
    %c0_i32_1 = arith.constant 0 : i32
    return %arg0, %c0_i32, %c0_i32_0 : i32, i32, i32
  }
  func.func @transform_1(%arg0: i32) -> (i32, i32) {
    %c0_i32 = arith.constant 0 : i32
    %c0_i32_0 = arith.constant 0 : i32
    %c0_i32_1 = arith.constant 0 : i32
    return %c0_i32, %c0_i32_0 : i32, i32
  }
  func.func @transform_2(%arg0: i32) -> (i32, i32) {
    %c0_i32 = arith.constant 0 : i32
    %c0_i32_0 = arith.constant 0 : i32
    %c0_i32_1 = arith.constant 0 : i32
    return %c0_i32, %c0_i32_0 : i32, i32
  }
  func.func @transform_3(%arg0: i32) -> (i32, i32) {
    %c0_i32 = arith.constant 0 : i32
    %c0_i32_0 = arith.constant 0 : i32
    %c0_i32_1 = arith.constant 0 : i32
    return %c0_i32, %c0_i32_0 : i32, i32
  }
  func.func @transform_4(%arg0: i32) -> (i32, i32) {
    %c0_i32 = arith.constant 0 : i32
    %c0_i32_0 = arith.constant 0 : i32
    %c0_i32_1 = arith.constant 0 : i32
    return %c0_i32, %c0_i32_0 : i32, i32
  }
  func.func @transform_5(%arg0: i32) -> (i32, i32) {
    %c0_i32 = arith.constant 0 : i32
    %c0_i32_0 = arith.constant 0 : i32
    %c0_i32_1 = arith.constant 0 : i32
    return %c0_i32, %c0_i32_0 : i32, i32
  }
  func.func @transform_6(%arg0: i32) -> (i32, i32) {
    %c0_i32 = arith.constant 0 : i32
    %c0_i32_0 = arith.constant 0 : i32
    %c0_i32_1 = arith.constant 0 : i32
    return %c0_i32, %c0_i32_0 : i32, i32
  }
  func.func @transform_7(%arg0: i32) -> (i32, i32) {
    %c0_i32 = arith.constant 0 : i32
    %c0_i32_0 = arith.constant 0 : i32
    %c0_i32_1 = arith.constant 0 : i32
    return %c0_i32, %c0_i32_0 : i32, i32
  }
  func.func @transform_8(%arg0: i32) -> (i32, i32, i32) {
    %c0_i32 = arith.constant 0 : i32
    %c0_i32_0 = arith.constant 0 : i32
    %c0_i32_1 = arith.constant 0 : i32
    return %arg0, %c0_i32, %c0_i32_0 : i32, i32, i32
  }
}

module attributes {stable_mosaic.version = 11 : i64} {
  func.func @convblock_kernel(%arg0: i32, %arg1: memref<1x16x256xf32, #tpu.memory_space<vmem>>, %arg2: memref<16x256xf32, #tpu.memory_space<vmem>>, %arg3: memref<16x144xbf16, #tpu.memory_space<vmem>>, %arg4: memref<16x1xf32, #tpu.memory_space<vmem>>, %arg5: memref<16x1xf32, #tpu.memory_space<vmem>>, %arg6: memref<16x144xbf16, #tpu.memory_space<vmem>>, %arg7: memref<16x1xf32, #tpu.memory_space<vmem>>, %arg8: memref<16x1xf32, #tpu.memory_space<vmem>>, %arg9: memref<1x8x256xf32, #tpu.memory_space<vmem>>) attributes {dimension_semantics = [#tpu.dimension_semantics<parallel>], iteration_bounds = array<i64: 2>, scalar_prefetch = 0 : i64, scratch_operands = 0 : i64, tpu.core_type = #tpu.core_type<tc>, window_params = [{transform_indices = @transform_0, window_bounds = array<i64: 1, 16, 256>}, {pipeline_mode = #tpu.pipeline_mode<synchronous>, transform_indices = @transform_1, window_bounds = array<i64: 16, 256>}, {pipeline_mode = #tpu.pipeline_mode<synchronous>, transform_indices = @transform_2, window_bounds = array<i64: 16, 144>}, {pipeline_mode = #tpu.pipeline_mode<synchronous>, transform_indices = @transform_3, window_bounds = array<i64: 16, 1>}, {pipeline_mode = #tpu.pipeline_mode<synchronous>, transform_indices = @transform_4, window_bounds = array<i64: 16, 1>}, {pipeline_mode = #tpu.pipeline_mode<synchronous>, transform_indices = @transform_5, window_bounds = array<i64: 16, 144>}, {pipeline_mode = #tpu.pipeline_mode<synchronous>, transform_indices = @transform_6, window_bounds = array<i64: 16, 1>}, {pipeline_mode = #tpu.pipeline_mode<synchronous>, transform_indices = @transform_7, window_bounds = array<i64: 16, 1>}, {transform_indices = @transform_8, window_bounds = array<i64: 1, 8, 256>}]} {
    %c0 = arith.constant 0 : index
    %c0_0 = arith.constant 0 : index
    %0 = vector.load %arg2[%c0, %c0_0] : memref<16x256xf32, #tpu.memory_space<vmem>>, vector<16x256xf32>
    %1 = vector.extract_strided_slice %0 {offsets = [0, 0], sizes = [1, 256], strides = [1, 1]} : vector<16x256xf32> to vector<1x256xf32>
    %2 = vector.extract_strided_slice %0 {offsets = [1, 0], sizes = [1, 256], strides = [1, 1]} : vector<16x256xf32> to vector<1x256xf32>
    %3 = vector.extract_strided_slice %0 {offsets = [2, 0], sizes = [1, 256], strides = [1, 1]} : vector<16x256xf32> to vector<1x256xf32>
    %4 = vector.extract_strided_slice %0 {offsets = [3, 0], sizes = [1, 256], strides = [1, 1]} : vector<16x256xf32> to vector<1x256xf32>
    %5 = vector.extract_strided_slice %0 {offsets = [5, 0], sizes = [1, 256], strides = [1, 1]} : vector<16x256xf32> to vector<1x256xf32>
    %6 = vector.extract_strided_slice %0 {offsets = [6, 0], sizes = [1, 256], strides = [1, 1]} : vector<16x256xf32> to vector<1x256xf32>
    %7 = vector.extract_strided_slice %0 {offsets = [7, 0], sizes = [1, 256], strides = [1, 1]} : vector<16x256xf32> to vector<1x256xf32>
    %8 = vector.extract_strided_slice %0 {offsets = [8, 0], sizes = [1, 256], strides = [1, 1]} : vector<16x256xf32> to vector<1x256xf32>
    %c0_1 = arith.constant 0 : index
    %c0_2 = arith.constant 0 : index
    %9 = vector.load %arg3[%c0_1, %c0_2] : memref<16x144xbf16, #tpu.memory_space<vmem>>, vector<16x144xbf16>
    %c0_3 = arith.constant 0 : index
    %c0_4 = arith.constant 0 : index
    %10 = vector.load %arg6[%c0_3, %c0_4] : memref<16x144xbf16, #tpu.memory_space<vmem>>, vector<16x144xbf16>
    %c0_5 = arith.constant 0 : index
    %c0_6 = arith.constant 0 : index
    %11 = vector.load %arg4[%c0_5, %c0_6] : memref<16x1xf32, #tpu.memory_space<vmem>>, vector<16x1xf32>
    %c0_7 = arith.constant 0 : index
    %c0_8 = arith.constant 0 : index
    %12 = vector.load %arg5[%c0_7, %c0_8] : memref<16x1xf32, #tpu.memory_space<vmem>>, vector<16x1xf32>
    %c0_9 = arith.constant 0 : index
    %c0_10 = arith.constant 0 : index
    %13 = vector.load %arg7[%c0_9, %c0_10] : memref<16x1xf32, #tpu.memory_space<vmem>>, vector<16x1xf32>
    %c0_11 = arith.constant 0 : index
    %c0_12 = arith.constant 0 : index
    %14 = vector.load %arg8[%c0_11, %c0_12] : memref<16x1xf32, #tpu.memory_space<vmem>>, vector<16x1xf32>
    %c0_13 = arith.constant 0 : index
    %c0_14 = arith.constant 0 : index
    %c0_15 = arith.constant 0 : index
    %15 = vector.load %arg1[%c0_13, %c0_14, %c0_15] : memref<1x16x256xf32, #tpu.memory_space<vmem>>, vector<1x16x256xf32>
    %16 = vector.shape_cast %15 : vector<1x16x256xf32> to vector<16x256xf32>
    %c17_i32 = arith.constant 17 : i32
    %17 = tpu.dynamic_rotate %16 by %c17_i32 dim 1 : vector<16x256xf32>, i32 -> vector<16x256xf32>
    %18 = vector.broadcast %1 : vector<1x256xf32> to vector<16x256xf32>
    %19 = arith.mulf %17, %18 : vector<16x256xf32>
    %20 = arith.truncf %19 : vector<16x256xf32> to vector<16x256xbf16>
    %c16_i32 = arith.constant 16 : i32
    %21 = tpu.dynamic_rotate %16 by %c16_i32 dim 1 : vector<16x256xf32>, i32 -> vector<16x256xf32>
    %22 = vector.broadcast %2 : vector<1x256xf32> to vector<16x256xf32>
    %23 = arith.mulf %21, %22 : vector<16x256xf32>
    %24 = arith.truncf %23 : vector<16x256xf32> to vector<16x256xbf16>
    %c15_i32 = arith.constant 15 : i32
    %25 = tpu.dynamic_rotate %16 by %c15_i32 dim 1 : vector<16x256xf32>, i32 -> vector<16x256xf32>
    %26 = vector.broadcast %3 : vector<1x256xf32> to vector<16x256xf32>
    %27 = arith.mulf %25, %26 : vector<16x256xf32>
    %28 = arith.truncf %27 : vector<16x256xf32> to vector<16x256xbf16>
    %c1_i32 = arith.constant 1 : i32
    %29 = tpu.dynamic_rotate %16 by %c1_i32 dim 1 : vector<16x256xf32>, i32 -> vector<16x256xf32>
    %30 = vector.broadcast %4 : vector<1x256xf32> to vector<16x256xf32>
    %31 = arith.mulf %29, %30 : vector<16x256xf32>
    %32 = arith.truncf %31 : vector<16x256xf32> to vector<16x256xbf16>
    %33 = arith.truncf %16 : vector<16x256xf32> to vector<16x256xbf16>
    %c255_i32 = arith.constant 255 : i32
    %34 = tpu.dynamic_rotate %16 by %c255_i32 dim 1 : vector<16x256xf32>, i32 -> vector<16x256xf32>
    %35 = vector.broadcast %5 : vector<1x256xf32> to vector<16x256xf32>
    %36 = arith.mulf %34, %35 : vector<16x256xf32>
    %37 = arith.truncf %36 : vector<16x256xf32> to vector<16x256xbf16>
    %c241_i32 = arith.constant 241 : i32
    %38 = tpu.dynamic_rotate %16 by %c241_i32 dim 1 : vector<16x256xf32>, i32 -> vector<16x256xf32>
    %39 = vector.broadcast %6 : vector<1x256xf32> to vector<16x256xf32>
    %40 = arith.mulf %38, %39 : vector<16x256xf32>
    %41 = arith.truncf %40 : vector<16x256xf32> to vector<16x256xbf16>
    %c240_i32 = arith.constant 240 : i32
    %42 = tpu.dynamic_rotate %16 by %c240_i32 dim 1 : vector<16x256xf32>, i32 -> vector<16x256xf32>
    %43 = vector.broadcast %7 : vector<1x256xf32> to vector<16x256xf32>
    %44 = arith.mulf %42, %43 : vector<16x256xf32>
    %45 = arith.truncf %44 : vector<16x256xf32> to vector<16x256xbf16>
    %c239_i32 = arith.constant 239 : i32
    %46 = tpu.dynamic_rotate %16 by %c239_i32 dim 1 : vector<16x256xf32>, i32 -> vector<16x256xf32>
    %47 = vector.broadcast %8 : vector<1x256xf32> to vector<16x256xf32>
    %48 = arith.mulf %46, %47 : vector<16x256xf32>
    %49 = arith.truncf %48 : vector<16x256xf32> to vector<16x256xbf16>
    %50 = tpu.concatenate %20, %24, %28, %32, %33, %37, %41, %45, %49 in 0 : vector<16x256xbf16>, vector<16x256xbf16>, vector<16x256xbf16>, vector<16x256xbf16>, vector<16x256xbf16>, vector<16x256xbf16>, vector<16x256xbf16>, vector<16x256xbf16>, vector<16x256xbf16> -> vector<144x256xbf16>
    %cst = arith.constant dense<0.000000e+00> : vector<16x256xf32>
    %51 = tpu.matmul %9, %50, %cst {dimension_numbers = #tpu.dot_dimension_numbers<[1], [0], [0], [1], [0, 0, 1, 1], [], []>} : vector<16x144xbf16>, vector<144x256xbf16>, vector<16x256xf32> -> vector<16x256xf32>
    %cst_16 = arith.constant dense<0.000000e+00> : vector<256xf32>
    %52 = vector.multi_reduction <add>, %51, %cst_16 [0] : vector<16x256xf32> to vector<256xf32>
    %53 = vector.shape_cast %52 : vector<256xf32> to vector<1x256xf32>
    %54 = arith.mulf %51, %51 : vector<16x256xf32>
    %cst_17 = arith.constant dense<0.000000e+00> : vector<256xf32>
    %55 = vector.multi_reduction <add>, %54, %cst_17 [0] : vector<16x256xf32> to vector<256xf32>
    %56 = vector.shape_cast %55 : vector<256xf32> to vector<1x256xf32>
    %57 = vector.shape_cast %53 : vector<1x256xf32> to vector<1x1x256xf32>
    %cst_18 = arith.constant dense<0.000000e+00> : vector<1xf32>
    %58 = vector.multi_reduction <add>, %57, %cst_18 [1, 2] : vector<1x1x256xf32> to vector<1xf32>
    %59 = vector.shape_cast %58 : vector<1xf32> to vector<1x1x1xf32>
    %60 = vector.extract %59[0, 0, 0] : f32 from vector<1x1x1xf32>
    %61 = vector.shape_cast %56 : vector<1x256xf32> to vector<1x1x256xf32>
    %cst_19 = arith.constant dense<0.000000e+00> : vector<1xf32>
    %62 = vector.multi_reduction <add>, %61, %cst_19 [1, 2] : vector<1x1x256xf32> to vector<1xf32>
    %63 = vector.shape_cast %62 : vector<1xf32> to vector<1x1x1xf32>
    %64 = vector.extract %63[0, 0, 0] : f32 from vector<1x1x1xf32>
    %cst_20 = arith.constant 4.8828125E-4 : f32
    %65 = arith.mulf %60, %cst_20 : f32
    %cst_21 = arith.constant 4.8828125E-4 : f32
    %66 = arith.mulf %64, %cst_21 : f32
    %67 = arith.mulf %65, %65 : f32
    %68 = arith.subf %66, %67 : f32
    %cst_22 = arith.constant 9.99999974E-6 : f32
    %69 = arith.addf %68, %cst_22 : f32
    %70 = math.rsqrt %69 : f32
    %71 = vector.broadcast %70 : f32 to vector<1x256xf32>
    %72 = arith.mulf %65, %70 : f32
    %73 = vector.broadcast %72 : f32 to vector<1x256xf32>
    %74 = vector.broadcast %71 : vector<1x256xf32> to vector<16x256xf32>
    %75 = arith.mulf %51, %74 : vector<16x256xf32>
    %76 = vector.broadcast %73 : vector<1x256xf32> to vector<16x256xf32>
    %77 = arith.subf %75, %76 : vector<16x256xf32>
    %78 = vector.broadcast %11 : vector<16x1xf32> to vector<16x256xf32>
    %79 = arith.mulf %77, %78 : vector<16x256xf32>
    %80 = vector.broadcast %12 : vector<16x1xf32> to vector<16x256xf32>
    %81 = arith.addf %79, %80 : vector<16x256xf32>
    %cst_23 = arith.constant 5.000000e-01 : f32
    %82 = vector.broadcast %cst_23 : f32 to vector<16x256xf32>
    %83 = arith.mulf %82, %81 : vector<16x256xf32>
    %cst_24 = arith.constant 0.707106769 : f32
    %84 = vector.broadcast %cst_24 : f32 to vector<16x256xf32>
    %85 = arith.mulf %81, %84 : vector<16x256xf32>
    %86 = math.absf %85 : vector<16x256xf32>
    %cst_25 = arith.constant 0.327591091 : f32
    %87 = vector.broadcast %cst_25 : f32 to vector<16x256xf32>
    %88 = arith.mulf %87, %86 : vector<16x256xf32>
    %cst_26 = arith.constant 1.000000e+00 : f32
    %89 = vector.broadcast %cst_26 : f32 to vector<16x256xf32>
    %90 = arith.addf %89, %88 : vector<16x256xf32>
    %cst_27 = arith.constant 1.000000e+00 : f32
    %91 = vector.broadcast %cst_27 : f32 to vector<16x256xf32>
    %92 = arith.divf %91, %90 : vector<16x256xf32>
    %cst_28 = arith.constant 1.06140542 : f32
    %93 = vector.broadcast %cst_28 : f32 to vector<16x256xf32>
    %94 = arith.mulf %93, %92 : vector<16x256xf32>
    %cst_29 = arith.constant -1.45315206 : f32
    %95 = vector.broadcast %cst_29 : f32 to vector<16x256xf32>
    %96 = arith.addf %94, %95 : vector<16x256xf32>
    %97 = arith.mulf %96, %92 : vector<16x256xf32>
    %cst_30 = arith.constant 1.42141378 : f32
    %98 = vector.broadcast %cst_30 : f32 to vector<16x256xf32>
    %99 = arith.addf %97, %98 : vector<16x256xf32>
    %100 = arith.mulf %99, %92 : vector<16x256xf32>
    %cst_31 = arith.constant -0.284496725 : f32
    %101 = vector.broadcast %cst_31 : f32 to vector<16x256xf32>
    %102 = arith.addf %100, %101 : vector<16x256xf32>
    %103 = arith.mulf %102, %92 : vector<16x256xf32>
    %cst_32 = arith.constant 0.254829586 : f32
    %104 = vector.broadcast %cst_32 : f32 to vector<16x256xf32>
    %105 = arith.addf %103, %104 : vector<16x256xf32>
    %106 = arith.mulf %105, %92 : vector<16x256xf32>
    %cst_33 = arith.constant 0.000000e+00 : f32
    %107 = vector.broadcast %cst_33 : f32 to vector<16x256xf32>
    %108 = arith.subf %107, %86 : vector<16x256xf32>
    %109 = arith.mulf %108, %86 : vector<16x256xf32>
    %110 = math.exp %109 : vector<16x256xf32>
    %111 = arith.mulf %106, %110 : vector<16x256xf32>
    %cst_34 = arith.constant 1.000000e+00 : f32
    %112 = vector.broadcast %cst_34 : f32 to vector<16x256xf32>
    %113 = arith.subf %112, %111 : vector<16x256xf32>
    %cst_35 = arith.constant 0.000000e+00 : f32
    %114 = vector.broadcast %cst_35 : f32 to vector<16x256xf32>
    %115 = arith.cmpf oge, %85, %114 : vector<16x256xf32>
    %cst_36 = arith.constant 0.000000e+00 : f32
    %116 = vector.broadcast %cst_36 : f32 to vector<16x256xf32>
    %117 = arith.subf %116, %113 : vector<16x256xf32>
    %118 = arith.select %115, %113, %117 : vector<16x256xi1>, vector<16x256xf32>
    %cst_37 = arith.constant 1.000000e+00 : f32
    %119 = vector.broadcast %cst_37 : f32 to vector<16x256xf32>
    %120 = arith.addf %119, %118 : vector<16x256xf32>
    %121 = arith.mulf %83, %120 : vector<16x256xf32>
    %c17_i32_38 = arith.constant 17 : i32
    %122 = tpu.dynamic_rotate %121 by %c17_i32_38 dim 1 : vector<16x256xf32>, i32 -> vector<16x256xf32>
    %123 = vector.broadcast %1 : vector<1x256xf32> to vector<16x256xf32>
    %124 = arith.mulf %122, %123 : vector<16x256xf32>
    %125 = arith.truncf %124 : vector<16x256xf32> to vector<16x256xbf16>
    %c16_i32_39 = arith.constant 16 : i32
    %126 = tpu.dynamic_rotate %121 by %c16_i32_39 dim 1 : vector<16x256xf32>, i32 -> vector<16x256xf32>
    %127 = vector.broadcast %2 : vector<1x256xf32> to vector<16x256xf32>
    %128 = arith.mulf %126, %127 : vector<16x256xf32>
    %129 = arith.truncf %128 : vector<16x256xf32> to vector<16x256xbf16>
    %c15_i32_40 = arith.constant 15 : i32
    %130 = tpu.dynamic_rotate %121 by %c15_i32_40 dim 1 : vector<16x256xf32>, i32 -> vector<16x256xf32>
    %131 = vector.broadcast %3 : vector<1x256xf32> to vector<16x256xf32>
    %132 = arith.mulf %130, %131 : vector<16x256xf32>
    %133 = arith.truncf %132 : vector<16x256xf32> to vector<16x256xbf16>
    %c1_i32_41 = arith.constant 1 : i32
    %134 = tpu.dynamic_rotate %121 by %c1_i32_41 dim 1 : vector<16x256xf32>, i32 -> vector<16x256xf32>
    %135 = vector.broadcast %4 : vector<1x256xf32> to vector<16x256xf32>
    %136 = arith.mulf %134, %135 : vector<16x256xf32>
    %137 = arith.truncf %136 : vector<16x256xf32> to vector<16x256xbf16>
    %138 = arith.truncf %121 : vector<16x256xf32> to vector<16x256xbf16>
    %c255_i32_42 = arith.constant 255 : i32
    %139 = tpu.dynamic_rotate %121 by %c255_i32_42 dim 1 : vector<16x256xf32>, i32 -> vector<16x256xf32>
    %140 = vector.broadcast %5 : vector<1x256xf32> to vector<16x256xf32>
    %141 = arith.mulf %139, %140 : vector<16x256xf32>
    %142 = arith.truncf %141 : vector<16x256xf32> to vector<16x256xbf16>
    %c241_i32_43 = arith.constant 241 : i32
    %143 = tpu.dynamic_rotate %121 by %c241_i32_43 dim 1 : vector<16x256xf32>, i32 -> vector<16x256xf32>
    %144 = vector.broadcast %6 : vector<1x256xf32> to vector<16x256xf32>
    %145 = arith.mulf %143, %144 : vector<16x256xf32>
    %146 = arith.truncf %145 : vector<16x256xf32> to vector<16x256xbf16>
    %c240_i32_44 = arith.constant 240 : i32
    %147 = tpu.dynamic_rotate %121 by %c240_i32_44 dim 1 : vector<16x256xf32>, i32 -> vector<16x256xf32>
    %148 = vector.broadcast %7 : vector<1x256xf32> to vector<16x256xf32>
    %149 = arith.mulf %147, %148 : vector<16x256xf32>
    %150 = arith.truncf %149 : vector<16x256xf32> to vector<16x256xbf16>
    %c239_i32_45 = arith.constant 239 : i32
    %151 = tpu.dynamic_rotate %121 by %c239_i32_45 dim 1 : vector<16x256xf32>, i32 -> vector<16x256xf32>
    %152 = vector.broadcast %8 : vector<1x256xf32> to vector<16x256xf32>
    %153 = arith.mulf %151, %152 : vector<16x256xf32>
    %154 = arith.truncf %153 : vector<16x256xf32> to vector<16x256xbf16>
    %155 = tpu.concatenate %125, %129, %133, %137, %138, %142, %146, %150, %154 in 0 : vector<16x256xbf16>, vector<16x256xbf16>, vector<16x256xbf16>, vector<16x256xbf16>, vector<16x256xbf16>, vector<16x256xbf16>, vector<16x256xbf16>, vector<16x256xbf16>, vector<16x256xbf16> -> vector<144x256xbf16>
    %cst_46 = arith.constant dense<0.000000e+00> : vector<16x256xf32>
    %156 = tpu.matmul %10, %155, %cst_46 {dimension_numbers = #tpu.dot_dimension_numbers<[1], [0], [0], [1], [0, 0, 1, 1], [], []>} : vector<16x144xbf16>, vector<144x256xbf16>, vector<16x256xf32> -> vector<16x256xf32>
    %cst_47 = arith.constant dense<0.000000e+00> : vector<256xf32>
    %157 = vector.multi_reduction <add>, %156, %cst_47 [0] : vector<16x256xf32> to vector<256xf32>
    %158 = vector.shape_cast %157 : vector<256xf32> to vector<1x256xf32>
    %159 = arith.mulf %156, %156 : vector<16x256xf32>
    %cst_48 = arith.constant dense<0.000000e+00> : vector<256xf32>
    %160 = vector.multi_reduction <add>, %159, %cst_48 [0] : vector<16x256xf32> to vector<256xf32>
    %161 = vector.shape_cast %160 : vector<256xf32> to vector<1x256xf32>
    %162 = vector.shape_cast %158 : vector<1x256xf32> to vector<1x1x256xf32>
    %cst_49 = arith.constant dense<0.000000e+00> : vector<1xf32>
    %163 = vector.multi_reduction <add>, %162, %cst_49 [1, 2] : vector<1x1x256xf32> to vector<1xf32>
    %164 = vector.shape_cast %163 : vector<1xf32> to vector<1x1x1xf32>
    %165 = vector.extract %164[0, 0, 0] : f32 from vector<1x1x1xf32>
    %166 = vector.shape_cast %161 : vector<1x256xf32> to vector<1x1x256xf32>
    %cst_50 = arith.constant dense<0.000000e+00> : vector<1xf32>
    %167 = vector.multi_reduction <add>, %166, %cst_50 [1, 2] : vector<1x1x256xf32> to vector<1xf32>
    %168 = vector.shape_cast %167 : vector<1xf32> to vector<1x1x1xf32>
    %169 = vector.extract %168[0, 0, 0] : f32 from vector<1x1x1xf32>
    %cst_51 = arith.constant 4.8828125E-4 : f32
    %170 = arith.mulf %165, %cst_51 : f32
    %cst_52 = arith.constant 4.8828125E-4 : f32
    %171 = arith.mulf %169, %cst_52 : f32
    %172 = arith.mulf %170, %170 : f32
    %173 = arith.subf %171, %172 : f32
    %cst_53 = arith.constant 9.99999974E-6 : f32
    %174 = arith.addf %173, %cst_53 : f32
    %175 = math.rsqrt %174 : f32
    %176 = vector.broadcast %175 : f32 to vector<1x256xf32>
    %177 = arith.mulf %170, %175 : f32
    %178 = vector.broadcast %177 : f32 to vector<1x256xf32>
    %179 = vector.broadcast %176 : vector<1x256xf32> to vector<16x256xf32>
    %180 = arith.mulf %156, %179 : vector<16x256xf32>
    %181 = vector.broadcast %178 : vector<1x256xf32> to vector<16x256xf32>
    %182 = arith.subf %180, %181 : vector<16x256xf32>
    %183 = vector.broadcast %13 : vector<16x1xf32> to vector<16x256xf32>
    %184 = arith.mulf %182, %183 : vector<16x256xf32>
    %185 = vector.broadcast %14 : vector<16x1xf32> to vector<16x256xf32>
    %186 = arith.addf %184, %185 : vector<16x256xf32>
    %187 = vector.extract_strided_slice %186 {offsets = [0, 0], sizes = [8, 256], strides = [1, 1]} : vector<16x256xf32> to vector<8x256xf32>
    %c0_54 = arith.constant 0 : index
    %c0_55 = arith.constant 0 : index
    %c0_56 = arith.constant 0 : index
    %188 = vector.load %arg9[%c0_54, %c0_55, %c0_56] : memref<1x8x256xf32, #tpu.memory_space<vmem>>, vector<1x8x256xf32>
    %189 = vector.shape_cast %188 : vector<1x8x256xf32> to vector<8x256xf32>
    %190 = vector.shape_cast %187 : vector<8x256xf32> to vector<1x8x256xf32>
    tpu.vector_store %arg9[%c0_54, %c0_55, %c0_56], %190 {strides = array<i32>} : memref<1x8x256xf32, #tpu.memory_space<vmem>>, vector<1x8x256xf32>,
    return
  }
  func.func @transform_0(%arg0: i32) -> (i32, i32, i32) {
    %c0_i32 = arith.constant 0 : i32
    %c0_i32_0 = arith.constant 0 : i32
    %c0_i32_1 = arith.constant 0 : i32
    return %arg0, %c0_i32, %c0_i32_0 : i32, i32, i32
  }
  func.func @transform_1(%arg0: i32) -> (i32, i32) {
    %c0_i32 = arith.constant 0 : i32
    %c0_i32_0 = arith.constant 0 : i32
    %c0_i32_1 = arith.constant 0 : i32
    return %c0_i32, %c0_i32_0 : i32, i32
  }
  func.func @transform_2(%arg0: i32) -> (i32, i32) {
    %c0_i32 = arith.constant 0 : i32
    %c0_i32_0 = arith.constant 0 : i32
    %c0_i32_1 = arith.constant 0 : i32
    return %c0_i32, %c0_i32_0 : i32, i32
  }
  func.func @transform_3(%arg0: i32) -> (i32, i32) {
    %c0_i32 = arith.constant 0 : i32
    %c0_i32_0 = arith.constant 0 : i32
    %c0_i32_1 = arith.constant 0 : i32
    return %c0_i32, %c0_i32_0 : i32, i32
  }
  func.func @transform_4(%arg0: i32) -> (i32, i32) {
    %c0_i32 = arith.constant 0 : i32
    %c0_i32_0 = arith.constant 0 : i32
    %c0_i32_1 = arith.constant 0 : i32
    return %c0_i32, %c0_i32_0 : i32, i32
  }
  func.func @transform_5(%arg0: i32) -> (i32, i32) {
    %c0_i32 = arith.constant 0 : i32
    %c0_i32_0 = arith.constant 0 : i32
    %c0_i32_1 = arith.constant 0 : i32
    return %c0_i32, %c0_i32_0 : i32, i32
  }
  func.func @transform_6(%arg0: i32) -> (i32, i32) {
    %c0_i32 = arith.constant 0 : i32
    %c0_i32_0 = arith.constant 0 : i32
    %c0_i32_1 = arith.constant 0 : i32
    return %c0_i32, %c0_i32_0 : i32, i32
  }
  func.func @transform_7(%arg0: i32) -> (i32, i32) {
    %c0_i32 = arith.constant 0 : i32
    %c0_i32_0 = arith.constant 0 : i32
    %c0_i32_1 = arith.constant 0 : i32
    return %c0_i32, %c0_i32_0 : i32, i32
  }
  func.func @transform_8(%arg0: i32) -> (i32, i32, i32) {
    %c0_i32 = arith.constant 0 : i32
    %c0_i32_0 = arith.constant 0 : i32
    %c0_i32_1 = arith.constant 0 : i32
    return %arg0, %c0_i32, %c0_i32_0 : i32, i32, i32
  }
}

</mosaic_0001>

<llo_original>
// kernel: tpu_custom_call.1
$region0: #{tpu_custom_call.1}
  #allocation0 [shape = 'u32[]', space=smem, size = 0x4, offset = 0x4, fixed_abs, tag = 'smem constant byte address 0x4 - core index']
  #allocation1 [shape = 'u32[144,128]{1,0:T(1,128)}', space=vmem, size = 0x12000, scoped, tag = 'internal scratch']
  %s0 = inlined_call_operand.vmem [shape: f32[2,16,256], index: 0, kind: input, shape index: {}]
  %s1 = inlined_call_operand.hbm [shape: f32[16,256], index: 1, kind: input, shape index: {}]
  %s2 = inlined_call_operand.hbm [shape: bf16[16,144], index: 2, kind: input, shape index: {}]
  %s3 = inlined_call_operand.vmem [shape: f32[16,1], index: 3, kind: input, shape index: {}]
  %s4 = inlined_call_operand.vmem [shape: f32[16,1], index: 4, kind: input, shape index: {}]
  %s5 = inlined_call_operand.vmem [shape: bf16[16,144], index: 5, kind: input, shape index: {}]
  %s6 = inlined_call_operand.vmem [shape: f32[16,1], index: 6, kind: input, shape index: {}]
  %s7 = inlined_call_operand.vmem [shape: f32[16,1], index: 7, kind: input, shape index: {}]
  %s8 = inlined_call_operand.hbm [shape: f32[2,8,256], index: 8, kind: output, shape index: {}]
  %s9 = sld [smem:[#allocation0]]
  $region73: #{tpu_custom_call.1} parent=0
    _
  %s11 = ssub.s32 1, %s9
  %s12 = scalar_select 0, %s11, %s9
  $region1: #{tpu_custom_call.1} parent=0
    #allocation2 [shape = 'u8[16384]{0}', space=vmem, size = 0x4000, scoped, tag = 'input window, operand 1, single buffered']
    #allocation3 [shape = 's32[2]{0}', space=sflag, size = 0x8, scoped, tag = 'scoped memory for tpu_custom_call.1']
    #allocation4 [shape = 's32[2]{0}', space=sflag, size = 0x8, scoped, tag = 'scoped memory for tpu_custom_call.1']
    #allocation5 [shape = 'u8[8192]{0}', space=vmem, size = 0x2000, scoped, tag = 'input window, operand 2, single buffered']
    #allocation6 [shape = 's32[1]{0}', space=sflag, size = 0x4, scoped, tag = 'scoped memory for tpu_custom_call.1']
    #allocation7 [shape = 'u8[16384]{0}', space=vmem, size = 0x4000, scoped, tag = 'output window, operand 0']
    %13 = vsyncpa [#allocation3], 0
    %14 = vsyncpa [#allocation6], 0
    %15 = vsyncpa [#allocation4], 0
    %s16 = scalar_lea.sflag [#allocation4], 1
    %17 = vsyncpa %s16, 0
    loop: start=0, step=1, limit=4
    $region2: #{tpu_custom_call.1} parent=1 // loop_pre_header
      _
    $region3: #{tpu_custom_call.1} parent=1 // loop_header
      %s19 = sphi 0, %s23
      %p20 = scmp.ge.s32.totalorder %s19, 4
      %s29 = sphi 0, %s31
      %s32 = sphi 0, %s29
      %s33 = sphi 0, %s32
      %s49 = sphi 0, %s33
      %s53 = sphi 0, %s53
      %s55 = sphi 0, %s53
      %s56 = sphi 0, %s55
      %s70 = sphi 0, %s56
      %s74 = sphi 0, %s74
      %s76 = sphi 0, %s74
      %s77 = sphi 0, %s76
      %s91 = sphi 0, %s77
      %s95 = sphi 0, %s95
      %s97 = sphi 0, %s95
      %s98 = sphi 0, %s97
      %s112 = sphi 0, %s98
      %s116 = sphi 0, %s116
      %s118 = sphi 0, %s116
      %s119 = sphi 0, %s118
      %s133 = sphi 0, %s119
      %s137 = sphi 0, %s137
      %s139 = sphi 0, %s137
      %s140 = sphi 0, %s139
      %s154 = sphi 0, %s140
      %s158 = sphi 0, %s158
      %s160 = sphi 0, %s158
      %s161 = sphi 0, %s160
      %s175 = sphi 0, %s161
      %s179 = sphi 0, %s179
      %s181 = sphi 0, %s179
      %s182 = sphi 0, %s181
      %s196 = sphi 0, %s182
      %s202 = sphi 0, %s204
      %s205 = sphi 0, %s202
      %s206 = sphi 0, %s205
      %s222 = sphi 0, %s206
    $region4: #{tpu_custom_call.1} parent=1 // loop_header_branch
      %22 = sbr.rel (%p20) target = $region8
    $region5: #{tpu_custom_call.1} parent=1 // loop_body
      %s24 = ssub.s32 %s19, 1
      %s25 = ssub.s32 %s19, 2
      %s26 = sadd.s32 %s19, 1
      %s27 = ssub.s32 %s19, %s26
      %p28 = scmp.eq.s32.totalorder %s27, 0
      %s30 = sadd.s32 %s29, 1
      %s31 = scalar_select %p28, %s29, %s30
      %p34 = pneg %p28
      %p35 = scmp.eq.s32.totalorder %s19, 1
      %p36 = por %p34, %p35
      %p37 = scmp.ne.s32.totalorder %s29, %s32
      %p38 = scmp.eq.s32.totalorder %s19, 0
      %p39 = por %p37, %p38
      %p40 = scmp.ne.s32.totalorder %s29, %s32
      %p41 = scmp.eq.s32.totalorder %s24, 1
      %p42 = por %p40, %p41
      %p43 = scmp.ne.s32.totalorder %s32, %s33
      %p44 = scmp.eq.s32.totalorder %s24, 0
      %p45 = por %p43, %p44
      %p46 = scmp.ne.s32.totalorder %s32, %s33
      %p47 = scmp.eq.s32.totalorder %s25, 1
      %p48 = por %p46, %p47
      %p50 = scmp.ne.s32.totalorder %s33, %s49
      %p51 = scmp.eq.s32.totalorder %s25, 0
      %p52 = por %p50, %p51
      %s54 = sadd.s32 %s53, 1
      %p57 = scmp.eq.s32.totalorder %s19, 1
      %p58 = scmp.ne.s32.totalorder %s53, %s55
      %p59 = scmp.eq.s32.totalorder %s19, 0
      %p60 = por %p58, %p59
      %p61 = scmp.ne.s32.totalorder %s53, %s55
      %p62 = scmp.eq.s32.totalorder %s24, 1
      %p63 = por %p61, %p62
      %p64 = scmp.ne.s32.totalorder %s55, %s56
      %p65 = scmp.eq.s32.totalorder %s24, 0
      %p66 = por %p64, %p65
      %p67 = scmp.ne.s32.totalorder %s55, %s56
      %p68 = scmp.eq.s32.totalorder %s25, 1
      %p69 = por %p67, %p68
      %p71 = scmp.ne.s32.totalorder %s56, %s70
      %p72 = scmp.eq.s32.totalorder %s25, 0
      %p73 = por %p71, %p72
      %s75 = sadd.s32 %s74, 1
      %p78 = scmp.eq.s32.totalorder %s19, 1
      %p79 = scmp.ne.s32.totalorder %s74, %s76
      %p80 = scmp.eq.s32.totalorder %s19, 0
      %p81 = por %p79, %p80
      %p82 = scmp.ne.s32.totalorder %s74, %s76
      %p83 = scmp.eq.s32.totalorder %s24, 1
      %p84 = por %p82, %p83
      %p85 = scmp.ne.s32.totalorder %s76, %s77
      %p86 = scmp.eq.s32.totalorder %s24, 0
      %p87 = por %p85, %p86
      %p88 = scmp.ne.s32.totalorder %s76, %s77
      %p89 = scmp.eq.s32.totalorder %s25, 1
      %p90 = por %p88, %p89
      %p92 = scmp.ne.s32.totalorder %s77, %s91
      %p93 = scmp.eq.s32.totalorder %s25, 0
      %p94 = por %p92, %p93
      %s96 = sadd.s32 %s95, 1
      %p99 = scmp.eq.s32.totalorder %s19, 1
      %p100 = scmp.ne.s32.totalorder %s95, %s97
      %p101 = scmp.eq.s32.totalorder %s19, 0
      %p102 = por %p100, %p101
      %p103 = scmp.ne.s32.totalorder %s95, %s97
      %p104 = scmp.eq.s32.totalorder %s24, 1
      %p105 = por %p103, %p104
      %p106 = scmp.ne.s32.totalorder %s97, %s98
      %p107 = scmp.eq.s32.totalorder %s24, 0
      %p108 = por %p106, %p107
      %p109 = scmp.ne.s32.totalorder %s97, %s98
      %p110 = scmp.eq.s32.totalorder %s25, 1
      %p111 = por %p109, %p110
      %p113 = scmp.ne.s32.totalorder %s98, %s112
      %p114 = scmp.eq.s32.totalorder %s25, 0
      %p115 = por %p113, %p114
      %s117 = sadd.s32 %s116, 1
      %p120 = scmp.eq.s32.totalorder %s19, 1
      %p121 = scmp.ne.s32.totalorder %s116, %s118
      %p122 = scmp.eq.s32.totalorder %s19, 0
      %p123 = por %p121, %p122
      %p124 = scmp.ne.s32.totalorder %s116, %s118
      %p125 = scmp.eq.s32.totalorder %s24, 1
      %p126 = por %p124, %p125
      %p127 = scmp.ne.s32.totalorder %s118, %s119
      %p128 = scmp.eq.s32.totalorder %s24, 0
      %p129 = por %p127, %p128
      %p130 = scmp.ne.s32.totalorder %s118, %s119
      %p131 = scmp.eq.s32.totalorder %s25, 1
      %p132 = por %p130, %p131
      %p134 = scmp.ne.s32.totalorder %s119, %s133
      %p135 = scmp.eq.s32.totalorder %s25, 0
      %p136 = por %p134, %p135
      %s138 = sadd.s32 %s137, 1
      %p141 = scmp.eq.s32.totalorder %s19, 1
      %p142 = scmp.ne.s32.totalorder %s137, %s139
      %p143 = scmp.eq.s32.totalorder %s19, 0
      %p144 = por %p142, %p143
      %p145 = scmp.ne.s32.totalorder %s137, %s139
      %p146 = scmp.eq.s32.totalorder %s24, 1
      %p147 = por %p145, %p146
      %p148 = scmp.ne.s32.totalorder %s139, %s140
      %p149 = scmp.eq.s32.totalorder %s24, 0
      %p150 = por %p148, %p149
      %p151 = scmp.ne.s32.totalorder %s139, %s140
      %p152 = scmp.eq.s32.totalorder %s25, 1
      %p153 = por %p151, %p152
      %p155 = scmp.ne.s32.totalorder %s140, %s154
      %p156 = scmp.eq.s32.totalorder %s25, 0
      %p157 = por %p155, %p156
      %s159 = sadd.s32 %s158, 1
      %p162 = scmp.eq.s32.totalorder %s19, 1
      %p163 = scmp.ne.s32.totalorder %s158, %s160
      %p164 = scmp.eq.s32.totalorder %s19, 0
      %p165 = por %p163, %p164
      %p166 = scmp.ne.s32.totalorder %s158, %s160
      %p167 = scmp.eq.s32.totalorder %s24, 1
      %p168 = por %p166, %p167
      %p169 = scmp.ne.s32.totalorder %s160, %s161
      %p170 = scmp.eq.s32.totalorder %s24, 0
      %p171 = por %p169, %p170
      %p172 = scmp.ne.s32.totalorder %s160, %s161
      %p173 = scmp.eq.s32.totalorder %s25, 1
      %p174 = por %p172, %p173
      %p176 = scmp.ne.s32.totalorder %s161, %s175
      %p177 = scmp.eq.s32.totalorder %s25, 0
      %p178 = por %p176, %p177
      %s180 = sadd.s32 %s179, 1
      %p183 = scmp.eq.s32.totalorder %s19, 1
      %p184 = scmp.ne.s32.totalorder %s179, %s181
      %p185 = scmp.eq.s32.totalorder %s19, 0
      %p186 = por %p184, %p185
      %p187 = scmp.ne.s32.totalorder %s179, %s181
      %p188 = scmp.eq.s32.totalorder %s24, 1
      %p189 = por %p187, %p188
      %p190 = scmp.ne.s32.totalorder %s181, %s182
      %p191 = scmp.eq.s32.totalorder %s24, 0
      %p192 = por %p190, %p191
      %p193 = scmp.ne.s32.totalorder %s181, %s182
      %p194 = scmp.eq.s32.totalorder %s25, 1
      %p195 = por %p193, %p194
      %p197 = scmp.ne.s32.totalorder %s182, %s196
      %p198 = scmp.eq.s32.totalorder %s25, 0
      %p199 = por %p197, %p198
      %s200 = ssub.s32 %s19, %s26
      %p201 = scmp.eq.s32.totalorder %s200, 0
      %s203 = sadd.s32 %s202, 1
      %s204 = scalar_select %p201, %s202, %s203
      %p207 = pneg %p201
      %p208 = scmp.eq.s32.totalorder %s19, 1
      %p209 = por %p207, %p208
      %p210 = scmp.ne.s32.totalorder %s202, %s205
      %p211 = scmp.eq.s32.totalorder %s19, 0
      %p212 = por %p210, %p211
      %p213 = scmp.ne.s32.totalorder %s202, %s205
      %p214 = scmp.eq.s32.totalorder %s24, 1
      %p215 = por %p213, %p214
      %p216 = scmp.ne.s32.totalorder %s205, %s206
      %p217 = scmp.eq.s32.totalorder %s24, 0
      %p218 = por %p216, %p217
      %p219 = scmp.ne.s32.totalorder %s205, %s206
      %p220 = scmp.eq.s32.totalorder %s25, 1
      %p221 = por %p219, %p220
      %p223 = scmp.ne.s32.totalorder %s206, %s222
      %p224 = scmp.eq.s32.totalorder %s25, 0
      %p225 = por %p223, %p224
      %p226 = scmp.le.s32.totalorder 1, %s19
      %p227 = scmp.lt.s32.totalorder %s19, 3
      %p228 = pnand %p226, %p227
      %p229 = pneg %p228
      // Predicated region
      $region9: #{tpu_custom_call.1} parent=5 // pred_check
        _
      $region10: #{tpu_custom_call.1} parent=5 // pred_check_branch
        %231 = sbr.rel (%p228) target = $region12
      $region11: #{tpu_custom_call.1} parent=5 // pred_region
        %s232 = ssub.s32 %s19, 1
        // Predicated region
        $region13: #{tpu_custom_call.1} parent=11 // pred_check
          %p233 = pneg %p66
        $region14: #{tpu_custom_call.1} parent=11 // pred_check_branch
          %235 = sbr.rel (%p233) target = $region16
        $region15: #{tpu_custom_call.1} parent=11 // pred_region
          %s237 = ssub.s32 512, 512
          %238 = vsyncadd [#allocation3], %s237
          %s239 = sshll.u32 [#allocation2], 4
          %s240 = int_to_ptr.vmem [resolvable:$true] %s239
          %245 = dma.hbm_to_vmem [thread:$0]  %s1, 512, %s240, [#allocation3], 256, 256, 16
        $region16: #{tpu_custom_call.1} parent=11 // pred_fallthru
          _
        // Predicated region
        $region17: #{tpu_custom_call.1} parent=11 // pred_check
          %p246 = pneg %p87
        $region18: #{tpu_custom_call.1} parent=11 // pred_check_branch
          %248 = sbr.rel (%p246) target = $region20
        $region19: #{tpu_custom_call.1} parent=11 // pred_region
          %s250 = ssub.s32 256, 256
          %251 = vsyncadd [#allocation6], %s250
          %s252 = sshll.u32 [#allocation5], 4
          %s253 = int_to_ptr.vmem [resolvable:$true] %s252
          %258 = dma.hbm_to_vmem [thread:$0]  %s2, 256, %s253, [#allocation6], 128, 128, 8
        $region20: #{tpu_custom_call.1} parent=11 // pred_fallthru
          _
        // Predicated region
        $region21: #{tpu_custom_call.1} parent=11 // pred_check
          %p259 = pneg %p108
        $region22: #{tpu_custom_call.1} parent=11 // pred_check_branch
          %261 = sbr.rel (%p259) target = $region24
        $region23: #{tpu_custom_call.1} parent=11 // pred_region
          _
        $region24: #{tpu_custom_call.1} parent=11 // pred_fallthru
          _
        // Predicated region
        $region25: #{tpu_custom_call.1} parent=11 // pred_check
          %p262 = pneg %p129
        $region26: #{tpu_custom_call.1} parent=11 // pred_check_branch
          %264 = sbr.rel (%p262) target = $region28
        $region27: #{tpu_custom_call.1} parent=11 // pred_region
          _
        $region28: #{tpu_custom_call.1} parent=11 // pred_fallthru
          _
        // Predicated region
        $region29: #{tpu_custom_call.1} parent=11 // pred_check
          %p265 = pneg %p150
        $region30: #{tpu_custom_call.1} parent=11 // pred_check_branch
          %267 = sbr.rel (%p265) target = $region32
        $region31: #{tpu_custom_call.1} parent=11 // pred_region
          _
        $region32: #{tpu_custom_call.1} parent=11 // pred_fallthru
          _
        // Predicated region
        $region33: #{tpu_custom_call.1} parent=11 // pred_check
          %p268 = pneg %p171
        $region34: #{tpu_custom_call.1} parent=11 // pred_check_branch
          %270 = sbr.rel (%p268) target = $region36
        $region35: #{tpu_custom_call.1} parent=11 // pred_region
          _
        $region36: #{tpu_custom_call.1} parent=11 // pred_fallthru
          _
        // Predicated region
        $region37: #{tpu_custom_call.1} parent=11 // pred_check
          %p271 = pneg %p192
        $region38: #{tpu_custom_call.1} parent=11 // pred_check_branch
          %273 = sbr.rel (%p271) target = $region40
        $region39: #{tpu_custom_call.1} parent=11 // pred_region
          _
        $region40: #{tpu_custom_call.1} parent=11 // pred_fallthru
          _
      $region12: #{tpu_custom_call.1} parent=5 // pred_fallthru
        _
      %p274 = scmp.lt.s32.totalorder %s19, 2
      // Predicated region
      $region41: #{tpu_custom_call.1} parent=5 // pred_check
        %p275 = pneg %p274
      $region42: #{tpu_custom_call.1} parent=5 // pred_check_branch
        %277 = sbr.rel (%p275) target = $region44
      $region43: #{tpu_custom_call.1} parent=5 // pred_region
        // Predicated region
        $region45: #{tpu_custom_call.1} parent=43 // pred_check
          %p278 = pneg %p39
        $region46: #{tpu_custom_call.1} parent=43 // pred_check_branch
          %280 = sbr.rel (%p278) target = $region48
        $region47: #{tpu_custom_call.1} parent=43 // pred_region
          %p281 = scmp.lt.s32.totalorder %s19, 1
          %s282 = scalar_select %p281, %s19, 1
          %s283 = smul.addr %s282, 4
          %s284 = smul.addr %s283, 8
          %s285 = scalar_lea.vmem %s0, %s284
        $region48: #{tpu_custom_call.1} parent=43 // pred_fallthru
          _
      $region44: #{tpu_custom_call.1} parent=5 // pred_fallthru
        _
      %p286 = scmp.le.s32.totalorder 1, %s19
      %p287 = scmp.lt.s32.totalorder %s19, 3
      %p288 = pnand %p286, %p287
      %p289 = pneg %p288
      // Predicated region
      $region49: #{tpu_custom_call.1} parent=5 // pred_check
        _
      $region50: #{tpu_custom_call.1} parent=5 // pred_check_branch
        %291 = sbr.rel (%p288) target = $region52
      $region51: #{tpu_custom_call.1} parent=5 // pred_region
        %s292 = ssub.s32 %s19, 1
        // Predicated region
        $region53: #{tpu_custom_call.1} parent=51 // pred_check
          %p293 = pneg %p66
        $region54: #{tpu_custom_call.1} parent=51 // pred_check_branch
          %295 = sbr.rel (%p293) target = $region56
        $region55: #{tpu_custom_call.1} parent=51 // pred_region
          %296 = dma.done [#allocation3], 512
        $region56: #{tpu_custom_call.1} parent=51 // pred_fallthru
          _
        // Predicated region
        $region57: #{tpu_custom_call.1} parent=51 // pred_check
          %p297 = pneg %p87
        $region58: #{tpu_custom_call.1} parent=51 // pred_check_branch
          %299 = sbr.rel (%p297) target = $region60
        $region59: #{tpu_custom_call.1} parent=51 // pred_region
          %300 = dma.done [#allocation6], 256
        $region60: #{tpu_custom_call.1} parent=51 // pred_fallthru
          _
        %p301 = scmp.lt.s32.totalorder %s24, 1
        %s302 = scalar_select %p301, %s24, 1
        %s303 = smul.addr %s302, 4
        %s304 = smul.addr %s303, 8
        %s305 = scalar_lea.vmem %s0, %s304
        %p306 = pneg %p45
        %p307 = pneg %p42
        %p308 = pneg %p66
        %p309 = pneg %p63
        %p310 = pneg %p87
        %p311 = pneg %p84
        %p312 = pneg %p108
        %p313 = pneg %p105
        %p314 = pneg %p129
        %p315 = pneg %p126
        %p316 = pneg %p150
        %p317 = pneg %p147
        %p318 = pneg %p171
        %p319 = pneg %p168
        %p320 = pneg %p192
        %p321 = pneg %p189
        %p322 = pneg %p218
        %p323 = pneg %p215
        %s324 = sand.u32 %s205, 1
        %s325 = scalar_lea.sflag [#allocation4], %s324
        %s326 = sand.u32 %s205, 1
        %s327 = smul.addr %s326, 16
        %s328 = scalar_lea.vmem [#allocation7], %s327
        %p329 = scmp.lt.s32.totalorder %s24, 1
        %s330 = scalar_select %p329, %s24, 1
        %s331 = smul.addr %s330, 4
        %s332 = smul.addr %s331, 8
        %s333 = scalar_lea.vmem %s0, %s332
        %v335 = vld [vmem:[#allocation2] sm:$0xff]
        %v336 = vld [vmem:[#allocation2 + $0x8] sm:$0xff]
        %v337 = vld [vmem:[#allocation2 + $0x10] sm:$0xff]
        %v338 = vld [vmem:[#allocation2 + $0x18] sm:$0xff]
        %v339 = vld [vmem:[#allocation5] sm:$0xff]
        %v340 = vld [vmem:[#allocation5 + $0x8] sm:$0xff]
        %v341 = vld [vmem:[%s5] sm:$0xff]
        %v342 = vld [vmem:[%s5 + $0x8] sm:$0xff]
        %v343 = vld [vmem:[%s3] sm:$0xff]
        %v344 = vld [vmem:[%s3 + $0x8] sm:$0xff]
        %v345 = vld [vmem:[%s4] sm:$0xff]
        %v346 = vld [vmem:[%s4 + $0x8] sm:$0xff]
        %v347 = vld [vmem:[%s6] sm:$0xff]
        %v348 = vld [vmem:[%s7] sm:$0xff]
        %v349 = vld [vmem:[%s333] sm:$0xff]
        %v350 = vld [vmem:[%s333 + $0x8] sm:$0xff]
        %v351 = vld [vmem:[%s333 + $0x10] sm:$0xff]
        %v352 = vld [vmem:[%s333 + $0x18] sm:$0xff]
        %353 = vrot.lane.b32.xlu0 %v349, 17
        %v354 = vpop.permute.xlu0 %353
        %355 = vrot.lane.b32.xlu0 %v351, 17
        %v356 = vpop.permute.xlu0 %355
        %357 = vrot.lane.b32.xlu0 %v350, 17
        %v358 = vpop.permute.xlu0 %357
        %359 = vrot.lane.b32.xlu0 %v352, 17
        %v360 = vpop.permute.xlu0 %359
        %v361 = vlaneseq
        %v362 = vand.u32 %v361, 127
        %vm363 = vcmp.lt.s32.totalorder %v362, 17
        %v364 = vsel %vm363, %v354, %v358
        %v365 = vsel %vm363, %v356, %v360
        %v366 = vsel %vm363, %v358, %v354
        %v367 = vsel %vm363, %v360, %v356
        %v368 = vlaneseq
        %v369 = vshrl.u32 %v368, 7
        %v370 = vsub.s32 0, %v369
        %v371 = vrot.slane %v335, %v370
        %v372 = vlaneseq
        %v373 = vshrl.u32 %v372, 7
        %v374 = vsub.s32 0, %v373
        %v375 = vrot.slane %v336, %v374
        %v376 = vmul.f32 %v366, %v371
        %v377 = vmul.f32 %v364, %v375
        %v378 = vmul.f32 %v367, %v371
        %v379 = vmul.f32 %v365, %v375
        %v380 = vpack.c.bf16 %v378, %v376
        %v381 = vpack.c.bf16 %v379, %v377
        %382 = vrot.lane.b32.xlu0 %v349, 16
        %v383 = vpop.permute.xlu0 %382
        %384 = vrot.lane.b32.xlu0 %v351, 16
        %v385 = vpop.permute.xlu0 %384
        %386 = vrot.lane.b32.xlu0 %v350, 16
        %v387 = vpop.permute.xlu0 %386
        %388 = vrot.lane.b32.xlu0 %v352, 16
        %v389 = vpop.permute.xlu0 %388
        %vm390 = vcmp.lt.s32.totalorder %v362, 16
        %v391 = vsel %vm390, %v383, %v387
        %v392 = vsel %vm390, %v385, %v389
        %v393 = vsel %vm390, %v387, %v383
        %v394 = vsel %vm390, %v389, %v385
        %v395 = vlaneseq
        %v396 = vshrl.u32 %v395, 7
        %v397 = vsub.s32 1, %v396
        %v398 = vrot.slane %v335, %v397
        %v399 = vlaneseq
        %v400 = vshrl.u32 %v399, 7
        %v401 = vsub.s32 1, %v400
        %v402 = vrot.slane %v336, %v401
        %v403 = vmul.f32 %v393, %v398
        %v404 = vmul.f32 %v391, %v402
        %v405 = vmul.f32 %v394, %v398
        %v406 = vmul.f32 %v392, %v402
        %v407 = vpack.c.bf16 %v405, %v403
        %v408 = vpack.c.bf16 %v406, %v404
        %409 = vrot.lane.b32.xlu0 %v349, 15
        %v410 = vpop.permute.xlu0 %409
        %411 = vrot.lane.b32.xlu0 %v351, 15
        %v412 = vpop.permute.xlu0 %411
        %413 = vrot.lane.b32.xlu0 %v350, 15
        %v414 = vpop.permute.xlu0 %413
        %415 = vrot.lane.b32.xlu0 %v352, 15
        %v416 = vpop.permute.xlu0 %415
        %vm417 = vcmp.lt.s32.totalorder %v362, 15
        %v418 = vsel %vm417, %v410, %v414
        %v419 = vsel %vm417, %v412, %v416
        %v420 = vsel %vm417, %v414, %v410
        %v421 = vsel %vm417, %v416, %v412
        %v422 = vlaneseq
        %v423 = vshrl.u32 %v422, 7
        %v424 = vsub.s32 2, %v423
        %v425 = vrot.slane %v335, %v424
        %v426 = vlaneseq
        %v427 = vshrl.u32 %v426, 7
        %v428 = vsub.s32 2, %v427
        %v429 = vrot.slane %v336, %v428
        %v430 = vmul.f32 %v420, %v425
        %v431 = vmul.f32 %v418, %v429
        %v432 = vmul.f32 %v421, %v425
        %v433 = vmul.f32 %v419, %v429
        %v434 = vpack.c.bf16 %v432, %v430
        %v435 = vpack.c.bf16 %v433, %v431
        %436 = vrot.lane.b32.xlu0 %v349, 1
        %v437 = vpop.permute.xlu0 %436
        %438 = vrot.lane.b32.xlu0 %v351, 1
        %v439 = vpop.permute.xlu0 %438
        %440 = vrot.lane.b32.xlu0 %v350, 1
        %v441 = vpop.permute.xlu0 %440
        %442 = vrot.lane.b32.xlu0 %v352, 1
        %v443 = vpop.permute.xlu0 %442
        %vm444 = vcmp.lt.s32.totalorder %v362, 1
        %v445 = vsel %vm444, %v437, %v441
        %v446 = vsel %vm444, %v439, %v443
        %v447 = vsel %vm444, %v441, %v437
        %v448 = vsel %vm444, %v443, %v439
        %v449 = vlaneseq
        %v450 = vshrl.u32 %v449, 7
        %v451 = vsub.s32 3, %v450
        %v452 = vrot.slane %v335, %v451
        %v453 = vlaneseq
        %v454 = vshrl.u32 %v453, 7
        %v455 = vsub.s32 3, %v454
        %v456 = vrot.slane %v336, %v455
        %v457 = vmul.f32 %v447, %v452
        %v458 = vmul.f32 %v445, %v456
        %v459 = vmul.f32 %v448, %v452
        %v460 = vmul.f32 %v446, %v456
        %v461 = vpack.c.bf16 %v459, %v457
        %v462 = vpack.c.bf16 %v460, %v458
        %v463 = vpack.c.bf16 %v351, %v349
        %v464 = vpack.c.bf16 %v352, %v350
        %465 = vrot.lane.b32.xlu0 %v349, 127
        %v466 = vpop.permute.xlu0 %465
        %467 = vrot.lane.b32.xlu0 %v351, 127
        %v468 = vpop.permute.xlu0 %467
        %469 = vrot.lane.b32.xlu0 %v350, 127
        %v470 = vpop.permute.xlu0 %469
        %471 = vrot.lane.b32.xlu0 %v352, 127
        %v472 = vpop.permute.xlu0 %471
        %vm473 = vcmp.lt.s32.totalorder %v362, 127
        %v474 = vsel %vm473, %v466, %v470
        %v475 = vsel %vm473, %v468, %v472
        %v476 = vsel %vm473, %v470, %v466
        %v477 = vsel %vm473, %v472, %v468
        %v478 = vlaneseq
        %v479 = vshrl.u32 %v478, 7
        %v480 = vsub.s32 5, %v479
        %v481 = vrot.slane %v335, %v480
        %v482 = vlaneseq
        %v483 = vshrl.u32 %v482, 7
        %v484 = vsub.s32 5, %v483
        %v485 = vrot.slane %v336, %v484
        %v486 = vmul.f32 %v474, %v481
        %v487 = vmul.f32 %v476, %v485
        %v488 = vmul.f32 %v475, %v481
        %v489 = vmul.f32 %v477, %v485
        %v490 = vpack.c.bf16 %v488, %v486
        %v491 = vpack.c.bf16 %v489, %v487
        %492 = vrot.lane.b32.xlu0 %v349, 113
        %v493 = vpop.permute.xlu0 %492
        %494 = vrot.lane.b32.xlu0 %v351, 113
        %v495 = vpop.permute.xlu0 %494
        %496 = vrot.lane.b32.xlu0 %v350, 113
        %v497 = vpop.permute.xlu0 %496
        %498 = vrot.lane.b32.xlu0 %v352, 113
        %v499 = vpop.permute.xlu0 %498
        %vm500 = vcmp.lt.s32.totalorder %v362, 113
        %v501 = vsel %vm500, %v493, %v497
        %v502 = vsel %vm500, %v495, %v499
        %v503 = vsel %vm500, %v497, %v493
        %v504 = vsel %vm500, %v499, %v495
        %v505 = vlaneseq
        %v506 = vshrl.u32 %v505, 7
        %v507 = vsub.s32 6, %v506
        %v508 = vrot.slane %v335, %v507
        %v509 = vlaneseq
        %v510 = vshrl.u32 %v509, 7
        %v511 = vsub.s32 6, %v510
        %v512 = vrot.slane %v336, %v511
        %v513 = vmul.f32 %v501, %v508
        %v514 = vmul.f32 %v503, %v512
        %v515 = vmul.f32 %v502, %v508
        %v516 = vmul.f32 %v504, %v512
        %v517 = vpack.c.bf16 %v515, %v513
        %v518 = vpack.c.bf16 %v516, %v514
        %519 = vrot.lane.b32.xlu0 %v349, 112
        %v520 = vpop.permute.xlu0 %519
        %521 = vrot.lane.b32.xlu0 %v351, 112
        %v522 = vpop.permute.xlu0 %521
        %523 = vrot.lane.b32.xlu0 %v350, 112
        %v524 = vpop.permute.xlu0 %523
        %525 = vrot.lane.b32.xlu0 %v352, 112
        %v526 = vpop.permute.xlu0 %525
        %vm527 = vcmp.lt.s32.totalorder %v362, 112
        %v528 = vsel %vm527, %v520, %v524
        %v529 = vsel %vm527, %v522, %v526
        %v530 = vsel %vm527, %v524, %v520
        %v531 = vsel %vm527, %v526, %v522
        %v532 = vlaneseq
        %v533 = vshrl.u32 %v532, 7
        %v534 = vsub.s32 7, %v533
        %v535 = vrot.slane %v335, %v534
        %v536 = vlaneseq
        %v537 = vshrl.u32 %v536, 7
        %v538 = vsub.s32 7, %v537
        %v539 = vrot.slane %v336, %v538
        %v540 = vmul.f32 %v528, %v535
        %v541 = vmul.f32 %v530, %v539
        %v542 = vmul.f32 %v529, %v535
        %v543 = vmul.f32 %v531, %v539
        %v544 = vpack.c.bf16 %v542, %v540
        %v545 = vpack.c.bf16 %v543, %v541
        %546 = vrot.lane.b32.xlu0 %v349, 111
        %v547 = vpop.permute.xlu0 %546
        %548 = vrot.lane.b32.xlu0 %v351, 111
        %v549 = vpop.permute.xlu0 %548
        %550 = vrot.lane.b32.xlu0 %v350, 111
        %v551 = vpop.permute.xlu0 %550
        %552 = vrot.lane.b32.xlu0 %v352, 111
        %v553 = vpop.permute.xlu0 %552
        %vm554 = vcmp.lt.s32.totalorder %v362, 111
        %v555 = vsel %vm554, %v547, %v551
        %v556 = vsel %vm554, %v549, %v553
        %v557 = vsel %vm554, %v551, %v547
        %v558 = vsel %vm554, %v553, %v549
        %v559 = vlaneseq
        %v560 = vshrl.u32 %v559, 7
        %v561 = vsub.s32 0, %v560
        %v562 = vrot.slane %v337, %v561
        %v563 = vlaneseq
        %v564 = vshrl.u32 %v563, 7
        %v565 = vsub.s32 0, %v564
        %v566 = vrot.slane %v338, %v565
        %v567 = vmul.f32 %v555, %v562
        %v568 = vmul.f32 %v557, %v566
        %v569 = vmul.f32 %v556, %v562
        %v570 = vmul.f32 %v558, %v566
        %v571 = vpack.c.bf16 %v569, %v567
        %v572 = vpack.c.bf16 %v570, %v568
        %v575 = vunpack.c.l.b16 %v339
        %v576 = vunpack.c.h.b16 %v339
        %v577 = vunpack.c.l.b16 %v340
        %v578 = vunpack.c.h.b16 %v340
        %v579 = vpack.c.b16 %v577, %v575
        %v580 = vpack.c.b16 %v578, %v576
        %vm582 = vcmask 130048
        %v584 = vsel %vm582, %v580, 0
        %586 = vmatprep.subr.bf16.mxu0 %v381
        %587 = vmatpush1.bf16.msra.mxu0 %v380
        %588 = vmatprep.subr.bf16.mxu0 %v408
        %589 = vmatpush1.bf16.msra.mxu0 %v407
        %590 = vmatprep.subr.bf16.mxu0 %v435
        %591 = vmatpush1.bf16.msra.mxu0 %v434
        %592 = vmatprep.subr.bf16.mxu0 %v462
        %593 = vmatpush1.bf16.msra.mxu0 %v461
        %594 = vmatprep.subr.bf16.mxu0 %v464
        %595 = vmatpush1.bf16.msra.mxu0 %v463
        %596 = vmatprep.subr.bf16.mxu0 %v491
        %597 = vmatpush1.bf16.msra.mxu0 %v490
        %598 = vmatprep.subr.bf16.mxu0 %v518
        %599 = vmatpush1.bf16.msra.mxu0 %v517
        %600 = vmatprep.subr.bf16.mxu0 %v545
        %601 = vmatpush1.bf16.msra.mxu0 %v544
        %602 = vmatprep.subr.bf16.mxu0 %v572
        %603 = vmatpush1.bf16.msra.mxu0 %v571
        %604 = vmatprep.subr.bf16.mxu0 0
        %605 = vmatpush1.bf16.msra.mxu0 0
        %606 = vmatprep.subr.bf16.mxu0 0
        %607 = vmatpush1.bf16.msra.mxu0 0
        %608 = vmatprep.subr.bf16.mxu0 0
        %609 = vmatpush1.bf16.msra.mxu0 0
        %610 = vmatprep.subr.bf16.mxu0 0
        %611 = vmatpush1.bf16.msra.mxu0 0
        %612 = vmatprep.subr.bf16.mxu0 0
        %613 = vmatpush1.bf16.msra.mxu0 0
        %614 = vmatprep.subr.bf16.mxu0 0
        %615 = vmatpush1.bf16.msra.mxu0 0
        %616 = vmatprep.subr.bf16.mxu0 0
        %617 = vmatpush1.bf16.msra.mxu0 0
        %618 = vmatprep.mubr.bf16.mxu0 %v584
        %619 = vmatmul.mubr.bf16.gmra.mrb[0].mxu0 %v579
        %v620 = vpop.f32.mrb[0].mxu0
        %v621 = vadd.f32 0.0, %v620
        %v622 = vpop.f32.mrb[0].mxu0
        %v623 = vadd.f32 0.0, %v622
        %v624 = vpop.f32.mrb[0].mxu0
        %v625 = vadd.f32 0.0, %v624
        %v626 = vpop.f32.mrb[0].mxu0
        %v627 = vadd.f32 0.0, %v626
        %628 = vdwg.mxu0
        %v629 = vadd.f32 %v621, %v625
        %v630 = vrot.slane %v629, 4
        %v631 = vadd.f32 %v629, %v630
        %v632 = vrot.slane %v631, 2
        %v633 = vadd.f32 %v631, %v632
        %v634 = vrot.slane %v633, 1
        %v635 = vadd.f32 %v633, %v634
        %v636 = vadd.f32 %v623, %v627
        %v637 = vrot.slane %v636, 4
        %v638 = vadd.f32 %v636, %v637
        %v639 = vrot.slane %v638, 2
        %v640 = vadd.f32 %v638, %v639
        %v641 = vrot.slane %v640, 1
        %v642 = vadd.f32 %v640, %v641
        %v643 = vmul.f32 %v621, %v621
        %v644 = vmul.f32 %v623, %v623
        %v645 = vmul.f32 %v625, %v625
        %v646 = vmul.f32 %v627, %v627
        %v647 = vadd.f32 %v643, %v645
        %v648 = vrot.slane %v647, 4
        %v649 = vadd.f32 %v647, %v648
        %v650 = vrot.slane %v649, 2
        %v651 = vadd.f32 %v649, %v650
        %v652 = vrot.slane %v651, 1
        %v653 = vadd.f32 %v651, %v652
        %v654 = vadd.f32 %v644, %v646
        %v655 = vrot.slane %v654, 4
        %v656 = vadd.f32 %v654, %v655
        %v657 = vrot.slane %v656, 2
        %v658 = vadd.f32 %v656, %v657
        %v659 = vrot.slane %v658, 1
        %v660 = vadd.f32 %v658, %v659
        %vm661 = vcmask 1040384
        %v662 = vsel %vm661, %v635, 0.0
        %v663 = vsel %vm661, %v642, 0.0
        %v664 = vadd.f32 %v662, %v663
        %665 = vadd.xlane.f32.xlu0 %v664
        %v666 = vpop.xlane.xlu0 %665
        %v667 = vrot.slane %v666, 4
        %v668 = vadd.f32 %v666, %v667
        %v669 = vrot.slane %v668, 2
        %v670 = vadd.f32 %v668, %v669
        %v671 = vrot.slane %v670, 1
        %v672 = vadd.f32 %v670, %v671
        %s673 = vtos %v672
        %v674 = vsel %vm661, %v653, 0.0
        %v675 = vsel %vm661, %v660, 0.0
        %v676 = vadd.f32 %v674, %v675
        %677 = vadd.xlane.f32.xlu0 %v676
        %v678 = vpop.xlane.xlu0 %677
        %v679 = vrot.slane %v678, 4
        %v680 = vadd.f32 %v678, %v679
        %v681 = vrot.slane %v680, 2
        %v682 = vadd.f32 %v680, %v681
        %v683 = vrot.slane %v682, 1
        %v684 = vadd.f32 %v682, %v683
        %s685 = vtos %v684
        %s686 = smul.f32 %s673, 0.00048828125
        %s687 = smul.f32 %s685, 0.00048828125
        %s688 = smul.f32 %s686, %s686
        %s689 = ssub.f32 %s687, %s688
        %s690 = sadd.f32 %s689, 1e-05
        %v691 = vstv %s690
        %v692 = vrsqrt.pop %v691
        %s693 = vtos %v692
        %s694 = smul.f32 %s686, %s693
        %v695 = vstv %s693
        %v696 = vmul.f32 %v621, %v695
        %v697 = vmul.f32 %v623, %v695
        %v698 = vmul.f32 %v625, %v695
        %v699 = vmul.f32 %v627, %v695
        %v700 = vstv %s694
        %v701 = vsub.f32 %v696, %v700
        %v702 = vsub.f32 %v697, %v700
        %v703 = vsub.f32 %v698, %v700
        %v704 = vsub.f32 %v699, %v700
        %706 = vset.pattern.permute.xlu0 0
        %707 = vperm.xlu0 %706, %v343
        %v708 = vpop.permute.xlu0 %707
        %711 = vset.pattern.permute.xlu0 0
        %712 = vperm.xlu0 %711, %v344
        %v713 = vpop.permute.xlu0 %712
        %v715 = vmul.f32 %v701, %v708
        %v716 = vmul.f32 %v702, %v708
        %v717 = vmul.f32 %v703, %v713
        %v718 = vmul.f32 %v704, %v713
        %720 = vset.pattern.permute.xlu0 0
        %721 = vperm.xlu0 %720, %v345
        %v722 = vpop.permute.xlu0 %721
        %725 = vset.pattern.permute.xlu0 0
        %726 = vperm.xlu0 %725, %v346
        %v727 = vpop.permute.xlu0 %726
        %v729 = vadd.f32 %v715, %v722
        %v730 = vadd.f32 %v716, %v722
        %v731 = vadd.f32 %v717, %v727
        %v732 = vadd.f32 %v718, %v727
        %v733 = vmul.f32 %v729, 0.5
        %v734 = vmul.f32 %v730, 0.5
        %v735 = vmul.f32 %v731, 0.5
        %v736 = vmul.f32 %v732, 0.5
        %v737 = vmul.f32 %v729, 0.70710677
        %v738 = vmul.f32 %v730, 0.70710677
        %v739 = vmul.f32 %v731, 0.70710677
        %v740 = vmul.f32 %v732, 0.70710677
        %v741 = vand.u32 2147483647, %v737
        %v742 = vand.u32 2147483647, %v738
        %v743 = vand.u32 2147483647, %v739
        %v744 = vand.u32 2147483647, %v740
        %v745 = vmul.f32 %v741, 0.3275911
        %v746 = vmul.f32 %v742, 0.3275911
        %v747 = vmul.f32 %v743, 0.3275911
        %v748 = vmul.f32 %v744, 0.3275911
        %v749 = vadd.f32 %v745, 1.0
        %v750 = vadd.f32 %v746, 1.0
        %v751 = vadd.f32 %v747, 1.0
        %v752 = vadd.f32 %v748, 1.0
        %v753 = vrcp.pop %v749
        %v754 = vmul.f32 1.0, %v753
        %v755 = vrcp.pop %v750
        %v756 = vmul.f32 1.0, %v755
        %v757 = vrcp.pop %v751
        %v758 = vmul.f32 1.0, %v757
        %v759 = vrcp.pop %v752
        %v760 = vmul.f32 1.0, %v759
        %v761 = vmul.f32 %v754, 1.0614054
        %v762 = vmul.f32 %v756, 1.0614054
        %v763 = vmul.f32 %v758, 1.0614054
        %v764 = vmul.f32 %v760, 1.0614054
        %v765 = vadd.f32 %v761, -1.4531521
        %v766 = vadd.f32 %v762, -1.4531521
        %v767 = vadd.f32 %v763, -1.4531521
        %v768 = vadd.f32 %v764, -1.4531521
        %v769 = vmul.f32 %v765, %v754
        %v770 = vmul.f32 %v766, %v756
        %v771 = vmul.f32 %v767, %v758
        %v772 = vmul.f32 %v768, %v760
        %v773 = vadd.f32 %v769, 1.4214138
        %v774 = vadd.f32 %v770, 1.4214138
        %v775 = vadd.f32 %v771, 1.4214138
        %v776 = vadd.f32 %v772, 1.4214138
        %v777 = vmul.f32 %v773, %v754
        %v778 = vmul.f32 %v774, %v756
        %v779 = vmul.f32 %v775, %v758
        %v780 = vmul.f32 %v776, %v760
        %v781 = vadd.f32 %v777, -0.28449672
        %v782 = vadd.f32 %v778, -0.28449672
        %v783 = vadd.f32 %v779, -0.28449672
        %v784 = vadd.f32 %v780, -0.28449672
        %v785 = vmul.f32 %v781, %v754
        %v786 = vmul.f32 %v782, %v756
        %v787 = vmul.f32 %v783, %v758
        %v788 = vmul.f32 %v784, %v760
        %v789 = vadd.f32 %v785, 0.2548296
        %v790 = vadd.f32 %v786, 0.2548296
        %v791 = vadd.f32 %v787, 0.2548296
        %v792 = vadd.f32 %v788, 0.2548296
        %v793 = vmul.f32 %v789, %v754
        %v794 = vmul.f32 %v790, %v756
        %v795 = vmul.f32 %v791, %v758
        %v796 = vmul.f32 %v792, %v760
        %v797 = vsub.f32 0.0, %v741
        %v798 = vsub.f32 0.0, %v742
        %v799 = vsub.f32 0.0, %v743
        %v800 = vsub.f32 0.0, %v744
        %v801 = vmul.f32 %v797, %v741
        %v802 = vmul.f32 %v798, %v742
        %v803 = vmul.f32 %v799, %v743
        %v804 = vmul.f32 %v800, %v744
        %v805 = vmul.f32 %v801, 1.442695
        %v806 = vpow.pop %v805
        %v807 = vmul.f32 %v802, 1.442695
        %v808 = vpow.pop %v807
        %v809 = vmul.f32 %v803, 1.442695
        %v810 = vpow.pop %v809
        %v811 = vmul.f32 %v804, 1.442695
        %v812 = vpow.pop %v811
        %v813 = vmul.f32 %v793, %v806
        %v814 = vmul.f32 %v794, %v808
        %v815 = vmul.f32 %v795, %v810
        %v816 = vmul.f32 %v796, %v812
        %v817 = vsub.f32 1.0, %v813
        %v818 = vsub.f32 1.0, %v814
        %v819 = vsub.f32 1.0, %v815
        %v820 = vsub.f32 1.0, %v816
        %vm821 = vcmp.ge.f32.partialorder %v737, 0.0
        %vm822 = vcmp.ge.f32.partialorder %v738, 0.0
        %vm823 = vcmp.ge.f32.partialorder %v739, 0.0
        %vm824 = vcmp.ge.f32.partialorder %v740, 0.0
        %v825 = vsub.f32 0.0, %v817
        %v826 = vsub.f32 0.0, %v818
        %v827 = vsub.f32 0.0, %v819
        %v828 = vsub.f32 0.0, %v820
        %v829 = vsel %vm821, %v817, %v825
        %v830 = vsel %vm822, %v818, %v826
        %v831 = vsel %vm823, %v819, %v827
        %v832 = vsel %vm824, %v820, %v828
        %v833 = vadd.f32 %v829, 1.0
        %v834 = vadd.f32 %v830, 1.0
        %v835 = vadd.f32 %v831, 1.0
        %v836 = vadd.f32 %v832, 1.0
        %v837 = vmul.f32 %v733, %v833
        %v838 = vmul.f32 %v734, %v834
        %v839 = vmul.f32 %v735, %v835
        %v840 = vmul.f32 %v736, %v836
        %841 = vrot.lane.b32.xlu0 %v837, 17
        %v842 = vpop.permute.xlu0 %841
        %843 = vrot.lane.b32.xlu0 %v839, 17
        %v844 = vpop.permute.xlu0 %843
        %845 = vrot.lane.b32.xlu0 %v838, 17
        %v846 = vpop.permute.xlu0 %845
        %847 = vrot.lane.b32.xlu0 %v840, 17
        %v848 = vpop.permute.xlu0 %847
        %v849 = vsel %vm363, %v842, %v846
        %v850 = vsel %vm363, %v844, %v848
        %v851 = vsel %vm363, %v846, %v842
        %v852 = vsel %vm363, %v848, %v844
        %v853 = vmul.f32 %v851, %v371
        %v854 = vmul.f32 %v849, %v375
        %v855 = vmul.f32 %v852, %v371
        %v856 = vmul.f32 %v850, %v375
        %v857 = vpack.c.bf16 %v855, %v853
        %v858 = vpack.c.bf16 %v856, %v854
        %859 = vrot.lane.b32.xlu0 %v837, 16
        %v860 = vpop.permute.xlu0 %859
        %861 = vrot.lane.b32.xlu0 %v839, 16
        %v862 = vpop.permute.xlu0 %861
        %863 = vrot.lane.b32.xlu0 %v838, 16
        %v864 = vpop.permute.xlu0 %863
        %865 = vrot.lane.b32.xlu0 %v840, 16
        %v866 = vpop.permute.xlu0 %865
        %v867 = vsel %vm390, %v860, %v864
        %v868 = vsel %vm390, %v862, %v866
        %v869 = vsel %vm390, %v864, %v860
        %v870 = vsel %vm390, %v866, %v862
        %v871 = vmul.f32 %v869, %v398
        %v872 = vmul.f32 %v867, %v402
        %v873 = vmul.f32 %v870, %v398
        %v874 = vmul.f32 %v868, %v402
        %v875 = vpack.c.bf16 %v873, %v871
        %v876 = vpack.c.bf16 %v874, %v872
        %877 = vrot.lane.b32.xlu0 %v837, 15
        %v878 = vpop.permute.xlu0 %877
        %879 = vrot.lane.b32.xlu0 %v839, 15
        %v880 = vpop.permute.xlu0 %879
        %881 = vrot.lane.b32.xlu0 %v838, 15
        %v882 = vpop.permute.xlu0 %881
        %883 = vrot.lane.b32.xlu0 %v840, 15
        %v884 = vpop.permute.xlu0 %883
        %v885 = vsel %vm417, %v878, %v882
        %v886 = vsel %vm417, %v880, %v884
        %v887 = vsel %vm417, %v882, %v878
        %v888 = vsel %vm417, %v884, %v880
        %v889 = vmul.f32 %v887, %v425
        %v890 = vmul.f32 %v885, %v429
        %v891 = vmul.f32 %v888, %v425
        %v892 = vmul.f32 %v886, %v429
        %v893 = vpack.c.bf16 %v891, %v889
        %v894 = vpack.c.bf16 %v892, %v890
        %895 = vrot.lane.b32.xlu0 %v837, 1
        %v896 = vpop.permute.xlu0 %895
        %897 = vrot.lane.b32.xlu0 %v839, 1
        %v898 = vpop.permute.xlu0 %897
        %899 = vrot.lane.b32.xlu0 %v838, 1
        %v900 = vpop.permute.xlu0 %899
        %901 = vrot.lane.b32.xlu0 %v840, 1
        %v902 = vpop.permute.xlu0 %901
        %v903 = vsel %vm444, %v896, %v900
        %v904 = vsel %vm444, %v898, %v902
        %v905 = vsel %vm444, %v900, %v896
        %v906 = vsel %vm444, %v902, %v898
        %v907 = vmul.f32 %v905, %v452
        %v908 = vmul.f32 %v903, %v456
        %v909 = vmul.f32 %v906, %v452
        %v910 = vmul.f32 %v904, %v456
        %v911 = vpack.c.bf16 %v909, %v907
        %v912 = vpack.c.bf16 %v910, %v908
        %v913 = vpack.c.bf16 %v839, %v837
        %v914 = vpack.c.bf16 %v840, %v838
        %915 = vrot.lane.b32.xlu0 %v837, 127
        %v916 = vpop.permute.xlu0 %915
        %917 = vrot.lane.b32.xlu0 %v839, 127
        %v918 = vpop.permute.xlu0 %917
        %919 = vrot.lane.b32.xlu0 %v838, 127
        %v920 = vpop.permute.xlu0 %919
        %921 = vrot.lane.b32.xlu0 %v840, 127
        %v922 = vpop.permute.xlu0 %921
        %v923 = vsel %vm473, %v916, %v920
        %v924 = vsel %vm473, %v918, %v922
        %v925 = vsel %vm473, %v920, %v916
        %v926 = vsel %vm473, %v922, %v918
        %v927 = vmul.f32 %v923, %v481
        %v928 = vmul.f32 %v925, %v485
        %v929 = vmul.f32 %v924, %v481
        %v930 = vmul.f32 %v926, %v485
        %v931 = vpack.c.bf16 %v929, %v927
        %v932 = vpack.c.bf16 %v930, %v928
        %933 = vrot.lane.b32.xlu0 %v837, 113
        %v934 = vpop.permute.xlu0 %933
        %935 = vrot.lane.b32.xlu0 %v839, 113
        %v936 = vpop.permute.xlu0 %935
        %937 = vrot.lane.b32.xlu0 %v838, 113
        %v938 = vpop.permute.xlu0 %937
        %939 = vrot.lane.b32.xlu0 %v840, 113
        %v940 = vpop.permute.xlu0 %939
        %v941 = vsel %vm500, %v934, %v938
        %v942 = vsel %vm500, %v936, %v940
        %v943 = vsel %vm500, %v938, %v934
        %v944 = vsel %vm500, %v940, %v936
        %v945 = vmul.f32 %v941, %v508
        %v946 = vmul.f32 %v943, %v512
        %v947 = vmul.f32 %v942, %v508
        %v948 = vmul.f32 %v944, %v512
        %v949 = vpack.c.bf16 %v947, %v945
        %v950 = vpack.c.bf16 %v948, %v946
        %951 = vrot.lane.b32.xlu0 %v837, 112
        %v952 = vpop.permute.xlu0 %951
        %953 = vrot.lane.b32.xlu0 %v839, 112
        %v954 = vpop.permute.xlu0 %953
        %955 = vrot.lane.b32.xlu0 %v838, 112
        %v956 = vpop.permute.xlu0 %955
        %957 = vrot.lane.b32.xlu0 %v840, 112
        %v958 = vpop.permute.xlu0 %957
        %v959 = vsel %vm527, %v952, %v956
        %v960 = vsel %vm527, %v954, %v958
        %v961 = vsel %vm527, %v956, %v952
        %v962 = vsel %vm527, %v958, %v954
        %v963 = vmul.f32 %v959, %v535
        %v964 = vmul.f32 %v961, %v539
        %v965 = vmul.f32 %v960, %v535
        %v966 = vmul.f32 %v962, %v539
        %v967 = vpack.c.bf16 %v965, %v963
        %v968 = vpack.c.bf16 %v966, %v964
        %969 = vrot.lane.b32.xlu0 %v837, 111
        %v970 = vpop.permute.xlu0 %969
        %971 = vrot.lane.b32.xlu0 %v839, 111
        %v972 = vpop.permute.xlu0 %971
        %973 = vrot.lane.b32.xlu0 %v838, 111
        %v974 = vpop.permute.xlu0 %973
        %975 = vrot.lane.b32.xlu0 %v840, 111
        %v976 = vpop.permute.xlu0 %975
        %v977 = vsel %vm554, %v970, %v974
        %v978 = vsel %vm554, %v972, %v976
        %v979 = vsel %vm554, %v974, %v970
        %v980 = vsel %vm554, %v976, %v972
        %v981 = vmul.f32 %v977, %v562
        %v982 = vmul.f32 %v979, %v566
        %v983 = vmul.f32 %v978, %v562
        %v984 = vmul.f32 %v980, %v566
        %v985 = vpack.c.bf16 %v983, %v981
        %v986 = vpack.c.bf16 %v984, %v982
        %v989 = vunpack.c.l.b16 %v341
        %v990 = vunpack.c.h.b16 %v341
        %v991 = vunpack.c.l.b16 %v342
        %v992 = vunpack.c.h.b16 %v342
        %v993 = vpack.c.b16 %v991, %v989
        %v994 = vpack.c.b16 %v992, %v990
        %v997 = vsel %vm582, %v994, 0
        %999 = vmatprep.subr.bf16.mxu0 %v858
        %1000 = vmatpush1.bf16.msra.mxu0 %v857
        %1001 = vmatprep.subr.bf16.mxu0 %v876
        %1002 = vmatpush1.bf16.msra.mxu0 %v875
        %1003 = vmatprep.subr.bf16.mxu0 %v894
        %1004 = vmatpush1.bf16.msra.mxu0 %v893
        %1005 = vmatprep.subr.bf16.mxu0 %v912
        %1006 = vmatpush1.bf16.msra.mxu0 %v911
        %1007 = vmatprep.subr.bf16.mxu0 %v914
        %1008 = vmatpush1.bf16.msra.mxu0 %v913
        %1009 = vmatprep.subr.bf16.mxu0 %v932
        %1010 = vmatpush1.bf16.msra.mxu0 %v931
        %1011 = vmatprep.subr.bf16.mxu0 %v950
        %1012 = vmatpush1.bf16.msra.mxu0 %v949
        %1013 = vmatprep.subr.bf16.mxu0 %v968
        %1014 = vmatpush1.bf16.msra.mxu0 %v967
        %1015 = vmatprep.subr.bf16.mxu0 %v986
        %1016 = vmatpush1.bf16.msra.mxu0 %v985
        %1017 = vmatprep.subr.bf16.mxu0 0
        %1018 = vmatpush1.bf16.msra.mxu0 0
        %1019 = vmatprep.subr.bf16.mxu0 0
        %1020 = vmatpush1.bf16.msra.mxu0 0
        %1021 = vmatprep.subr.bf16.mxu0 0
        %1022 = vmatpush1.bf16.msra.mxu0 0
        %1023 = vmatprep.subr.bf16.mxu0 0
        %1024 = vmatpush1.bf16.msra.mxu0 0
        %1025 = vmatprep.subr.bf16.mxu0 0
        %1026 = vmatpush1.bf16.msra.mxu0 0
        %1027 = vmatprep.subr.bf16.mxu0 0
        %1028 = vmatpush1.bf16.msra.mxu0 0
        %1029 = vmatprep.subr.bf16.mxu0 0
        %1030 = vmatpush1.bf16.msra.mxu0 0
        %1031 = vmatprep.mubr.bf16.mxu0 %v997
        %1032 = vmatmul.mubr.bf16.gmra.mrb[0].mxu0 %v993
        %v1033 = vpop.f32.mrb[0].mxu0
        %v1034 = vadd.f32 0.0, %v1033
        %v1035 = vpop.f32.mrb[0].mxu0
        %v1036 = vadd.f32 0.0, %v1035
        %v1037 = vpop.f32.mrb[0].mxu0
        %v1038 = vadd.f32 0.0, %v1037
        %v1039 = vpop.f32.mrb[0].mxu0
        %v1040 = vadd.f32 0.0, %v1039
        %1041 = vdwg.mxu0
        %v1042 = vadd.f32 %v1034, %v1038
        %v1043 = vrot.slane %v1042, 4
        %v1044 = vadd.f32 %v1042, %v1043
        %v1045 = vrot.slane %v1044, 2
        %v1046 = vadd.f32 %v1044, %v1045
        %v1047 = vrot.slane %v1046, 1
        %v1048 = vadd.f32 %v1046, %v1047
        %v1049 = vadd.f32 %v1036, %v1040
        %v1050 = vrot.slane %v1049, 4
        %v1051 = vadd.f32 %v1049, %v1050
        %v1052 = vrot.slane %v1051, 2
        %v1053 = vadd.f32 %v1051, %v1052
        %v1054 = vrot.slane %v1053, 1
        %v1055 = vadd.f32 %v1053, %v1054
        %v1056 = vmul.f32 %v1034, %v1034
        %v1057 = vmul.f32 %v1036, %v1036
        %v1058 = vmul.f32 %v1038, %v1038
        %v1059 = vmul.f32 %v1040, %v1040
        %v1060 = vadd.f32 %v1056, %v1058
        %v1061 = vrot.slane %v1060, 4
        %v1062 = vadd.f32 %v1060, %v1061
        %v1063 = vrot.slane %v1062, 2
        %v1064 = vadd.f32 %v1062, %v1063
        %v1065 = vrot.slane %v1064, 1
        %v1066 = vadd.f32 %v1064, %v1065
        %v1067 = vadd.f32 %v1057, %v1059
        %v1068 = vrot.slane %v1067, 4
        %v1069 = vadd.f32 %v1067, %v1068
        %v1070 = vrot.slane %v1069, 2
        %v1071 = vadd.f32 %v1069, %v1070
        %v1072 = vrot.slane %v1071, 1
        %v1073 = vadd.f32 %v1071, %v1072
        %v1074 = vsel %vm661, %v1048, 0.0
        %v1075 = vsel %vm661, %v1055, 0.0
        %v1076 = vadd.f32 %v1074, %v1075
        %1077 = vadd.xlane.f32.xlu0 %v1076
        %v1078 = vpop.xlane.xlu0 %1077
        %v1079 = vrot.slane %v1078, 4
        %v1080 = vadd.f32 %v1078, %v1079
        %v1081 = vrot.slane %v1080, 2
        %v1082 = vadd.f32 %v1080, %v1081
        %v1083 = vrot.slane %v1082, 1
        %v1084 = vadd.f32 %v1082, %v1083
        %s1085 = vtos %v1084
        %v1086 = vsel %vm661, %v1066, 0.0
        %v1087 = vsel %vm661, %v1073, 0.0
        %v1088 = vadd.f32 %v1086, %v1087
        %1089 = vadd.xlane.f32.xlu0 %v1088
        %v1090 = vpop.xlane.xlu0 %1089
        %v1091 = vrot.slane %v1090, 4
        %v1092 = vadd.f32 %v1090, %v1091
        %v1093 = vrot.slane %v1092, 2
        %v1094 = vadd.f32 %v1092, %v1093
        %v1095 = vrot.slane %v1094, 1
        %v1096 = vadd.f32 %v1094, %v1095
        %s1097 = vtos %v1096
        %s1098 = smul.f32 %s1085, 0.00048828125
        %s1099 = smul.f32 %s1097, 0.00048828125
        %s1100 = smul.f32 %s1098, %s1098
        %s1101 = ssub.f32 %s1099, %s1100
        %s1102 = sadd.f32 %s1101, 1e-05
        %v1103 = vstv %s1102
        %v1104 = vrsqrt.pop %v1103
        %s1105 = vtos %v1104
        %s1106 = smul.f32 %s1098, %s1105
        %v1107 = vstv %s1105
        %v1108 = vmul.f32 %v1034, %v1107
        %v1109 = vmul.f32 %v1036, %v1107
        %v1110 = vstv %s1106
        %v1111 = vsub.f32 %v1108, %v1110
        %v1112 = vsub.f32 %v1109, %v1110
        %1114 = vset.pattern.permute.xlu0 0
        %1115 = vperm.xlu0 %1114, %v347
        %v1116 = vpop.permute.xlu0 %1115
        %v1118 = vmul.f32 %v1111, %v1116
        %v1119 = vmul.f32 %v1112, %v1116
        %1121 = vset.pattern.permute.xlu0 0
        %1122 = vperm.xlu0 %1121, %v348
        %v1123 = vpop.permute.xlu0 %1122
        %v1125 = vadd.f32 %v1118, %v1123
        %v1126 = vadd.f32 %v1119, %v1123
        %1127 = vst [vmem:[%s328] sm:$0xff] %v1125
        %1128 = vst [vmem:[%s328 + $0x8] sm:$0xff] %v1126
        %s1129 = sand.u32 %s205, 1
        %s1130 = scalar_lea.sflag [#allocation4], %s1129
        %s1131 = sand.u32 %s205, 1
        %s1132 = smul.addr %s1131, 16
        %s1133 = scalar_lea.vmem [#allocation7], %s1132
        // Predicated region
        $region61: #{tpu_custom_call.1} parent=51 // pred_check
          %p1134 = pneg %p215
        $region62: #{tpu_custom_call.1} parent=51 // pred_check_branch
          %1136 = sbr.rel (%p1134) target = $region64
        $region63: #{tpu_custom_call.1} parent=51 // pred_region
          %s1138 = ssub.s32 256, 256
          %1139 = vsyncadd %s1130, %s1138
          %s1140 = smul.addr %s24, 2
          %s1141 = smul.addr %s1140, 128
          %s1142 = scalar_lea.hbm %s8, %s1141
          %s1144 = sshll.u32 %s1133, 4
          %s1145 = int_to_ptr.vmem [resolvable:$true] %s1144
          %1147 = dma.vmem_to_hbm [thread:$0]  %s1145, 256, %s1142, %s1130
        $region64: #{tpu_custom_call.1} parent=51 // pred_fallthru
          _
      $region52: #{tpu_custom_call.1} parent=5 // pred_fallthru
        _
      %p1148 = scmp.le.s32.totalorder 2, %s19
      // Predicated region
      $region65: #{tpu_custom_call.1} parent=5 // pred_check
        %p1149 = pneg %p1148
      $region66: #{tpu_custom_call.1} parent=5 // pred_check_branch
        %1151 = sbr.rel (%p1149) target = $region68
      $region67: #{tpu_custom_call.1} parent=5 // pred_region
        %s1152 = ssub.s32 %s19, 2
        // Predicated region
        $region69: #{tpu_custom_call.1} parent=67 // pred_check
          %p1153 = pneg %p221
        $region70: #{tpu_custom_call.1} parent=67 // pred_check_branch
          %1155 = sbr.rel (%p1153) target = $region72
        $region71: #{tpu_custom_call.1} parent=67 // pred_region
          %s1156 = sand.u32 %s206, 1
          %s1157 = scalar_lea.sflag [#allocation4], %s1156
          %s1158 = sand.u32 %s206, 1
          %s1159 = smul.addr %s1158, 16
          %s1160 = scalar_lea.vmem [#allocation7], %s1159
          %1161 = dma.done %s1157, 256
        $region72: #{tpu_custom_call.1} parent=67 // pred_fallthru
          _
      $region68: #{tpu_custom_call.1} parent=5 // pred_fallthru
        _
    $region6: #{tpu_custom_call.1} parent=1 // loop_footer
      %s23 = sadd.s32 1, %s19
    $region7: #{tpu_custom_call.1} parent=1 // loop_footer_branch
      %18 = sbr.rel target = $region3
    $region8: #{tpu_custom_call.1} parent=1 // loop_exit
      _
    %1162 = vsyncpa [#allocation3], 1
    %s1163 = scalar_lea.sflag [#allocation3], 1
    %1164 = vsyncpa %s1163, 1
    %1165 = vsyncpa [#allocation6], 1
    %1166 = vsyncpa [#allocation4], 1
    %s1167 = scalar_lea.sflag [#allocation4], 1
    %1168 = vsyncpa %s1167, 1

// kernel: tpu_custom_call.1
$region0: #{tpu_custom_call.1}
  #allocation0 [shape = 'u32[]', space=smem, size = 0x4, offset = 0x4, fixed_abs, tag = 'smem constant byte address 0x4 - core index']
  #allocation1 [shape = 'u32[144,128]{1,0:T(1,128)}', space=vmem, size = 0x12000, scoped, tag = 'internal scratch']
  %s0 = inlined_call_operand.vmem [shape: f32[2,16,256], index: 0, kind: input, shape index: {}]
  %s1 = inlined_call_operand.hbm [shape: f32[16,256], index: 1, kind: input, shape index: {}]
  %s2 = inlined_call_operand.hbm [shape: bf16[16,144], index: 2, kind: input, shape index: {}]
  %s3 = inlined_call_operand.vmem [shape: f32[16,1], index: 3, kind: input, shape index: {}]
  %s4 = inlined_call_operand.vmem [shape: f32[16,1], index: 4, kind: input, shape index: {}]
  %s5 = inlined_call_operand.vmem [shape: bf16[16,144], index: 5, kind: input, shape index: {}]
  %s6 = inlined_call_operand.vmem [shape: f32[16,1], index: 6, kind: input, shape index: {}]
  %s7 = inlined_call_operand.vmem [shape: f32[16,1], index: 7, kind: input, shape index: {}]
  %s8 = inlined_call_operand.hbm [shape: f32[2,8,256], index: 8, kind: output, shape index: {}]
  %s9 = sld [smem:[#allocation0]]
  $region73: #{tpu_custom_call.1} parent=0
    _
  %s11 = ssub.s32 1, %s9
  %s12 = scalar_select 0, %s11, %s9
  $region1: #{tpu_custom_call.1} parent=0
    #allocation2 [shape = 'u8[16384]{0}', space=vmem, size = 0x4000, scoped, tag = 'input window, operand 1, single buffered']
    #allocation3 [shape = 's32[2]{0}', space=sflag, size = 0x8, scoped, tag = 'scoped memory for tpu_custom_call.1']
    #allocation4 [shape = 's32[2]{0}', space=sflag, size = 0x8, scoped, tag = 'scoped memory for tpu_custom_call.1']
    #allocation5 [shape = 'u8[8192]{0}', space=vmem, size = 0x2000, scoped, tag = 'input window, operand 2, single buffered']
    #allocation6 [shape = 's32[1]{0}', space=sflag, size = 0x4, scoped, tag = 'scoped memory for tpu_custom_call.1']
    #allocation7 [shape = 'u8[16384]{0}', space=vmem, size = 0x4000, scoped, tag = 'output window, operand 0']
    %13 = vsyncpa [#allocation3], 0
    %14 = vsyncpa [#allocation6], 0
    %15 = vsyncpa [#allocation4], 0
    %s16 = scalar_lea.sflag [#allocation4], 1
    %17 = vsyncpa %s16, 0
    loop: start=0, step=1, limit=4
    $region2: #{tpu_custom_call.1} parent=1 // loop_pre_header
      _
    $region3: #{tpu_custom_call.1} parent=1 // loop_header
      %s19 = sphi 0, %s23
      %p20 = scmp.ge.s32.totalorder %s19, 4
      %s29 = sphi 0, %s31
      %s32 = sphi 0, %s29
      %s33 = sphi 0, %s32
      %s49 = sphi 0, %s33
      %s53 = sphi 0, %s53
      %s55 = sphi 0, %s53
      %s56 = sphi 0, %s55
      %s70 = sphi 0, %s56
      %s74 = sphi 0, %s74
      %s76 = sphi 0, %s74
      %s77 = sphi 0, %s76
      %s91 = sphi 0, %s77
      %s95 = sphi 0, %s95
      %s97 = sphi 0, %s95
      %s98 = sphi 0, %s97
      %s112 = sphi 0, %s98
      %s116 = sphi 0, %s116
      %s118 = sphi 0, %s116
      %s119 = sphi 0, %s118
      %s133 = sphi 0, %s119
      %s137 = sphi 0, %s137
      %s139 = sphi 0, %s137
      %s140 = sphi 0, %s139
      %s154 = sphi 0, %s140
      %s158 = sphi 0, %s158
      %s160 = sphi 0, %s158
      %s161 = sphi 0, %s160
      %s175 = sphi 0, %s161
      %s179 = sphi 0, %s179
      %s181 = sphi 0, %s179
      %s182 = sphi 0, %s181
      %s196 = sphi 0, %s182
      %s202 = sphi 0, %s204
      %s205 = sphi 0, %s202
      %s206 = sphi 0, %s205
      %s222 = sphi 0, %s206
    $region4: #{tpu_custom_call.1} parent=1 // loop_header_branch
      %22 = sbr.rel (%p20) target = $region8
    $region5: #{tpu_custom_call.1} parent=1 // loop_body
      %s24 = ssub.s32 %s19, 1
      %s25 = ssub.s32 %s19, 2
      %s26 = sadd.s32 %s19, 1
      %s27 = ssub.s32 %s19, %s26
      %p28 = scmp.eq.s32.totalorder %s27, 0
      %s30 = sadd.s32 %s29, 1
      %s31 = scalar_select %p28, %s29, %s30
      %p34 = pneg %p28
      %p35 = scmp.eq.s32.totalorder %s19, 1
      %p36 = por %p34, %p35
      %p37 = scmp.ne.s32.totalorder %s29, %s32
      %p38 = scmp.eq.s32.totalorder %s19, 0
      %p39 = por %p37, %p38
      %p40 = scmp.ne.s32.totalorder %s29, %s32
      %p41 = scmp.eq.s32.totalorder %s24, 1
      %p42 = por %p40, %p41
      %p43 = scmp.ne.s32.totalorder %s32, %s33
      %p44 = scmp.eq.s32.totalorder %s24, 0
      %p45 = por %p43, %p44
      %p46 = scmp.ne.s32.totalorder %s32, %s33
      %p47 = scmp.eq.s32.totalorder %s25, 1
      %p48 = por %p46, %p47
      %p50 = scmp.ne.s32.totalorder %s33, %s49
      %p51 = scmp.eq.s32.totalorder %s25, 0
      %p52 = por %p50, %p51
      %s54 = sadd.s32 %s53, 1
      %p57 = scmp.eq.s32.totalorder %s19, 1
      %p58 = scmp.ne.s32.totalorder %s53, %s55
      %p59 = scmp.eq.s32.totalorder %s19, 0
      %p60 = por %p58, %p59
      %p61 = scmp.ne.s32.totalorder %s53, %s55
      %p62 = scmp.eq.s32.totalorder %s24, 1
      %p63 = por %p61, %p62
      %p64 = scmp.ne.s32.totalorder %s55, %s56
      %p65 = scmp.eq.s32.totalorder %s24, 0
      %p66 = por %p64, %p65
      %p67 = scmp.ne.s32.totalorder %s55, %s56
      %p68 = scmp.eq.s32.totalorder %s25, 1
      %p69 = por %p67, %p68
      %p71 = scmp.ne.s32.totalorder %s56, %s70
      %p72 = scmp.eq.s32.totalorder %s25, 0
      %p73 = por %p71, %p72
      %s75 = sadd.s32 %s74, 1
      %p78 = scmp.eq.s32.totalorder %s19, 1
      %p79 = scmp.ne.s32.totalorder %s74, %s76
      %p80 = scmp.eq.s32.totalorder %s19, 0
      %p81 = por %p79, %p80
      %p82 = scmp.ne.s32.totalorder %s74, %s76
      %p83 = scmp.eq.s32.totalorder %s24, 1
      %p84 = por %p82, %p83
      %p85 = scmp.ne.s32.totalorder %s76, %s77
      %p86 = scmp.eq.s32.totalorder %s24, 0
      %p87 = por %p85, %p86
      %p88 = scmp.ne.s32.totalorder %s76, %s77
      %p89 = scmp.eq.s32.totalorder %s25, 1
      %p90 = por %p88, %p89
      %p92 = scmp.ne.s32.totalorder %s77, %s91
      %p93 = scmp.eq.s32.totalorder %s25, 0
      %p94 = por %p92, %p93
      %s96 = sadd.s32 %s95, 1
      %p99 = scmp.eq.s32.totalorder %s19, 1
      %p100 = scmp.ne.s32.totalorder %s95, %s97
      %p101 = scmp.eq.s32.totalorder %s19, 0
      %p102 = por %p100, %p101
      %p103 = scmp.ne.s32.totalorder %s95, %s97
      %p104 = scmp.eq.s32.totalorder %s24, 1
      %p105 = por %p103, %p104
      %p106 = scmp.ne.s32.totalorder %s97, %s98
      %p107 = scmp.eq.s32.totalorder %s24, 0
      %p108 = por %p106, %p107
      %p109 = scmp.ne.s32.totalorder %s97, %s98
      %p110 = scmp.eq.s32.totalorder %s25, 1
      %p111 = por %p109, %p110
      %p113 = scmp.ne.s32.totalorder %s98, %s112
      %p114 = scmp.eq.s32.totalorder %s25, 0
      %p115 = por %p113, %p114
      %s117 = sadd.s32 %s116, 1
      %p120 = scmp.eq.s32.totalorder %s19, 1
      %p121 = scmp.ne.s32.totalorder %s116, %s118
      %p122 = scmp.eq.s32.totalorder %s19, 0
      %p123 = por %p121, %p122
      %p124 = scmp.ne.s32.totalorder %s116, %s118
      %p125 = scmp.eq.s32.totalorder %s24, 1
      %p126 = por %p124, %p125
      %p127 = scmp.ne.s32.totalorder %s118, %s119
      %p128 = scmp.eq.s32.totalorder %s24, 0
      %p129 = por %p127, %p128
      %p130 = scmp.ne.s32.totalorder %s118, %s119
      %p131 = scmp.eq.s32.totalorder %s25, 1
      %p132 = por %p130, %p131
      %p134 = scmp.ne.s32.totalorder %s119, %s133
      %p135 = scmp.eq.s32.totalorder %s25, 0
      %p136 = por %p134, %p135
      %s138 = sadd.s32 %s137, 1
      %p141 = scmp.eq.s32.totalorder %s19, 1
      %p142 = scmp.ne.s32.totalorder %s137, %s139
      %p143 = scmp.eq.s32.totalorder %s19, 0
      %p144 = por %p142, %p143
      %p145 = scmp.ne.s32.totalorder %s137, %s139
      %p146 = scmp.eq.s32.totalorder %s24, 1
      %p147 = por %p145, %p146
      %p148 = scmp.ne.s32.totalorder %s139, %s140
      %p149 = scmp.eq.s32.totalorder %s24, 0
      %p150 = por %p148, %p149
      %p151 = scmp.ne.s32.totalorder %s139, %s140
      %p152 = scmp.eq.s32.totalorder %s25, 1
      %p153 = por %p151, %p152
      %p155 = scmp.ne.s32.totalorder %s140, %s154
      %p156 = scmp.eq.s32.totalorder %s25, 0
      %p157 = por %p155, %p156
      %s159 = sadd.s32 %s158, 1
      %p162 = scmp.eq.s32.totalorder %s19, 1
      %p163 = scmp.ne.s32.totalorder %s158, %s160
      %p164 = scmp.eq.s32.totalorder %s19, 0
      %p165 = por %p163, %p164
      %p166 = scmp.ne.s32.totalorder %s158, %s160
      %p167 = scmp.eq.s32.totalorder %s24, 1
      %p168 = por %p166, %p167
      %p169 = scmp.ne.s32.totalorder %s160, %s161
      %p170 = scmp.eq.s32.totalorder %s24, 0
      %p171 = por %p169, %p170
      %p172 = scmp.ne.s32.totalorder %s160, %s161
      %p173 = scmp.eq.s32.totalorder %s25, 1
      %p174 = por %p172, %p173
      %p176 = scmp.ne.s32.totalorder %s161, %s175
      %p177 = scmp.eq.s32.totalorder %s25, 0
      %p178 = por %p176, %p177
      %s180 = sadd.s32 %s179, 1
      %p183 = scmp.eq.s32.totalorder %s19, 1
      %p184 = scmp.ne.s32.totalorder %s179, %s181
      %p185 = scmp.eq.s32.totalorder %s19, 0
      %p186 = por %p184, %p185
      %p187 = scmp.ne.s32.totalorder %s179, %s181
      %p188 = scmp.eq.s32.totalorder %s24, 1
      %p189 = por %p187, %p188
      %p190 = scmp.ne.s32.totalorder %s181, %s182
      %p191 = scmp.eq.s32.totalorder %s24, 0
      %p192 = por %p190, %p191
      %p193 = scmp.ne.s32.totalorder %s181, %s182
      %p194 = scmp.eq.s32.totalorder %s25, 1
      %p195 = por %p193, %p194
      %p197 = scmp.ne.s32.totalorder %s182, %s196
      %p198 = scmp.eq.s32.totalorder %s25, 0
      %p199 = por %p197, %p198
      %s200 = ssub.s32 %s19, %s26
      %p201 = scmp.eq.s32.totalorder %s200, 0
      %s203 = sadd.s32 %s202, 1
      %s204 = scalar_select %p201, %s202, %s203
      %p207 = pneg %p201
      %p208 = scmp.eq.s32.totalorder %s19, 1
      %p209 = por %p207, %p208
      %p210 = scmp.ne.s32.totalorder %s202, %s205
      %p211 = scmp.eq.s32.totalorder %s19, 0
      %p212 = por %p210, %p211
      %p213 = scmp.ne.s32.totalorder %s202, %s205
      %p214 = scmp.eq.s32.totalorder %s24, 1
      %p215 = por %p213, %p214
      %p216 = scmp.ne.s32.totalorder %s205, %s206
      %p217 = scmp.eq.s32.totalorder %s24, 0
      %p218 = por %p216, %p217
      %p219 = scmp.ne.s32.totalorder %s205, %s206
      %p220 = scmp.eq.s32.totalorder %s25, 1
      %p221 = por %p219, %p220
      %p223 = scmp.ne.s32.totalorder %s206, %s222
      %p224 = scmp.eq.s32.totalorder %s25, 0
      %p225 = por %p223, %p224
      %p226 = scmp.le.s32.totalorder 1, %s19
      %p227 = scmp.lt.s32.totalorder %s19, 3
      %p228 = pnand %p226, %p227
      %p229 = pneg %p228
      // Predicated region
      $region9: #{tpu_custom_call.1} parent=5 // pred_check
        _
      $region10: #{tpu_custom_call.1} parent=5 // pred_check_branch
        %231 = sbr.rel (%p228) target = $region12
      $region11: #{tpu_custom_call.1} parent=5 // pred_region
        %s232 = ssub.s32 %s19, 1
        // Predicated region
        $region13: #{tpu_custom_call.1} parent=11 // pred_check
          %p233 = pneg %p66
        $region14: #{tpu_custom_call.1} parent=11 // pred_check_branch
          %235 = sbr.rel (%p233) target = $region16
        $region15: #{tpu_custom_call.1} parent=11 // pred_region
          %s237 = ssub.s32 512, 512
          %238 = vsyncadd [#allocation3], %s237
          %s239 = sshll.u32 [#allocation2], 4
          %s240 = int_to_ptr.vmem [resolvable:$true] %s239
          %245 = dma.hbm_to_vmem [thread:$0]  %s1, 512, %s240, [#allocation3], 256, 256, 16
        $region16: #{tpu_custom_call.1} parent=11 // pred_fallthru
          _
        // Predicated region
        $region17: #{tpu_custom_call.1} parent=11 // pred_check
          %p246 = pneg %p87
        $region18: #{tpu_custom_call.1} parent=11 // pred_check_branch
          %248 = sbr.rel (%p246) target = $region20
        $region19: #{tpu_custom_call.1} parent=11 // pred_region
          %s250 = ssub.s32 256, 256
          %251 = vsyncadd [#allocation6], %s250
          %s252 = sshll.u32 [#allocation5], 4
          %s253 = int_to_ptr.vmem [resolvable:$true] %s252
          %258 = dma.hbm_to_vmem [thread:$0]  %s2, 256, %s253, [#allocation6], 128, 128, 8
        $region20: #{tpu_custom_call.1} parent=11 // pred_fallthru
          _
        // Predicated region
        $region21: #{tpu_custom_call.1} parent=11 // pred_check
          %p259 = pneg %p108
        $region22: #{tpu_custom_call.1} parent=11 // pred_check_branch
          %261 = sbr.rel (%p259) target = $region24
        $region23: #{tpu_custom_call.1} parent=11 // pred_region
          _
        $region24: #{tpu_custom_call.1} parent=11 // pred_fallthru
          _
        // Predicated region
        $region25: #{tpu_custom_call.1} parent=11 // pred_check
          %p262 = pneg %p129
        $region26: #{tpu_custom_call.1} parent=11 // pred_check_branch
          %264 = sbr.rel (%p262) target = $region28
        $region27: #{tpu_custom_call.1} parent=11 // pred_region
          _
        $region28: #{tpu_custom_call.1} parent=11 // pred_fallthru
          _
        // Predicated region
        $region29: #{tpu_custom_call.1} parent=11 // pred_check
          %p265 = pneg %p150
        $region30: #{tpu_custom_call.1} parent=11 // pred_check_branch
          %267 = sbr.rel (%p265) target = $region32
        $region31: #{tpu_custom_call.1} parent=11 // pred_region
          _
        $region32: #{tpu_custom_call.1} parent=11 // pred_fallthru
          _
        // Predicated region
        $region33: #{tpu_custom_call.1} parent=11 // pred_check
          %p268 = pneg %p171
        $region34: #{tpu_custom_call.1} parent=11 // pred_check_branch
          %270 = sbr.rel (%p268) target = $region36
        $region35: #{tpu_custom_call.1} parent=11 // pred_region
          _
        $region36: #{tpu_custom_call.1} parent=11 // pred_fallthru
          _
        // Predicated region
        $region37: #{tpu_custom_call.1} parent=11 // pred_check
          %p271 = pneg %p192
        $region38: #{tpu_custom_call.1} parent=11 // pred_check_branch
          %273 = sbr.rel (%p271) target = $region40
        $region39: #{tpu_custom_call.1} parent=11 // pred_region
          _
        $region40: #{tpu_custom_call.1} parent=11 // pred_fallthru
          _
      $region12: #{tpu_custom_call.1} parent=5 // pred_fallthru
        _
      %p274 = scmp.lt.s32.totalorder %s19, 2
      // Predicated region
      $region41: #{tpu_custom_call.1} parent=5 // pred_check
        %p275 = pneg %p274
      $region42: #{tpu_custom_call.1} parent=5 // pred_check_branch
        %277 = sbr.rel (%p275) target = $region44
      $region43: #{tpu_custom_call.1} parent=5 // pred_region
        // Predicated region
        $region45: #{tpu_custom_call.1} parent=43 // pred_check
          %p278 = pneg %p39
        $region46: #{tpu_custom_call.1} parent=43 // pred_check_branch
          %280 = sbr.rel (%p278) target = $region48
        $region47: #{tpu_custom_call.1} parent=43 // pred_region
          %p281 = scmp.lt.s32.totalorder %s19, 1
          %s282 = scalar_select %p281, %s19, 1
          %s283 = smul.addr %s282, 4
          %s284 = smul.addr %s283, 8
          %s285 = scalar_lea.vmem %s0, %s284
        $region48: #{tpu_custom_call.1} parent=43 // pred_fallthru
          _
      $region44: #{tpu_custom_call.1} parent=5 // pred_fallthru
        _
      %p286 = scmp.le.s32.totalorder 1, %s19
      %p287 = scmp.lt.s32.totalorder %s19, 3
      %p288 = pnand %p286, %p287
      %p289 = pneg %p288
      // Predicated region
      $region49: #{tpu_custom_call.1} parent=5 // pred_check
        _
      $region50: #{tpu_custom_call.1} parent=5 // pred_check_branch
        %291 = sbr.rel (%p288) target = $region52
      $region51: #{tpu_custom_call.1} parent=5 // pred_region
        %s292 = ssub.s32 %s19, 1
        // Predicated region
        $region53: #{tpu_custom_call.1} parent=51 // pred_check
          %p293 = pneg %p66
        $region54: #{tpu_custom_call.1} parent=51 // pred_check_branch
          %295 = sbr.rel (%p293) target = $region56
        $region55: #{tpu_custom_call.1} parent=51 // pred_region
          %296 = dma.done [#allocation3], 512
        $region56: #{tpu_custom_call.1} parent=51 // pred_fallthru
          _
        // Predicated region
        $region57: #{tpu_custom_call.1} parent=51 // pred_check
          %p297 = pneg %p87
        $region58: #{tpu_custom_call.1} parent=51 // pred_check_branch
          %299 = sbr.rel (%p297) target = $region60
        $region59: #{tpu_custom_call.1} parent=51 // pred_region
          %300 = dma.done [#allocation6], 256
        $region60: #{tpu_custom_call.1} parent=51 // pred_fallthru
          _
        %p301 = scmp.lt.s32.totalorder %s24, 1
        %s302 = scalar_select %p301, %s24, 1
        %s303 = smul.addr %s302, 4
        %s304 = smul.addr %s303, 8
        %s305 = scalar_lea.vmem %s0, %s304
        %p306 = pneg %p45
        %p307 = pneg %p42
        %p308 = pneg %p66
        %p309 = pneg %p63
        %p310 = pneg %p87
        %p311 = pneg %p84
        %p312 = pneg %p108
        %p313 = pneg %p105
        %p314 = pneg %p129
        %p315 = pneg %p126
        %p316 = pneg %p150
        %p317 = pneg %p147
        %p318 = pneg %p171
        %p319 = pneg %p168
        %p320 = pneg %p192
        %p321 = pneg %p189
        %p322 = pneg %p218
        %p323 = pneg %p215
        %s324 = sand.u32 %s205, 1
        %s325 = scalar_lea.sflag [#allocation4], %s324
        %s326 = sand.u32 %s205, 1
        %s327 = smul.addr %s326, 16
        %s328 = scalar_lea.vmem [#allocation7], %s327
        %p329 = scmp.lt.s32.totalorder %s24, 1
        %s330 = scalar_select %p329, %s24, 1
        %s331 = smul.addr %s330, 4
        %s332 = smul.addr %s331, 8
        %s333 = scalar_lea.vmem %s0, %s332
        %v335 = vld [vmem:[#allocation2] sm:$0xff]
        %v336 = vld [vmem:[#allocation2 + $0x8] sm:$0xff]
        %v337 = vld [vmem:[#allocation2 + $0x10] sm:$0xff]
        %v338 = vld [vmem:[#allocation2 + $0x18] sm:$0xff]
        %v339 = vld [vmem:[#allocation5] sm:$0xff]
        %v340 = vld [vmem:[#allocation5 + $0x8] sm:$0xff]
        %v341 = vld [vmem:[%s5] sm:$0xff]
        %v342 = vld [vmem:[%s5 + $0x8] sm:$0xff]
        %v343 = vld [vmem:[%s3] sm:$0xff]
        %v344 = vld [vmem:[%s3 + $0x8] sm:$0xff]
        %v345 = vld [vmem:[%s4] sm:$0xff]
        %v346 = vld [vmem:[%s4 + $0x8] sm:$0xff]
        %v347 = vld [vmem:[%s6] sm:$0xff]
        %v348 = vld [vmem:[%s7] sm:$0xff]
        %v349 = vld [vmem:[%s333] sm:$0xff]
        %v350 = vld [vmem:[%s333 + $0x8] sm:$0xff]
        %v351 = vld [vmem:[%s333 + $0x10] sm:$0xff]
        %v352 = vld [vmem:[%s333 + $0x18] sm:$0xff]
        %353 = vrot.lane.b32.xlu0 %v349, 17
        %v354 = vpop.permute.xlu0 %353
        %355 = vrot.lane.b32.xlu0 %v351, 17
        %v356 = vpop.permute.xlu0 %355
        %357 = vrot.lane.b32.xlu0 %v350, 17
        %v358 = vpop.permute.xlu0 %357
        %359 = vrot.lane.b32.xlu0 %v352, 17
        %v360 = vpop.permute.xlu0 %359
        %v361 = vlaneseq
        %v362 = vand.u32 %v361, 127
        %vm363 = vcmp.lt.s32.totalorder %v362, 17
        %v364 = vsel %vm363, %v354, %v358
        %v365 = vsel %vm363, %v356, %v360
        %v366 = vsel %vm363, %v358, %v354
        %v367 = vsel %vm363, %v360, %v356
        %v368 = vlaneseq
        %v369 = vshrl.u32 %v368, 7
        %v370 = vsub.s32 0, %v369
        %v371 = vrot.slane %v335, %v370
        %v372 = vlaneseq
        %v373 = vshrl.u32 %v372, 7
        %v374 = vsub.s32 0, %v373
        %v375 = vrot.slane %v336, %v374
        %v376 = vmul.f32 %v366, %v371
        %v377 = vmul.f32 %v364, %v375
        %v378 = vmul.f32 %v367, %v371
        %v379 = vmul.f32 %v365, %v375
        %v380 = vpack.c.bf16 %v378, %v376
        %v381 = vpack.c.bf16 %v379, %v377
        %382 = vrot.lane.b32.xlu0 %v349, 16
        %v383 = vpop.permute.xlu0 %382
        %384 = vrot.lane.b32.xlu0 %v351, 16
        %v385 = vpop.permute.xlu0 %384
        %386 = vrot.lane.b32.xlu0 %v350, 16
        %v387 = vpop.permute.xlu0 %386
        %388 = vrot.lane.b32.xlu0 %v352, 16
        %v389 = vpop.permute.xlu0 %388
        %vm390 = vcmp.lt.s32.totalorder %v362, 16
        %v391 = vsel %vm390, %v383, %v387
        %v392 = vsel %vm390, %v385, %v389
        %v393 = vsel %vm390, %v387, %v383
        %v394 = vsel %vm390, %v389, %v385
        %v395 = vlaneseq
        %v396 = vshrl.u32 %v395, 7
        %v397 = vsub.s32 1, %v396
        %v398 = vrot.slane %v335, %v397
        %v399 = vlaneseq
        %v400 = vshrl.u32 %v399, 7
        %v401 = vsub.s32 1, %v400
        %v402 = vrot.slane %v336, %v401
        %v403 = vmul.f32 %v393, %v398
        %v404 = vmul.f32 %v391, %v402
        %v405 = vmul.f32 %v394, %v398
        %v406 = vmul.f32 %v392, %v402
        %v407 = vpack.c.bf16 %v405, %v403
        %v408 = vpack.c.bf16 %v406, %v404
        %409 = vrot.lane.b32.xlu0 %v349, 15
        %v410 = vpop.permute.xlu0 %409
        %411 = vrot.lane.b32.xlu0 %v351, 15
        %v412 = vpop.permute.xlu0 %411
        %413 = vrot.lane.b32.xlu0 %v350, 15
        %v414 = vpop.permute.xlu0 %413
        %415 = vrot.lane.b32.xlu0 %v352, 15
        %v416 = vpop.permute.xlu0 %415
        %vm417 = vcmp.lt.s32.totalorder %v362, 15
        %v418 = vsel %vm417, %v410, %v414
        %v419 = vsel %vm417, %v412, %v416
        %v420 = vsel %vm417, %v414, %v410
        %v421 = vsel %vm417, %v416, %v412
        %v422 = vlaneseq
        %v423 = vshrl.u32 %v422, 7
        %v424 = vsub.s32 2, %v423
        %v425 = vrot.slane %v335, %v424
        %v426 = vlaneseq
        %v427 = vshrl.u32 %v426, 7
        %v428 = vsub.s32 2, %v427
        %v429 = vrot.slane %v336, %v428
        %v430 = vmul.f32 %v420, %v425
        %v431 = vmul.f32 %v418, %v429
        %v432 = vmul.f32 %v421, %v425
        %v433 = vmul.f32 %v419, %v429
        %v434 = vpack.c.bf16 %v432, %v430
        %v435 = vpack.c.bf16 %v433, %v431
        %436 = vrot.lane.b32.xlu0 %v349, 1
        %v437 = vpop.permute.xlu0 %436
        %438 = vrot.lane.b32.xlu0 %v351, 1
        %v439 = vpop.permute.xlu0 %438
        %440 = vrot.lane.b32.xlu0 %v350, 1
        %v441 = vpop.permute.xlu0 %440
        %442 = vrot.lane.b32.xlu0 %v352, 1
        %v443 = vpop.permute.xlu0 %442
        %vm444 = vcmp.lt.s32.totalorder %v362, 1
        %v445 = vsel %vm444, %v437, %v441
        %v446 = vsel %vm444, %v439, %v443
        %v447 = vsel %vm444, %v441, %v437
        %v448 = vsel %vm444, %v443, %v439
        %v449 = vlaneseq
        %v450 = vshrl.u32 %v449, 7
        %v451 = vsub.s32 3, %v450
        %v452 = vrot.slane %v335, %v451
        %v453 = vlaneseq
        %v454 = vshrl.u32 %v453, 7
        %v455 = vsub.s32 3, %v454
        %v456 = vrot.slane %v336, %v455
        %v457 = vmul.f32 %v447, %v452
        %v458 = vmul.f32 %v445, %v456
        %v459 = vmul.f32 %v448, %v452
        %v460 = vmul.f32 %v446, %v456
        %v461 = vpack.c.bf16 %v459, %v457
        %v462 = vpack.c.bf16 %v460, %v458
        %v463 = vpack.c.bf16 %v351, %v349
        %v464 = vpack.c.bf16 %v352, %v350
        %465 = vrot.lane.b32.xlu0 %v349, 127
        %v466 = vpop.permute.xlu0 %465
        %467 = vrot.lane.b32.xlu0 %v351, 127
        %v468 = vpop.permute.xlu0 %467
        %469 = vrot.lane.b32.xlu0 %v350, 127
        %v470 = vpop.permute.xlu0 %469
        %471 = vrot.lane.b32.xlu0 %v352, 127
        %v472 = vpop.permute.xlu0 %471
        %vm473 = vcmp.lt.s32.totalorder %v362, 127
        %v474 = vsel %vm473, %v466, %v470
        %v475 = vsel %vm473, %v468, %v472
        %v476 = vsel %vm473, %v470, %v466
        %v477 = vsel %vm473, %v472, %v468
        %v478 = vlaneseq
        %v479 = vshrl.u32 %v478, 7
        %v480 = vsub.s32 5, %v479
        %v481 = vrot.slane %v335, %v480
        %v482 = vlaneseq
        %v483 = vshrl.u32 %v482, 7
        %v484 = vsub.s32 5, %v483
        %v485 = vrot.slane %v336, %v484
        %v486 = vmul.f32 %v474, %v481
        %v487 = vmul.f32 %v476, %v485
        %v488 = vmul.f32 %v475, %v481
        %v489 = vmul.f32 %v477, %v485
        %v490 = vpack.c.bf16 %v488, %v486
        %v491 = vpack.c.bf16 %v489, %v487
        %492 = vrot.lane.b32.xlu0 %v349, 113
        %v493 = vpop.permute.xlu0 %492
        %494 = vrot.lane.b32.xlu0 %v351, 113
        %v495 = vpop.permute.xlu0 %494
        %496 = vrot.lane.b32.xlu0 %v350, 113
        %v497 = vpop.permute.xlu0 %496
        %498 = vrot.lane.b32.xlu0 %v352, 113
        %v499 = vpop.permute.xlu0 %498
        %vm500 = vcmp.lt.s32.totalorder %v362, 113
        %v501 = vsel %vm500, %v493, %v497
        %v502 = vsel %vm500, %v495, %v499
        %v503 = vsel %vm500, %v497, %v493
        %v504 = vsel %vm500, %v499, %v495
        %v505 = vlaneseq
        %v506 = vshrl.u32 %v505, 7
        %v507 = vsub.s32 6, %v506
        %v508 = vrot.slane %v335, %v507
        %v509 = vlaneseq
        %v510 = vshrl.u32 %v509, 7
        %v511 = vsub.s32 6, %v510
        %v512 = vrot.slane %v336, %v511
        %v513 = vmul.f32 %v501, %v508
        %v514 = vmul.f32 %v503, %v512
        %v515 = vmul.f32 %v502, %v508
        %v516 = vmul.f32 %v504, %v512
        %v517 = vpack.c.bf16 %v515, %v513
        %v518 = vpack.c.bf16 %v516, %v514
        %519 = vrot.lane.b32.xlu0 %v349, 112
        %v520 = vpop.permute.xlu0 %519
        %521 = vrot.lane.b32.xlu0 %v351, 112
        %v522 = vpop.permute.xlu0 %521
        %523 = vrot.lane.b32.xlu0 %v350, 112
        %v524 = vpop.permute.xlu0 %523
        %525 = vrot.lane.b32.xlu0 %v352, 112
        %v526 = vpop.permute.xlu0 %525
        %vm527 = vcmp.lt.s32.totalorder %v362, 112
        %v528 = vsel %vm527, %v520, %v524
        %v529 = vsel %vm527, %v522, %v526
        %v530 = vsel %vm527, %v524, %v520
        %v531 = vsel %vm527, %v526, %v522
        %v532 = vlaneseq
        %v533 = vshrl.u32 %v532, 7
        %v534 = vsub.s32 7, %v533
        %v535 = vrot.slane %v335, %v534
        %v536 = vlaneseq
        %v537 = vshrl.u32 %v536, 7
        %v538 = vsub.s32 7, %v537
        %v539 = vrot.slane %v336, %v538
        %v540 = vmul.f32 %v528, %v535
        %v541 = vmul.f32 %v530, %v539
        %v542 = vmul.f32 %v529, %v535
        %v543 = vmul.f32 %v531, %v539
        %v544 = vpack.c.bf16 %v542, %v540
        %v545 = vpack.c.bf16 %v543, %v541
        %546 = vrot.lane.b32.xlu0 %v349, 111
        %v547 = vpop.permute.xlu0 %546
        %548 = vrot.lane.b32.xlu0 %v351, 111
        %v549 = vpop.permute.xlu0 %548
        %550 = vrot.lane.b32.xlu0 %v350, 111
        %v551 = vpop.permute.xlu0 %550
        %552 = vrot.lane.b32.xlu0 %v352, 111
        %v553 = vpop.permute.xlu0 %552
        %vm554 = vcmp.lt.s32.totalorder %v362, 111
        %v555 = vsel %vm554, %v547, %v551
        %v556 = vsel %vm554, %v549, %v553
        %v557 = vsel %vm554, %v551, %v547
        %v558 = vsel %vm554, %v553, %v549
        %v559 = vlaneseq
        %v560 = vshrl.u32 %v559, 7
        %v561 = vsub.s32 0, %v560
        %v562 = vrot.slane %v337, %v561
        %v563 = vlaneseq
        %v564 = vshrl.u32 %v563, 7
        %v565 = vsub.s32 0, %v564
        %v566 = vrot.slane %v338, %v565
        %v567 = vmul.f32 %v555, %v562
        %v568 = vmul.f32 %v557, %v566
        %v569 = vmul.f32 %v556, %v562
        %v570 = vmul.f32 %v558, %v566
        %v571 = vpack.c.bf16 %v569, %v567
        %v572 = vpack.c.bf16 %v570, %v568
        %v575 = vunpack.c.l.b16 %v339
        %v576 = vunpack.c.h.b16 %v339
        %v577 = vunpack.c.l.b16 %v340
        %v578 = vunpack.c.h.b16 %v340
        %v579 = vpack.c.b16 %v577, %v575
        %v580 = vpack.c.b16 %v578, %v576
        %vm582 = vcmask 130048
        %v584 = vsel %vm582, %v580, 0
        %586 = vmatprep.subr.bf16.mxu0 %v381
        %587 = vmatpush1.bf16.msra.mxu0 %v380
        %588 = vmatprep.subr.bf16.mxu0 %v408
        %589 = vmatpush1.bf16.msra.mxu0 %v407
        %590 = vmatprep.subr.bf16.mxu0 %v435
        %591 = vmatpush1.bf16.msra.mxu0 %v434
        %592 = vmatprep.subr.bf16.mxu0 %v462
        %593 = vmatpush1.bf16.msra.mxu0 %v461
        %594 = vmatprep.subr.bf16.mxu0 %v464
        %595 = vmatpush1.bf16.msra.mxu0 %v463
        %596 = vmatprep.subr.bf16.mxu0 %v491
        %597 = vmatpush1.bf16.msra.mxu0 %v490
        %598 = vmatprep.subr.bf16.mxu0 %v518
        %599 = vmatpush1.bf16.msra.mxu0 %v517
        %600 = vmatprep.subr.bf16.mxu0 %v545
        %601 = vmatpush1.bf16.msra.mxu0 %v544
        %602 = vmatprep.subr.bf16.mxu0 %v572
        %603 = vmatpush1.bf16.msra.mxu0 %v571
        %604 = vmatprep.subr.bf16.mxu0 0
        %605 = vmatpush1.bf16.msra.mxu0 0
        %606 = vmatprep.subr.bf16.mxu0 0
        %607 = vmatpush1.bf16.msra.mxu0 0
        %608 = vmatprep.subr.bf16.mxu0 0
        %609 = vmatpush1.bf16.msra.mxu0 0
        %610 = vmatprep.subr.bf16.mxu0 0
        %611 = vmatpush1.bf16.msra.mxu0 0
        %612 = vmatprep.subr.bf16.mxu0 0
        %613 = vmatpush1.bf16.msra.mxu0 0
        %614 = vmatprep.subr.bf16.mxu0 0
        %615 = vmatpush1.bf16.msra.mxu0 0
        %616 = vmatprep.subr.bf16.mxu0 0
        %617 = vmatpush1.bf16.msra.mxu0 0
        %618 = vmatprep.mubr.bf16.mxu0 %v584
        %619 = vmatmul.mubr.bf16.gmra.mrb[0].mxu0 %v579
        %v620 = vpop.f32.mrb[0].mxu0
        %v621 = vadd.f32 0.0, %v620
        %v622 = vpop.f32.mrb[0].mxu0
        %v623 = vadd.f32 0.0, %v622
        %v624 = vpop.f32.mrb[0].mxu0
        %v625 = vadd.f32 0.0, %v624
        %v626 = vpop.f32.mrb[0].mxu0
        %v627 = vadd.f32 0.0, %v626
        %628 = vdwg.mxu0
        %v629 = vadd.f32 %v621, %v625
        %v630 = vrot.slane %v629, 4
        %v631 = vadd.f32 %v629, %v630
        %v632 = vrot.slane %v631, 2
        %v633 = vadd.f32 %v631, %v632
        %v634 = vrot.slane %v633, 1
        %v635 = vadd.f32 %v633, %v634
        %v636 = vadd.f32 %v623, %v627
        %v637 = vrot.slane %v636, 4
        %v638 = vadd.f32 %v636, %v637
        %v639 = vrot.slane %v638, 2
        %v640 = vadd.f32 %v638, %v639
        %v641 = vrot.slane %v640, 1
        %v642 = vadd.f32 %v640, %v641
        %v643 = vmul.f32 %v621, %v621
        %v644 = vmul.f32 %v623, %v623
        %v645 = vmul.f32 %v625, %v625
        %v646 = vmul.f32 %v627, %v627
        %v647 = vadd.f32 %v643, %v645
        %v648 = vrot.slane %v647, 4
        %v649 = vadd.f32 %v647, %v648
        %v650 = vrot.slane %v649, 2
        %v651 = vadd.f32 %v649, %v650
        %v652 = vrot.slane %v651, 1
        %v653 = vadd.f32 %v651, %v652
        %v654 = vadd.f32 %v644, %v646
        %v655 = vrot.slane %v654, 4
        %v656 = vadd.f32 %v654, %v655
        %v657 = vrot.slane %v656, 2
        %v658 = vadd.f32 %v656, %v657
        %v659 = vrot.slane %v658, 1
        %v660 = vadd.f32 %v658, %v659
        %vm661 = vcmask 1040384
        %v662 = vsel %vm661, %v635, 0.0
        %v663 = vsel %vm661, %v642, 0.0
        %v664 = vadd.f32 %v662, %v663
        %665 = vadd.xlane.f32.xlu0 %v664
        %v666 = vpop.xlane.xlu0 %665
        %v667 = vrot.slane %v666, 4
        %v668 = vadd.f32 %v666, %v667
        %v669 = vrot.slane %v668, 2
        %v670 = vadd.f32 %v668, %v669
        %v671 = vrot.slane %v670, 1
        %v672 = vadd.f32 %v670, %v671
        %s673 = vtos %v672
        %v674 = vsel %vm661, %v653, 0.0
        %v675 = vsel %vm661, %v660, 0.0
        %v676 = vadd.f32 %v674, %v675
        %677 = vadd.xlane.f32.xlu0 %v676
        %v678 = vpop.xlane.xlu0 %677
        %v679 = vrot.slane %v678, 4
        %v680 = vadd.f32 %v678, %v679
        %v681 = vrot.slane %v680, 2
        %v682 = vadd.f32 %v680, %v681
        %v683 = vrot.slane %v682, 1
        %v684 = vadd.f32 %v682, %v683
        %s685 = vtos %v684
        %s686 = smul.f32 %s673, 0.00048828125
        %s687 = smul.f32 %s685, 0.00048828125
        %s688 = smul.f32 %s686, %s686
        %s689 = ssub.f32 %s687, %s688
        %s690 = sadd.f32 %s689, 1e-05
        %v691 = vstv %s690
        %v692 = vrsqrt.pop %v691
        %s693 = vtos %v692
        %s694 = smul.f32 %s686, %s693
        %v695 = vstv %s693
        %v696 = vmul.f32 %v621, %v695
        %v697 = vmul.f32 %v623, %v695
        %v698 = vmul.f32 %v625, %v695
        %v699 = vmul.f32 %v627, %v695
        %v700 = vstv %s694
        %v701 = vsub.f32 %v696, %v700
        %v702 = vsub.f32 %v697, %v700
        %v703 = vsub.f32 %v698, %v700
        %v704 = vsub.f32 %v699, %v700
        %706 = vset.pattern.permute.xlu0 0
        %707 = vperm.xlu0 %706, %v343
        %v708 = vpop.permute.xlu0 %707
        %711 = vset.pattern.permute.xlu0 0
        %712 = vperm.xlu0 %711, %v344
        %v713 = vpop.permute.xlu0 %712
        %v715 = vmul.f32 %v701, %v708
        %v716 = vmul.f32 %v702, %v708
        %v717 = vmul.f32 %v703, %v713
        %v718 = vmul.f32 %v704, %v713
        %720 = vset.pattern.permute.xlu0 0
        %721 = vperm.xlu0 %720, %v345
        %v722 = vpop.permute.xlu0 %721
        %725 = vset.pattern.permute.xlu0 0
        %726 = vperm.xlu0 %725, %v346
        %v727 = vpop.permute.xlu0 %726
        %v729 = vadd.f32 %v715, %v722
        %v730 = vadd.f32 %v716, %v722
        %v731 = vadd.f32 %v717, %v727
        %v732 = vadd.f32 %v718, %v727
        %v733 = vmul.f32 %v729, 0.5
        %v734 = vmul.f32 %v730, 0.5
        %v735 = vmul.f32 %v731, 0.5
        %v736 = vmul.f32 %v732, 0.5
        %v737 = vmul.f32 %v729, 0.70710677
        %v738 = vmul.f32 %v730, 0.70710677
        %v739 = vmul.f32 %v731, 0.70710677
        %v740 = vmul.f32 %v732, 0.70710677
        %v741 = vand.u32 2147483647, %v737
        %v742 = vand.u32 2147483647, %v738
        %v743 = vand.u32 2147483647, %v739
        %v744 = vand.u32 2147483647, %v740
        %v745 = vmul.f32 %v741, 0.3275911
        %v746 = vmul.f32 %v742, 0.3275911
        %v747 = vmul.f32 %v743, 0.3275911
        %v748 = vmul.f32 %v744, 0.3275911
        %v749 = vadd.f32 %v745, 1.0
        %v750 = vadd.f32 %v746, 1.0
        %v751 = vadd.f32 %v747, 1.0
        %v752 = vadd.f32 %v748, 1.0
        %v753 = vrcp.pop %v749
        %v754 = vmul.f32 1.0, %v753
        %v755 = vrcp.pop %v750
        %v756 = vmul.f32 1.0, %v755
        %v757 = vrcp.pop %v751
        %v758 = vmul.f32 1.0, %v757
        %v759 = vrcp.pop %v752
        %v760 = vmul.f32 1.0, %v759
        %v761 = vmul.f32 %v754, 1.0614054
        %v762 = vmul.f32 %v756, 1.0614054
        %v763 = vmul.f32 %v758, 1.0614054
        %v764 = vmul.f32 %v760, 1.0614054
        %v765 = vadd.f32 %v761, -1.4531521
        %v766 = vadd.f32 %v762, -1.4531521
        %v767 = vadd.f32 %v763, -1.4531521
        %v768 = vadd.f32 %v764, -1.4531521
        %v769 = vmul.f32 %v765, %v754
        %v770 = vmul.f32 %v766, %v756
        %v771 = vmul.f32 %v767, %v758
        %v772 = vmul.f32 %v768, %v760
        %v773 = vadd.f32 %v769, 1.4214138
        %v774 = vadd.f32 %v770, 1.4214138
        %v775 = vadd.f32 %v771, 1.4214138
        %v776 = vadd.f32 %v772, 1.4214138
        %v777 = vmul.f32 %v773, %v754
        %v778 = vmul.f32 %v774, %v756
        %v779 = vmul.f32 %v775, %v758
        %v780 = vmul.f32 %v776, %v760
        %v781 = vadd.f32 %v777, -0.28449672
        %v782 = vadd.f32 %v778, -0.28449672
        %v783 = vadd.f32 %v779, -0.28449672
        %v784 = vadd.f32 %v780, -0.28449672
        %v785 = vmul.f32 %v781, %v754
        %v786 = vmul.f32 %v782, %v756
        %v787 = vmul.f32 %v783, %v758
        %v788 = vmul.f32 %v784, %v760
        %v789 = vadd.f32 %v785, 0.2548296
        %v790 = vadd.f32 %v786, 0.2548296
        %v791 = vadd.f32 %v787, 0.2548296
        %v792 = vadd.f32 %v788, 0.2548296
        %v793 = vmul.f32 %v789, %v754
        %v794 = vmul.f32 %v790, %v756
        %v795 = vmul.f32 %v791, %v758
        %v796 = vmul.f32 %v792, %v760
        %v797 = vsub.f32 0.0, %v741
        %v798 = vsub.f32 0.0, %v742
        %v799 = vsub.f32 0.0, %v743
        %v800 = vsub.f32 0.0, %v744
        %v801 = vmul.f32 %v797, %v741
        %v802 = vmul.f32 %v798, %v742
        %v803 = vmul.f32 %v799, %v743
        %v804 = vmul.f32 %v800, %v744
        %v805 = vmul.f32 %v801, 1.442695
        %v806 = vpow.pop %v805
        %v807 = vmul.f32 %v802, 1.442695
        %v808 = vpow.pop %v807
        %v809 = vmul.f32 %v803, 1.442695
        %v810 = vpow.pop %v809
        %v811 = vmul.f32 %v804, 1.442695
        %v812 = vpow.pop %v811
        %v813 = vmul.f32 %v793, %v806
        %v814 = vmul.f32 %v794, %v808
        %v815 = vmul.f32 %v795, %v810
        %v816 = vmul.f32 %v796, %v812
        %v817 = vsub.f32 1.0, %v813
        %v818 = vsub.f32 1.0, %v814
        %v819 = vsub.f32 1.0, %v815
        %v820 = vsub.f32 1.0, %v816
        %vm821 = vcmp.ge.f32.partialorder %v737, 0.0
        %vm822 = vcmp.ge.f32.partialorder %v738, 0.0
        %vm823 = vcmp.ge.f32.partialorder %v739, 0.0
        %vm824 = vcmp.ge.f32.partialorder %v740, 0.0
        %v825 = vsub.f32 0.0, %v817
        %v826 = vsub.f32 0.0, %v818
        %v827 = vsub.f32 0.0, %v819
        %v828 = vsub.f32 0.0, %v820
        %v829 = vsel %vm821, %v817, %v825
        %v830 = vsel %vm822, %v818, %v826
        %v831 = vsel %vm823, %v819, %v827
        %v832 = vsel %vm824, %v820, %v828
        %v833 = vadd.f32 %v829, 1.0
        %v834 = vadd.f32 %v830, 1.0
        %v835 = vadd.f32 %v831, 1.0
        %v836 = vadd.f32 %v832, 1.0
        %v837 = vmul.f32 %v733, %v833
        %v838 = vmul.f32 %v734, %v834
        %v839 = vmul.f32 %v735, %v835
        %v840 = vmul.f32 %v736, %v836
        %841 = vrot.lane.b32.xlu0 %v837, 17
        %v842 = vpop.permute.xlu0 %841
        %843 = vrot.lane.b32.xlu0 %v839, 17
        %v844 = vpop.permute.xlu0 %843
        %845 = vrot.lane.b32.xlu0 %v838, 17
        %v846 = vpop.permute.xlu0 %845
        %847 = vrot.lane.b32.xlu0 %v840, 17
        %v848 = vpop.permute.xlu0 %847
        %v849 = vsel %vm363, %v842, %v846
        %v850 = vsel %vm363, %v844, %v848
        %v851 = vsel %vm363, %v846, %v842
        %v852 = vsel %vm363, %v848, %v844
        %v853 = vmul.f32 %v851, %v371
        %v854 = vmul.f32 %v849, %v375
        %v855 = vmul.f32 %v852, %v371
        %v856 = vmul.f32 %v850, %v375
        %v857 = vpack.c.bf16 %v855, %v853
        %v858 = vpack.c.bf16 %v856, %v854
        %859 = vrot.lane.b32.xlu0 %v837, 16
        %v860 = vpop.permute.xlu0 %859
        %861 = vrot.lane.b32.xlu0 %v839, 16
        %v862 = vpop.permute.xlu0 %861
        %863 = vrot.lane.b32.xlu0 %v838, 16
        %v864 = vpop.permute.xlu0 %863
        %865 = vrot.lane.b32.xlu0 %v840, 16
        %v866 = vpop.permute.xlu0 %865
        %v867 = vsel %vm390, %v860, %v864
        %v868 = vsel %vm390, %v862, %v866
        %v869 = vsel %vm390, %v864, %v860
        %v870 = vsel %vm390, %v866, %v862
        %v871 = vmul.f32 %v869, %v398
        %v872 = vmul.f32 %v867, %v402
        %v873 = vmul.f32 %v870, %v398
        %v874 = vmul.f32 %v868, %v402
        %v875 = vpack.c.bf16 %v873, %v871
        %v876 = vpack.c.bf16 %v874, %v872
        %877 = vrot.lane.b32.xlu0 %v837, 15
        %v878 = vpop.permute.xlu0 %877
        %879 = vrot.lane.b32.xlu0 %v839, 15
        %v880 = vpop.permute.xlu0 %879
        %881 = vrot.lane.b32.xlu0 %v838, 15
        %v882 = vpop.permute.xlu0 %881
        %883 = vrot.lane.b32.xlu0 %v840, 15
        %v884 = vpop.permute.xlu0 %883
        %v885 = vsel %vm417, %v878, %v882
        %v886 = vsel %vm417, %v880, %v884
        %v887 = vsel %vm417, %v882, %v878
        %v888 = vsel %vm417, %v884, %v880
        %v889 = vmul.f32 %v887, %v425
        %v890 = vmul.f32 %v885, %v429
        %v891 = vmul.f32 %v888, %v425
        %v892 = vmul.f32 %v886, %v429
        %v893 = vpack.c.bf16 %v891, %v889
        %v894 = vpack.c.bf16 %v892, %v890
        %895 = vrot.lane.b32.xlu0 %v837, 1
        %v896 = vpop.permute.xlu0 %895
        %897 = vrot.lane.b32.xlu0 %v839, 1
        %v898 = vpop.permute.xlu0 %897
        %899 = vrot.lane.b32.xlu0 %v838, 1
        %v900 = vpop.permute.xlu0 %899
        %901 = vrot.lane.b32.xlu0 %v840, 1
        %v902 = vpop.permute.xlu0 %901
        %v903 = vsel %vm444, %v896, %v900
        %v904 = vsel %vm444, %v898, %v902
        %v905 = vsel %vm444, %v900, %v896
        %v906 = vsel %vm444, %v902, %v898
        %v907 = vmul.f32 %v905, %v452
        %v908 = vmul.f32 %v903, %v456
        %v909 = vmul.f32 %v906, %v452
        %v910 = vmul.f32 %v904, %v456
        %v911 = vpack.c.bf16 %v909, %v907
        %v912 = vpack.c.bf16 %v910, %v908
        %v913 = vpack.c.bf16 %v839, %v837
        %v914 = vpack.c.bf16 %v840, %v838
        %915 = vrot.lane.b32.xlu0 %v837, 127
        %v916 = vpop.permute.xlu0 %915
        %917 = vrot.lane.b32.xlu0 %v839, 127
        %v918 = vpop.permute.xlu0 %917
        %919 = vrot.lane.b32.xlu0 %v838, 127
        %v920 = vpop.permute.xlu0 %919
        %921 = vrot.lane.b32.xlu0 %v840, 127
        %v922 = vpop.permute.xlu0 %921
        %v923 = vsel %vm473, %v916, %v920
        %v924 = vsel %vm473, %v918, %v922
        %v925 = vsel %vm473, %v920, %v916
        %v926 = vsel %vm473, %v922, %v918
        %v927 = vmul.f32 %v923, %v481
        %v928 = vmul.f32 %v925, %v485
        %v929 = vmul.f32 %v924, %v481
        %v930 = vmul.f32 %v926, %v485
        %v931 = vpack.c.bf16 %v929, %v927
        %v932 = vpack.c.bf16 %v930, %v928
        %933 = vrot.lane.b32.xlu0 %v837, 113
        %v934 = vpop.permute.xlu0 %933
        %935 = vrot.lane.b32.xlu0 %v839, 113
        %v936 = vpop.permute.xlu0 %935
        %937 = vrot.lane.b32.xlu0 %v838, 113
        %v938 = vpop.permute.xlu0 %937
        %939 = vrot.lane.b32.xlu0 %v840, 113
        %v940 = vpop.permute.xlu0 %939
        %v941 = vsel %vm500, %v934, %v938
        %v942 = vsel %vm500, %v936, %v940
        %v943 = vsel %vm500, %v938, %v934
        %v944 = vsel %vm500, %v940, %v936
        %v945 = vmul.f32 %v941, %v508
        %v946 = vmul.f32 %v943, %v512
        %v947 = vmul.f32 %v942, %v508
        %v948 = vmul.f32 %v944, %v512
        %v949 = vpack.c.bf16 %v947, %v945
        %v950 = vpack.c.bf16 %v948, %v946
        %951 = vrot.lane.b32.xlu0 %v837, 112
        %v952 = vpop.permute.xlu0 %951
        %953 = vrot.lane.b32.xlu0 %v839, 112
        %v954 = vpop.permute.xlu0 %953
        %955 = vrot.lane.b32.xlu0 %v838, 112
        %v956 = vpop.permute.xlu0 %955
        %957 = vrot.lane.b32.xlu0 %v840, 112
        %v958 = vpop.permute.xlu0 %957
        %v959 = vsel %vm527, %v952, %v956
        %v960 = vsel %vm527, %v954, %v958
        %v961 = vsel %vm527, %v956, %v952
        %v962 = vsel %vm527, %v958, %v954
        %v963 = vmul.f32 %v959, %v535
        %v964 = vmul.f32 %v961, %v539
        %v965 = vmul.f32 %v960, %v535
        %v966 = vmul.f32 %v962, %v539
        %v967 = vpack.c.bf16 %v965, %v963
        %v968 = vpack.c.bf16 %v966, %v964
        %969 = vrot.lane.b32.xlu0 %v837, 111
        %v970 = vpop.permute.xlu0 %969
        %971 = vrot.lane.b32.xlu0 %v839, 111
        %v972 = vpop.permute.xlu0 %971
        %973 = vrot.lane.b32.xlu0 %v838, 111
        %v974 = vpop.permute.xlu0 %973
        %975 = vrot.lane.b32.xlu0 %v840, 111
        %v976 = vpop.permute.xlu0 %975
        %v977 = vsel %vm554, %v970, %v974
        %v978 = vsel %vm554, %v972, %v976
        %v979 = vsel %vm554, %v974, %v970
        %v980 = vsel %vm554, %v976, %v972
        %v981 = vmul.f32 %v977, %v562
        %v982 = vmul.f32 %v979, %v566
        %v983 = vmul.f32 %v978, %v562
        %v984 = vmul.f32 %v980, %v566
        %v985 = vpack.c.bf16 %v983, %v981
        %v986 = vpack.c.bf16 %v984, %v982
        %v989 = vunpack.c.l.b16 %v341
        %v990 = vunpack.c.h.b16 %v341
        %v991 = vunpack.c.l.b16 %v342
        %v992 = vunpack.c.h.b16 %v342
        %v993 = vpack.c.b16 %v991, %v989
        %v994 = vpack.c.b16 %v992, %v990
        %v997 = vsel %vm582, %v994, 0
        %999 = vmatprep.subr.bf16.mxu0 %v858
        %1000 = vmatpush1.bf16.msra.mxu0 %v857
        %1001 = vmatprep.subr.bf16.mxu0 %v876
        %1002 = vmatpush1.bf16.msra.mxu0 %v875
        %1003 = vmatprep.subr.bf16.mxu0 %v894
        %1004 = vmatpush1.bf16.msra.mxu0 %v893
        %1005 = vmatprep.subr.bf16.mxu0 %v912
        %1006 = vmatpush1.bf16.msra.mxu0 %v911
        %1007 = vmatprep.subr.bf16.mxu0 %v914
        %1008 = vmatpush1.bf16.msra.mxu0 %v913
        %1009 = vmatprep.subr.bf16.mxu0 %v932
        %1010 = vmatpush1.bf16.msra.mxu0 %v931
        %1011 = vmatprep.subr.bf16.mxu0 %v950
        %1012 = vmatpush1.bf16.msra.mxu0 %v949
        %1013 = vmatprep.subr.bf16.mxu0 %v968
        %1014 = vmatpush1.bf16.msra.mxu0 %v967
        %1015 = vmatprep.subr.bf16.mxu0 %v986
        %1016 = vmatpush1.bf16.msra.mxu0 %v985
        %1017 = vmatprep.subr.bf16.mxu0 0
        %1018 = vmatpush1.bf16.msra.mxu0 0
        %1019 = vmatprep.subr.bf16.mxu0 0
        %1020 = vmatpush1.bf16.msra.mxu0 0
        %1021 = vmatprep.subr.bf16.mxu0 0
        %1022 = vmatpush1.bf16.msra.mxu0 0
        %1023 = vmatprep.subr.bf16.mxu0 0
        %1024 = vmatpush1.bf16.msra.mxu0 0
        %1025 = vmatprep.subr.bf16.mxu0 0
        %1026 = vmatpush1.bf16.msra.mxu0 0
        %1027 = vmatprep.subr.bf16.mxu0 0
        %1028 = vmatpush1.bf16.msra.mxu0 0
        %1029 = vmatprep.subr.bf16.mxu0 0
        %1030 = vmatpush1.bf16.msra.mxu0 0
        %1031 = vmatprep.mubr.bf16.mxu0 %v997
        %1032 = vmatmul.mubr.bf16.gmra.mrb[0].mxu0 %v993
        %v1033 = vpop.f32.mrb[0].mxu0
        %v1034 = vadd.f32 0.0, %v1033
        %v1035 = vpop.f32.mrb[0].mxu0
        %v1036 = vadd.f32 0.0, %v1035
        %v1037 = vpop.f32.mrb[0].mxu0
        %v1038 = vadd.f32 0.0, %v1037
        %v1039 = vpop.f32.mrb[0].mxu0
        %v1040 = vadd.f32 0.0, %v1039
        %1041 = vdwg.mxu0
        %v1042 = vadd.f32 %v1034, %v1038
        %v1043 = vrot.slane %v1042, 4
        %v1044 = vadd.f32 %v1042, %v1043
        %v1045 = vrot.slane %v1044, 2
        %v1046 = vadd.f32 %v1044, %v1045
        %v1047 = vrot.slane %v1046, 1
        %v1048 = vadd.f32 %v1046, %v1047
        %v1049 = vadd.f32 %v1036, %v1040
        %v1050 = vrot.slane %v1049, 4
        %v1051 = vadd.f32 %v1049, %v1050
        %v1052 = vrot.slane %v1051, 2
        %v1053 = vadd.f32 %v1051, %v1052
        %v1054 = vrot.slane %v1053, 1
        %v1055 = vadd.f32 %v1053, %v1054
        %v1056 = vmul.f32 %v1034, %v1034
        %v1057 = vmul.f32 %v1036, %v1036
        %v1058 = vmul.f32 %v1038, %v1038
        %v1059 = vmul.f32 %v1040, %v1040
        %v1060 = vadd.f32 %v1056, %v1058
        %v1061 = vrot.slane %v1060, 4
        %v1062 = vadd.f32 %v1060, %v1061
        %v1063 = vrot.slane %v1062, 2
        %v1064 = vadd.f32 %v1062, %v1063
        %v1065 = vrot.slane %v1064, 1
        %v1066 = vadd.f32 %v1064, %v1065
        %v1067 = vadd.f32 %v1057, %v1059
        %v1068 = vrot.slane %v1067, 4
        %v1069 = vadd.f32 %v1067, %v1068
        %v1070 = vrot.slane %v1069, 2
        %v1071 = vadd.f32 %v1069, %v1070
        %v1072 = vrot.slane %v1071, 1
        %v1073 = vadd.f32 %v1071, %v1072
        %v1074 = vsel %vm661, %v1048, 0.0
        %v1075 = vsel %vm661, %v1055, 0.0
        %v1076 = vadd.f32 %v1074, %v1075
        %1077 = vadd.xlane.f32.xlu0 %v1076
        %v1078 = vpop.xlane.xlu0 %1077
        %v1079 = vrot.slane %v1078, 4
        %v1080 = vadd.f32 %v1078, %v1079
        %v1081 = vrot.slane %v1080, 2
        %v1082 = vadd.f32 %v1080, %v1081
        %v1083 = vrot.slane %v1082, 1
        %v1084 = vadd.f32 %v1082, %v1083
        %s1085 = vtos %v1084
        %v1086 = vsel %vm661, %v1066, 0.0
        %v1087 = vsel %vm661, %v1073, 0.0
        %v1088 = vadd.f32 %v1086, %v1087
        %1089 = vadd.xlane.f32.xlu0 %v1088
        %v1090 = vpop.xlane.xlu0 %1089
        %v1091 = vrot.slane %v1090, 4
        %v1092 = vadd.f32 %v1090, %v1091
        %v1093 = vrot.slane %v1092, 2
        %v1094 = vadd.f32 %v1092, %v1093
        %v1095 = vrot.slane %v1094, 1
        %v1096 = vadd.f32 %v1094, %v1095
        %s1097 = vtos %v1096
        %s1098 = smul.f32 %s1085, 0.00048828125
        %s1099 = smul.f32 %s1097, 0.00048828125
        %s1100 = smul.f32 %s1098, %s1098
        %s1101 = ssub.f32 %s1099, %s1100
        %s1102 = sadd.f32 %s1101, 1e-05
        %v1103 = vstv %s1102
        %v1104 = vrsqrt.pop %v1103
        %s1105 = vtos %v1104
        %s1106 = smul.f32 %s1098, %s1105
        %v1107 = vstv %s1105
        %v1108 = vmul.f32 %v1034, %v1107
        %v1109 = vmul.f32 %v1036, %v1107
        %v1110 = vstv %s1106
        %v1111 = vsub.f32 %v1108, %v1110
        %v1112 = vsub.f32 %v1109, %v1110
        %1114 = vset.pattern.permute.xlu0 0
        %1115 = vperm.xlu0 %1114, %v347
        %v1116 = vpop.permute.xlu0 %1115
        %v1118 = vmul.f32 %v1111, %v1116
        %v1119 = vmul.f32 %v1112, %v1116
        %1121 = vset.pattern.permute.xlu0 0
        %1122 = vperm.xlu0 %1121, %v348
        %v1123 = vpop.permute.xlu0 %1122
        %v1125 = vadd.f32 %v1118, %v1123
        %v1126 = vadd.f32 %v1119, %v1123
        %1127 = vst [vmem:[%s328] sm:$0xff] %v1125
        %1128 = vst [vmem:[%s328 + $0x8] sm:$0xff] %v1126
        %s1129 = sand.u32 %s205, 1
        %s1130 = scalar_lea.sflag [#allocation4], %s1129
        %s1131 = sand.u32 %s205, 1
        %s1132 = smul.addr %s1131, 16
        %s1133 = scalar_lea.vmem [#allocation7], %s1132
        // Predicated region
        $region61: #{tpu_custom_call.1} parent=51 // pred_check
          %p1134 = pneg %p215
        $region62: #{tpu_custom_call.1} parent=51 // pred_check_branch
          %1136 = sbr.rel (%p1134) target = $region64
        $region63: #{tpu_custom_call.1} parent=51 // pred_region
          %s1138 = ssub.s32 256, 256
          %1139 = vsyncadd %s1130, %s1138
          %s1140 = smul.addr %s24, 2
          %s1141 = smul.addr %s1140, 128
          %s1142 = scalar_lea.hbm %s8, %s1141
          %s1144 = sshll.u32 %s1133, 4
          %s1145 = int_to_ptr.vmem [resolvable:$true] %s1144
          %1147 = dma.vmem_to_hbm [thread:$0]  %s1145, 256, %s1142, %s1130
        $region64: #{tpu_custom_call.1} parent=51 // pred_fallthru
          _
      $region52: #{tpu_custom_call.1} parent=5 // pred_fallthru
        _
      %p1148 = scmp.le.s32.totalorder 2, %s19
      // Predicated region
      $region65: #{tpu_custom_call.1} parent=5 // pred_check
        %p1149 = pneg %p1148
      $region66: #{tpu_custom_call.1} parent=5 // pred_check_branch
        %1151 = sbr.rel (%p1149) target = $region68
      $region67: #{tpu_custom_call.1} parent=5 // pred_region
        %s1152 = ssub.s32 %s19, 2
        // Predicated region
        $region69: #{tpu_custom_call.1} parent=67 // pred_check
          %p1153 = pneg %p221
        $region70: #{tpu_custom_call.1} parent=67 // pred_check_branch
          %1155 = sbr.rel (%p1153) target = $region72
        $region71: #{tpu_custom_call.1} parent=67 // pred_region
          %s1156 = sand.u32 %s206, 1
          %s1157 = scalar_lea.sflag [#allocation4], %s1156
          %s1158 = sand.u32 %s206, 1
          %s1159 = smul.addr %s1158, 16
          %s1160 = scalar_lea.vmem [#allocation7], %s1159
          %1161 = dma.done %s1157, 256
        $region72: #{tpu_custom_call.1} parent=67 // pred_fallthru
          _
      $region68: #{tpu_custom_call.1} parent=5 // pred_fallthru
        _
    $region6: #{tpu_custom_call.1} parent=1 // loop_footer
      %s23 = sadd.s32 1, %s19
    $region7: #{tpu_custom_call.1} parent=1 // loop_footer_branch
      %18 = sbr.rel target = $region3
    $region8: #{tpu_custom_call.1} parent=1 // loop_exit
      _
    %1162 = vsyncpa [#allocation3], 1
    %s1163 = scalar_lea.sflag [#allocation3], 1
    %1164 = vsyncpa %s1163, 1
    %1165 = vsyncpa [#allocation6], 1
    %1166 = vsyncpa [#allocation4], 1
    %s1167 = scalar_lea.sflag [#allocation4], 1
    %1168 = vsyncpa %s1167, 1

</llo_original>
